<compile_context>
chip_gen: v7x
topology: tpu7x:2x2x1
jax: 0.10.0
libtpu: 0.0.40
codegen_flags: <defaults>
</compile_context>

<pallas_src>
import functools
import math

import jax
import jax.numpy as jnp
import numpy as np
from jax.experimental import pallas as pl
from jax.experimental.pallas import tpu as pltpu

LRELU_SLOPE = 0.2
FUSED_SCALE = math.sqrt(2.0)
INV_SQRT2 = 1.0 / math.sqrt(2.0)


def _round_up(v, m):
    return (v + m - 1) // m * m


# ----------------------------------------------------------------------------
# Fused kernel: conv3x3 + FusedLeakyReLU -> conv3x3 + FusedLeakyReLU -> 1x1 skip
# + residual + /sqrt(2).  One batch image per grid step.
# ----------------------------------------------------------------------------
def _fused_resblock_kernel(x_ref, w1_ref, b1_ref, w2_ref, b2_ref, ws_ref,
                           mask_ref, o_ref, hpad_ref, *, H, W, Wp):
    """
    x_ref:    (1, (H+3)*Wp, Cin)  flattened zero-padded input (padded in wrapper):
                                  pixel (h, w) lives at flat row (h+1)*Wp + (w+1).
    w1_ref:   (9*Cin, Cmid)       conv1 weight, im2col layout K=(kh*3+kw)*Cin+c
    b1_ref:   (1, Cmid) f32       FusedLeakyReLU bias of conv1
    w2_ref:   (9*Cmid, Cout)      conv2 weight, im2col layout
    b2_ref:   (1, Cout) f32       FusedLeakyReLU bias of conv2
    ws_ref:   (Cin, Cout)         1x1 skip weight
    mask_ref: (Mp, 1) f32         1.0 on valid output columns (q % Wp < W)
    o_ref:    (1, Mp, Cout) f32   output in padded-width layout (stripped in glue)
    hpad_ref: ((H+3)*Wp, Cmid) f32 VMEM scratch: flattened zero-padded conv1 output
    Output position q = h*Wp + w; tap (kh, kw) of output q reads flat row
    q + kh*Wp + kw.  The extra slack row keeps the shifted reads of the garbage
    columns in-bounds.
    """
    Mp = H * Wp
    Cmid = w1_ref.shape[1]
    Cout = w2_ref.shape[1]

    # ---- zero ONLY the pad bands of the h scratch ----------------------------
    # Interior rows [Wp+1, Wp+1+Mp) are fully rewritten below every grid step;
    # only the top band (pad row 0 + left pad of the first data row) and the
    # bottom band (bottom pad row + slack) must be zero.
    hpad_ref[pl.ds(0, Wp + 1), :] = jnp.zeros((Wp + 1, Cmid), hpad_ref.dtype)
    hpad_ref[pl.ds(Wp + 1 + Mp, 2 * Wp - 1), :] = jnp.zeros(
        (2 * Wp - 1, Cmid), hpad_ref.dtype)

    valid = mask_ref[...]                                     # (Mp, 1) f32

    # ---- conv1 (3x3 SAME): im2col along K -> single MXU matmul ---------------
    patches1 = jnp.concatenate(
        [x_ref[0, pl.ds(kh * Wp + kw, Mp), :] for kh in range(3) for kw in range(3)],
        axis=-1)                                              # (Mp, 9*Cin)
    a1 = jnp.dot(patches1, w1_ref[...], preferred_element_type=jnp.float32)
    a1 = a1 + b1_ref[...]
    h1 = jnp.where(a1 >= 0.0, a1, LRELU_SLOPE * a1) * FUSED_SCALE
    # Garbage columns of the padded-width layout become conv2's zero padding.
    h1 = h1 * valid

    # ---- stage padded h in VMEM (h never touches HBM) -------------------------
    hpad_ref[pl.ds(Wp + 1, Mp), :] = h1.astype(hpad_ref.dtype)

    # ---- conv2 (3x3 SAME): im2col along K -> single MXU matmul ---------------
    patches2 = jnp.concatenate(
        [hpad_ref[pl.ds(kh * Wp + kw, Mp), :] for kh in range(3) for kw in range(3)],
        axis=-1).astype(w2_ref.dtype)                         # (Mp, 9*Cmid)
    a2 = jnp.dot(patches2, w2_ref[...], preferred_element_type=jnp.float32)
    a2 = a2 + b2_ref[...]
    y2 = jnp.where(a2 >= 0.0, a2, LRELU_SLOPE * a2) * FUSED_SCALE

    # ---- 1x1 skip conv + residual + /sqrt(2) ----------------------------------
    # x[h, w] lives at flat row q + Wp + 1, so the skip reuses the padded input
    # already sitting in VMEM.
    skip = jnp.dot(x_ref[0, pl.ds(Wp + 1, Mp), :], ws_ref[...],
                   preferred_element_type=jnp.float32)
    o_ref[...] = ((y2 + skip) * INV_SQRT2).reshape(1, Mp, Cout).astype(o_ref.dtype)


# ----------------------------------------------------------------------------
# Wrapper
# ----------------------------------------------------------------------------
def conv_res_block_2d(x_nchw, params, *, compute_dtype=jnp.bfloat16):
    """ConvResBlock2d forward. Input NCHW (PyTorch convention), output NCHW."""
    w1, b1 = params["w1"], params["b1"]        # (3,3,Cin,Cmid), (Cmid,)
    w2, b2 = params["w2"], params["b2"]        # (3,3,Cmid,Cout), (Cout,)
    ws = params["w_skip"]                      # (Cin, Cout)

    N, Cin, H, W = x_nchw.shape
    Cmid, Cout = w1.shape[3], w2.shape[3]

    Wp = _round_up(W + 2, 8)                   # padded width, sublane-aligned rows
    Mp = H * Wp                                # padded-width output rows (q = h*Wp + w)
    rows_pad = (H + 3) * Wp                    # 1 top pad + H + 1 bottom pad + 1 slack row

    # NCHW -> NHWC, cast to compute dtype, zero-pad spatially (fused by XLA with
    # the transpose: single HBM pass over x), flatten rows so the kernel reads
    # the 9 conv taps as contiguous first-axis shifts of the padded buffer.
    x = jnp.transpose(x_nchw, (0, 2, 3, 1)).astype(compute_dtype)
    xpad = jnp.pad(x, ((0, 0), (1, 2), (1, Wp - W - 1), (0, 0)))
    x_flat = xpad.reshape(N, rows_pad, Cin)

    # im2col weight layout: K index = (kh*3 + kw)*Cin + c, matching the concat.
    w1k = w1.reshape(9 * Cin, Cmid).astype(compute_dtype)
    w2k = w2.reshape(9 * Cmid, Cout).astype(compute_dtype)
    wsk = ws.astype(compute_dtype)
    b1k = b1.reshape(1, Cmid).astype(jnp.float32)
    b2k = b2.reshape(1, Cout).astype(jnp.float32)

    # 1.0 on valid output columns (q % Wp < W).  Tiny resident input (constant
    # index_map -> fetched once); kept as an input because vector integer mod is
    # not guaranteed to lower inside the kernel.
    mask = (jnp.arange(Mp, dtype=jnp.int32) % Wp < W).astype(jnp.float32)
    mask = mask.reshape(Mp, 1)

    kernel = functools.partial(_fused_resblock_kernel, H=H, W=W, Wp=Wp)

    # Crude VMEM budget: (8,128)-padded blocks, x/out double-buffered, plus 2x margin.
    isz = np.dtype(compute_dtype).itemsize
    tb = lambda r, c, s: _round_up(max(r, 1), 8) * _round_up(max(c, 1), 128) * s
    est = (2 * tb(rows_pad, Cin, isz) + 2 * tb(Mp, Cout, 4) + tb(rows_pad, Cmid, 4)
           + tb(Mp, 1, 4) + tb(9 * Cin, Cmid, isz) + tb(9 * Cmid, Cout, isz)
           + tb(Cin, Cout, isz) + tb(1, Cmid, 4) + tb(1, Cout, 4))
    vmem_limit = int(min(100 * 2 ** 20, max(16 * 2 ** 20, 2 * est)))

    out_padded = pl.pallas_call(
        kernel,
        out_shape=jax.ShapeDtypeStruct((N, Mp, Cout), jnp.float32),
        grid_spec=pltpu.PrefetchScalarGridSpec(
            num_scalar_prefetch=0,
            grid=(N,),
            in_specs=[
                pl.BlockSpec((1, rows_pad, Cin), lambda n: (n, 0, 0)),   # x (padded, flat)
                pl.BlockSpec((9 * Cin, Cmid), lambda n: (0, 0)),         # w1 (resident)
                pl.BlockSpec((1, Cmid), lambda n: (0, 0)),               # b1
                pl.BlockSpec((9 * Cmid, Cout), lambda n: (0, 0)),        # w2 (resident)
                pl.BlockSpec((1, Cout), lambda n: (0, 0)),               # b2
                pl.BlockSpec((Cin, Cout), lambda n: (0, 0)),             # w_skip
                pl.BlockSpec((Mp, 1), lambda n: (0, 0)),                 # valid-col mask
            ],
            out_specs=pl.BlockSpec((1, Mp, Cout), lambda n: (n, 0, 0)),
            scratch_shapes=[
                pltpu.VMEM((rows_pad, Cmid), jnp.float32),  # padded h (never hits HBM)
            ],
        ),
        compiler_params=pltpu.CompilerParams(
            dimension_semantics=("parallel",),
            vmem_limit_bytes=vmem_limit,
        ),
    )(x_flat, w1k, b1k, w2k, b2k, wsk, mask)

    # Strip the padded-width garbage columns and go back to NCHW; XLA fuses the
    # slice with the transpose it performs here anyway.
    out = out_padded.reshape(N, H, Wp, Cout)[:, :, :W, :]
    return jnp.transpose(out, (0, 3, 1, 2))                  # -> NCHW


# ----------------------------------------------------------------------------
# Deterministic parameter init (shapes per ConvResBlock2d.__init__)
# ----------------------------------------------------------------------------
def init_params(key, in_ch, out_ch):
    mid = out_ch  # downsample=False -> mid_ch = out_channel
    k1, k2, k3, k4, k5 = jax.random.split(key, 5)
    # EqualConv2d / torch layout: (Cout, Cin, kh, kw), ~ randn
    w1 = jax.random.normal(k1, (mid, in_ch, 3, 3), jnp.float32)
    w2 = jax.random.normal(k2, (out_ch, mid, 3, 3), jnp.float32)
    ws = jax.random.normal(k3, (out_ch, in_ch, 1, 1), jnp.float32)
    s1 = 1.0 / math.sqrt(in_ch * 9)
    s2 = 1.0 / math.sqrt(mid * 9)
    ss = 1.0 / math.sqrt(in_ch * 1)
    # FusedLeakyReLU biases init to zero in the module; use small random values
    # here so the bias path is actually exercised by the check.
    return dict(
        w1=jnp.transpose(w1 * s1, (2, 3, 1, 0)),      # (kh, kw, Cin, Cmid)
        b1=0.1 * jax.random.normal(k4, (mid,), jnp.float32),
        w2=jnp.transpose(w2 * s2, (2, 3, 1, 0)),      # (kh, kw, Cmid, Cout)
        b2=0.1 * jax.random.normal(k5, (out_ch,), jnp.float32),
        w_skip=jnp.transpose((ws * ss)[:, :, 0, 0]),  # (Cin, Cout)
    )


# ----------------------------------------------------------------------------
# Pure-JAX reference (quantized at the same points as the kernel)
# ----------------------------------------------------------------------------
def ref_forward(x_nchw, params, *, compute_dtype=jnp.bfloat16):
    x = jnp.transpose(x_nchw, (0, 2, 3, 1)).astype(compute_dtype)

    def conv(z, w):
        return jax.lax.conv_general_dilated(
            z.astype(compute_dtype), w.astype(compute_dtype), (1, 1), "SAME",
            dimension_numbers=("NHWC", "HWIO", "NHWC"),
            preferred_element_type=jnp.float32)

    def fused_lrelu(z, b):
        z = z + b.reshape(1, 1, 1, -1)
        return jnp.where(z >= 0.0, z, LRELU_SLOPE * z) * FUSED_SCALE

    h = fused_lrelu(conv(x, params["w1"]), params["b1"])
    h = fused_lrelu(conv(h, params["w2"]), params["b2"])
    skip = conv(x, params["w_skip"].reshape(1, 1, *params["w_skip"].shape))
    out = (h + skip) * INV_SQRT2
    return jnp.transpose(out, (0, 3, 1, 2))


if __name__ == "__main__":
    key = jax.random.PRNGKey(0)
    k_x, k_p = jax.random.split(key)

    N, Cin, Cout, H, W = 2, 4, 8, 16, 16
    x = jax.random.normal(k_x, (N, Cin, H, W), jnp.float32)  # NCHW, like PyTorch
    params = init_params(k_p, Cin, Cout)

    # 1) exact-semantics check (f32 compute path, matches the PyTorch module).
    out_f32 = jax.block_until_ready(conv_res_block_2d(x, params, compute_dtype=jnp.float32))
    ref_f32 = jax.block_until_ready(ref_forward(x, params, compute_dtype=jnp.float32))
    assert out_f32.shape == (N, Cout, H, W)
    np.testing.assert_allclose(np.asarray(out_f32), np.asarray(ref_f32),
                               rtol=1e-4, atol=1e-4)

    # 2) default bf16-input fast path vs a reference quantized at the same points.
    out_bf = jax.block_until_ready(conv_res_block_2d(x, params))
    ref_bf = jax.block_until_ready(ref_forward(x, params))
    np.testing.assert_allclose(np.asarray(out_bf), np.asarray(ref_bf),
                               rtol=2e-3, atol=2e-3)

    print("KERNEL_OK")
</pallas_src>

<mosaic_0001>
module attributes {stable_mosaic.version = 11 : i64} {
  func.func @_fused_resblock_kernel(%arg0: i32, %arg1: memref<1x456x4xf32, #tpu.memory_space<vmem>>, %arg2: memref<36x8xf32, #tpu.memory_space<vmem>>, %arg3: memref<1x8xf32, #tpu.memory_space<vmem>>, %arg4: memref<72x8xf32, #tpu.memory_space<vmem>>, %arg5: memref<1x8xf32, #tpu.memory_space<vmem>>, %arg6: memref<4x8xf32, #tpu.memory_space<vmem>>, %arg7: memref<384x1xf32, #tpu.memory_space<vmem>>, %arg8: memref<1x384x8xf32, #tpu.memory_space<vmem>>, %arg9: memref<456x8xf32, #tpu.memory_space<vmem>>) attributes {dimension_semantics = [#tpu.dimension_semantics<parallel>], iteration_bounds = array<i64: 2>, scalar_prefetch = 0 : i64, scratch_operands = 1 : i64, tpu.core_type = #tpu.core_type<tc>, window_params = [{transform_indices = @transform_0, window_bounds = array<i64: 1, 456, 4>}, {pipeline_mode = #tpu.pipeline_mode<synchronous>, transform_indices = @transform_1, window_bounds = array<i64: 36, 8>}, {pipeline_mode = #tpu.pipeline_mode<synchronous>, transform_indices = @transform_2, window_bounds = array<i64: 1, 8>}, {pipeline_mode = #tpu.pipeline_mode<synchronous>, transform_indices = @transform_3, window_bounds = array<i64: 72, 8>}, {pipeline_mode = #tpu.pipeline_mode<synchronous>, transform_indices = @transform_4, window_bounds = array<i64: 1, 8>}, {pipeline_mode = #tpu.pipeline_mode<synchronous>, transform_indices = @transform_5, window_bounds = array<i64: 4, 8>}, {pipeline_mode = #tpu.pipeline_mode<synchronous>, transform_indices = @transform_6, window_bounds = array<i64: 384, 1>}, {transform_indices = @transform_7, window_bounds = array<i64: 1, 384, 8>}]} {
    %cst = arith.constant 0.000000e+00 : f32
    %0 = vector.broadcast %cst : f32 to vector<25x8xf32>
    %c0 = arith.constant 0 : index
    %c0_0 = arith.constant 0 : index
    %1 = vector.load %arg9[%c0, %c0_0] : memref<456x8xf32, #tpu.memory_space<vmem>>, vector<25x8xf32>
    tpu.vector_store %arg9[%c0, %c0_0], %0 {strides = array<i32>} : memref<456x8xf32, #tpu.memory_space<vmem>>, vector<25x8xf32>,
    %cst_1 = arith.constant 0.000000e+00 : f32
    %2 = vector.broadcast %cst_1 : f32 to vector<47x8xf32>
    %c409 = arith.constant 409 : index
    %c0_2 = arith.constant 0 : index
    %3 = vector.load %arg9[%c409, %c0_2] : memref<456x8xf32, #tpu.memory_space<vmem>>, vector<47x8xf32>
    tpu.vector_store %arg9[%c409, %c0_2], %2 {strides = array<i32>} : memref<456x8xf32, #tpu.memory_space<vmem>>, vector<47x8xf32>,
    %c0_3 = arith.constant 0 : index
    %c0_4 = arith.constant 0 : index
    %4 = vector.load %arg7[%c0_3, %c0_4] : memref<384x1xf32, #tpu.memory_space<vmem>>, vector<384x1xf32>
    %c0_5 = arith.constant 0 : index
    %c0_6 = arith.constant 0 : index
    %c0_7 = arith.constant 0 : index
    %5 = vector.load %arg1[%c0_5, %c0_6, %c0_7] : memref<1x456x4xf32, #tpu.memory_space<vmem>>, vector<1x384x4xf32>
    %6 = vector.shape_cast %5 : vector<1x384x4xf32> to vector<384x4xf32>
    %c0_8 = arith.constant 0 : index
    %c1 = arith.constant 1 : index
    %c0_9 = arith.constant 0 : index
    %7 = vector.load %arg1[%c0_8, %c1, %c0_9] : memref<1x456x4xf32, #tpu.memory_space<vmem>>, vector<1x384x4xf32>
    %8 = vector.shape_cast %7 : vector<1x384x4xf32> to vector<384x4xf32>
    %c0_10 = arith.constant 0 : index
    %c2 = arith.constant 2 : index
    %c0_11 = arith.constant 0 : index
    %9 = vector.load %arg1[%c0_10, %c2, %c0_11] : memref<1x456x4xf32, #tpu.memory_space<vmem>>, vector<1x384x4xf32>
    %10 = vector.shape_cast %9 : vector<1x384x4xf32> to vector<384x4xf32>
    %c0_12 = arith.constant 0 : index
    %c24 = arith.constant 24 : index
    %c0_13 = arith.constant 0 : index
    %11 = vector.load %arg1[%c0_12, %c24, %c0_13] : memref<1x456x4xf32, #tpu.memory_space<vmem>>, vector<1x384x4xf32>
    %12 = vector.shape_cast %11 : vector<1x384x4xf32> to vector<384x4xf32>
    %c0_14 = arith.constant 0 : index
    %c25 = arith.constant 25 : index
    %c0_15 = arith.constant 0 : index
    %13 = vector.load %arg1[%c0_14, %c25, %c0_15] : memref<1x456x4xf32, #tpu.memory_space<vmem>>, vector<1x384x4xf32>
    %14 = vector.shape_cast %13 : vector<1x384x4xf32> to vector<384x4xf32>
    %c0_16 = arith.constant 0 : index
    %c26 = arith.constant 26 : index
    %c0_17 = arith.constant 0 : index
    %15 = vector.load %arg1[%c0_16, %c26, %c0_17] : memref<1x456x4xf32, #tpu.memory_space<vmem>>, vector<1x384x4xf32>
    %16 = vector.shape_cast %15 : vector<1x384x4xf32> to vector<384x4xf32>
    %c0_18 = arith.constant 0 : index
    %c48 = arith.constant 48 : index
    %c0_19 = arith.constant 0 : index
    %17 = vector.load %arg1[%c0_18, %c48, %c0_19] : memref<1x456x4xf32, #tpu.memory_space<vmem>>, vector<1x384x4xf32>
    %18 = vector.shape_cast %17 : vector<1x384x4xf32> to vector<384x4xf32>
    %c0_20 = arith.constant 0 : index
    %c49 = arith.constant 49 : index
    %c0_21 = arith.constant 0 : index
    %19 = vector.load %arg1[%c0_20, %c49, %c0_21] : memref<1x456x4xf32, #tpu.memory_space<vmem>>, vector<1x384x4xf32>
    %20 = vector.shape_cast %19 : vector<1x384x4xf32> to vector<384x4xf32>
    %c0_22 = arith.constant 0 : index
    %c50 = arith.constant 50 : index
    %c0_23 = arith.constant 0 : index
    %21 = vector.load %arg1[%c0_22, %c50, %c0_23] : memref<1x456x4xf32, #tpu.memory_space<vmem>>, vector<1x384x4xf32>
    %22 = vector.shape_cast %21 : vector<1x384x4xf32> to vector<384x4xf32>
    %23 = tpu.concatenate %6, %8, %10, %12, %14, %16, %18, %20, %22 in 1 : vector<384x4xf32>, vector<384x4xf32>, vector<384x4xf32>, vector<384x4xf32>, vector<384x4xf32>, vector<384x4xf32>, vector<384x4xf32>, vector<384x4xf32>, vector<384x4xf32> -> vector<384x36xf32>
    %c0_24 = arith.constant 0 : index
    %c0_25 = arith.constant 0 : index
    %24 = vector.load %arg2[%c0_24, %c0_25] : memref<36x8xf32, #tpu.memory_space<vmem>>, vector<36x8xf32>
    %cst_26 = arith.constant dense<0.000000e+00> : vector<384x8xf32>
    %25 = tpu.matmul %23, %24, %cst_26 {dimension_numbers = #tpu.dot_dimension_numbers<[1], [0], [0], [1], [0, 0, 1, 1], [], []>} : vector<384x36xf32>, vector<36x8xf32>, vector<384x8xf32> -> vector<384x8xf32>
    %c0_27 = arith.constant 0 : index
    %c0_28 = arith.constant 0 : index
    %26 = vector.load %arg3[%c0_27, %c0_28] : memref<1x8xf32, #tpu.memory_space<vmem>>, vector<1x8xf32>
    %27 = vector.broadcast %26 : vector<1x8xf32> to vector<384x8xf32>
    %28 = arith.addf %25, %27 : vector<384x8xf32>
    %cst_29 = arith.constant 0.000000e+00 : f32
    %29 = vector.broadcast %cst_29 : f32 to vector<384x8xf32>
    %30 = arith.cmpf oge, %28, %29 : vector<384x8xf32>
    %cst_30 = arith.constant 2.000000e-01 : f32
    %31 = vector.broadcast %cst_30 : f32 to vector<384x8xf32>
    %32 = arith.mulf %31, %28 : vector<384x8xf32>
    %33 = arith.select %30, %28, %32 : vector<384x8xi1>, vector<384x8xf32>
    %cst_31 = arith.constant 1.41421354 : f32
    %34 = vector.broadcast %cst_31 : f32 to vector<384x8xf32>
    %35 = arith.mulf %33, %34 : vector<384x8xf32>
    %36 = vector.broadcast %4 : vector<384x1xf32> to vector<384x8xf32>
    %37 = arith.mulf %35, %36 : vector<384x8xf32>
    %c25_32 = arith.constant 25 : index
    %c0_33 = arith.constant 0 : index
    %38 = vector.load %arg9[%c25_32, %c0_33] : memref<456x8xf32, #tpu.memory_space<vmem>>, vector<384x8xf32>
    tpu.vector_store %arg9[%c25_32, %c0_33], %37 {strides = array<i32>} : memref<456x8xf32, #tpu.memory_space<vmem>>, vector<384x8xf32>,
    %c0_34 = arith.constant 0 : index
    %c0_35 = arith.constant 0 : index
    %39 = vector.load %arg9[%c0_34, %c0_35] : memref<456x8xf32, #tpu.memory_space<vmem>>, vector<384x8xf32>
    %c1_36 = arith.constant 1 : index
    %c0_37 = arith.constant 0 : index
    %40 = vector.load %arg9[%c1_36, %c0_37] : memref<456x8xf32, #tpu.memory_space<vmem>>, vector<384x8xf32>
    %c2_38 = arith.constant 2 : index
    %c0_39 = arith.constant 0 : index
    %41 = vector.load %arg9[%c2_38, %c0_39] : memref<456x8xf32, #tpu.memory_space<vmem>>, vector<384x8xf32>
    %c24_40 = arith.constant 24 : index
    %c0_41 = arith.constant 0 : index
    %42 = vector.load %arg9[%c24_40, %c0_41] : memref<456x8xf32, #tpu.memory_space<vmem>>, vector<384x8xf32>
    %c25_42 = arith.constant 25 : index
    %c0_43 = arith.constant 0 : index
    %43 = vector.load %arg9[%c25_42, %c0_43] : memref<456x8xf32, #tpu.memory_space<vmem>>, vector<384x8xf32>
    %c26_44 = arith.constant 26 : index
    %c0_45 = arith.constant 0 : index
    %44 = vector.load %arg9[%c26_44, %c0_45] : memref<456x8xf32, #tpu.memory_space<vmem>>, vector<384x8xf32>
    %c48_46 = arith.constant 48 : index
    %c0_47 = arith.constant 0 : index
    %45 = vector.load %arg9[%c48_46, %c0_47] : memref<456x8xf32, #tpu.memory_space<vmem>>, vector<384x8xf32>
    %c49_48 = arith.constant 49 : index
    %c0_49 = arith.constant 0 : index
    %46 = vector.load %arg9[%c49_48, %c0_49] : memref<456x8xf32, #tpu.memory_space<vmem>>, vector<384x8xf32>
    %c50_50 = arith.constant 50 : index
    %c0_51 = arith.constant 0 : index
    %47 = vector.load %arg9[%c50_50, %c0_51] : memref<456x8xf32, #tpu.memory_space<vmem>>, vector<384x8xf32>
    %48 = tpu.concatenate %39, %40, %41, %42, %43, %44, %45, %46, %47 in 1 : vector<384x8xf32>, vector<384x8xf32>, vector<384x8xf32>, vector<384x8xf32>, vector<384x8xf32>, vector<384x8xf32>, vector<384x8xf32>, vector<384x8xf32>, vector<384x8xf32> -> vector<384x72xf32>
    %c0_52 = arith.constant 0 : index
    %c0_53 = arith.constant 0 : index
    %49 = vector.load %arg4[%c0_52, %c0_53] : memref<72x8xf32, #tpu.memory_space<vmem>>, vector<72x8xf32>
    %cst_54 = arith.constant dense<0.000000e+00> : vector<384x8xf32>
    %50 = tpu.matmul %48, %49, %cst_54 {dimension_numbers = #tpu.dot_dimension_numbers<[1], [0], [0], [1], [0, 0, 1, 1], [], []>} : vector<384x72xf32>, vector<72x8xf32>, vector<384x8xf32> -> vector<384x8xf32>
    %c0_55 = arith.constant 0 : index
    %c0_56 = arith.constant 0 : index
    %51 = vector.load %arg5[%c0_55, %c0_56] : memref<1x8xf32, #tpu.memory_space<vmem>>, vector<1x8xf32>
    %52 = vector.broadcast %51 : vector<1x8xf32> to vector<384x8xf32>
    %53 = arith.addf %50, %52 : vector<384x8xf32>
    %cst_57 = arith.constant 0.000000e+00 : f32
    %54 = vector.broadcast %cst_57 : f32 to vector<384x8xf32>
    %55 = arith.cmpf oge, %53, %54 : vector<384x8xf32>
    %cst_58 = arith.constant 2.000000e-01 : f32
    %56 = vector.broadcast %cst_58 : f32 to vector<384x8xf32>
    %57 = arith.mulf %56, %53 : vector<384x8xf32>
    %58 = arith.select %55, %53, %57 : vector<384x8xi1>, vector<384x8xf32>
    %cst_59 = arith.constant 1.41421354 : f32
    %59 = vector.broadcast %cst_59 : f32 to vector<384x8xf32>
    %60 = arith.mulf %58, %59 : vector<384x8xf32>
    %c0_60 = arith.constant 0 : index
    %c25_61 = arith.constant 25 : index
    %c0_62 = arith.constant 0 : index
    %61 = vector.load %arg1[%c0_60, %c25_61, %c0_62] : memref<1x456x4xf32, #tpu.memory_space<vmem>>, vector<1x384x4xf32>
    %62 = vector.shape_cast %61 : vector<1x384x4xf32> to vector<384x4xf32>
    %c0_63 = arith.constant 0 : index
    %c0_64 = arith.constant 0 : index
    %63 = vector.load %arg6[%c0_63, %c0_64] : memref<4x8xf32, #tpu.memory_space<vmem>>, vector<4x8xf32>
    %cst_65 = arith.constant dense<0.000000e+00> : vector<384x8xf32>
    %64 = tpu.matmul %62, %63, %cst_65 {dimension_numbers = #tpu.dot_dimension_numbers<[1], [0], [0], [1], [0, 0, 1, 1], [], []>} : vector<384x4xf32>, vector<4x8xf32>, vector<384x8xf32> -> vector<384x8xf32>
    %65 = arith.addf %60, %64 : vector<384x8xf32>
    %cst_66 = arith.constant 0.707106769 : f32
    %66 = vector.broadcast %cst_66 : f32 to vector<384x8xf32>
    %67 = arith.mulf %65, %66 : vector<384x8xf32>
    %68 = vector.shape_cast %67 : vector<384x8xf32> to vector<1x384x8xf32>
    %c0_67 = arith.constant 0 : index
    %c0_68 = arith.constant 0 : index
    %c0_69 = arith.constant 0 : index
    %69 = vector.load %arg8[%c0_67, %c0_68, %c0_69] : memref<1x384x8xf32, #tpu.memory_space<vmem>>, vector<1x384x8xf32>
    tpu.vector_store %arg8[%c0_67, %c0_68, %c0_69], %68 {strides = array<i32>} : memref<1x384x8xf32, #tpu.memory_space<vmem>>, vector<1x384x8xf32>,
    return
  }
  func.func @transform_0(%arg0: i32) -> (i32, i32, i32) {
    %c0_i32 = arith.constant 0 : i32
    %c0_i32_0 = arith.constant 0 : i32
    %c0_i32_1 = arith.constant 0 : i32
    return %arg0, %c0_i32, %c0_i32_0 : i32, i32, i32
  }
  func.func @transform_1(%arg0: i32) -> (i32, i32) {
    %c0_i32 = arith.constant 0 : i32
    %c0_i32_0 = arith.constant 0 : i32
    %c0_i32_1 = arith.constant 0 : i32
    return %c0_i32, %c0_i32_0 : i32, i32
  }
  func.func @transform_2(%arg0: i32) -> (i32, i32) {
    %c0_i32 = arith.constant 0 : i32
    %c0_i32_0 = arith.constant 0 : i32
    %c0_i32_1 = arith.constant 0 : i32
    return %c0_i32, %c0_i32_0 : i32, i32
  }
  func.func @transform_3(%arg0: i32) -> (i32, i32) {
    %c0_i32 = arith.constant 0 : i32
    %c0_i32_0 = arith.constant 0 : i32
    %c0_i32_1 = arith.constant 0 : i32
    return %c0_i32, %c0_i32_0 : i32, i32
  }
  func.func @transform_4(%arg0: i32) -> (i32, i32) {
    %c0_i32 = arith.constant 0 : i32
    %c0_i32_0 = arith.constant 0 : i32
    %c0_i32_1 = arith.constant 0 : i32
    return %c0_i32, %c0_i32_0 : i32, i32
  }
  func.func @transform_5(%arg0: i32) -> (i32, i32) {
    %c0_i32 = arith.constant 0 : i32
    %c0_i32_0 = arith.constant 0 : i32
    %c0_i32_1 = arith.constant 0 : i32
    return %c0_i32, %c0_i32_0 : i32, i32
  }
  func.func @transform_6(%arg0: i32) -> (i32, i32) {
    %c0_i32 = arith.constant 0 : i32
    %c0_i32_0 = arith.constant 0 : i32
    %c0_i32_1 = arith.constant 0 : i32
    return %c0_i32, %c0_i32_0 : i32, i32
  }
  func.func @transform_7(%arg0: i32) -> (i32, i32, i32) {
    %c0_i32 = arith.constant 0 : i32
    %c0_i32_0 = arith.constant 0 : i32
    %c0_i32_1 = arith.constant 0 : i32
    return %arg0, %c0_i32, %c0_i32_0 : i32, i32, i32
  }
}

</mosaic_0001>

<llo_original>
// kernel: tpu_custom_call.1
$region0: #{tpu_custom_call.1}
  #allocation0 [shape = 'u32[]', space=smem, size = 0x4, offset = 0x4, fixed_abs, tag = 'smem constant byte address 0x4 - core index']
  #allocation1 [shape = 'u32[144,128]{1,0:T(1,128)}', space=vmem, size = 0x12000, scoped, tag = 'internal scratch']
  #allocation2 [shape = 'f32[456,8]{1,0:T(8,128)}', space=vmem, size = 0x39000, scoped, tag = 'scratch operand']
  %s0 = inlined_call_operand.vmem [shape: f32[2,456,4], index: 0, kind: input, shape index: {}]
  %s1 = inlined_call_operand.vmem [shape: f32[36,8], index: 1, kind: input, shape index: {}]
  %s2 = inlined_call_operand.vmem [shape: f32[1,8], index: 2, kind: input, shape index: {}]
  %s3 = inlined_call_operand.vmem [shape: f32[72,8], index: 3, kind: input, shape index: {}]
  %s4 = inlined_call_operand.vmem [shape: f32[1,8], index: 4, kind: input, shape index: {}]
  %s5 = inlined_call_operand.vmem [shape: f32[4,8], index: 5, kind: input, shape index: {}]
  %s6 = inlined_call_operand.vmem [shape: f32[384,1], index: 6, kind: input, shape index: {}]
  %s7 = inlined_call_operand.vmem [shape: f32[2,384,8], index: 7, kind: output, shape index: {}]
  %s8 = sld [smem:[#allocation0]]
  $region61: #{tpu_custom_call.1} parent=0
    _
  %s10 = ssub.s32 1, %s8
  %s11 = scalar_select 0, %s10, %s8
  loop: start=0, step=1, limit=4
  $region2: #{tpu_custom_call.1} parent=0 // loop_pre_header
    _
  $region3: #{tpu_custom_call.1} parent=0 // loop_header
    %s13 = sphi 0, %s17
    %p14 = scmp.ge.s32.totalorder %s13, 4
    %s23 = sphi 0, %s25
    %s26 = sphi 0, %s23
    %s27 = sphi 0, %s26
    %s43 = sphi 0, %s27
    %s47 = sphi 0, %s47
    %s49 = sphi 0, %s47
    %s50 = sphi 0, %s49
    %s64 = sphi 0, %s50
    %s68 = sphi 0, %s68
    %s70 = sphi 0, %s68
    %s71 = sphi 0, %s70
    %s85 = sphi 0, %s71
    %s89 = sphi 0, %s89
    %s91 = sphi 0, %s89
    %s92 = sphi 0, %s91
    %s106 = sphi 0, %s92
    %s110 = sphi 0, %s110
    %s112 = sphi 0, %s110
    %s113 = sphi 0, %s112
    %s127 = sphi 0, %s113
    %s131 = sphi 0, %s131
    %s133 = sphi 0, %s131
    %s134 = sphi 0, %s133
    %s148 = sphi 0, %s134
    %s152 = sphi 0, %s152
    %s154 = sphi 0, %s152
    %s155 = sphi 0, %s154
    %s169 = sphi 0, %s155
    %s175 = sphi 0, %s177
    %s178 = sphi 0, %s175
    %s179 = sphi 0, %s178
    %s195 = sphi 0, %s179
  $region4: #{tpu_custom_call.1} parent=0 // loop_header_branch
    %16 = sbr.rel (%p14) target = $region8
  $region5: #{tpu_custom_call.1} parent=0 // loop_body
    %s18 = ssub.s32 %s13, 1
    %s19 = ssub.s32 %s13, 2
    %s20 = sadd.s32 %s13, 1
    %s21 = ssub.s32 %s13, %s20
    %p22 = scmp.eq.s32.totalorder %s21, 0
    %s24 = sadd.s32 %s23, 1
    %s25 = scalar_select %p22, %s23, %s24
    %p28 = pneg %p22
    %p29 = scmp.eq.s32.totalorder %s13, 1
    %p30 = por %p28, %p29
    %p31 = scmp.ne.s32.totalorder %s23, %s26
    %p32 = scmp.eq.s32.totalorder %s13, 0
    %p33 = por %p31, %p32
    %p34 = scmp.ne.s32.totalorder %s23, %s26
    %p35 = scmp.eq.s32.totalorder %s18, 1
    %p36 = por %p34, %p35
    %p37 = scmp.ne.s32.totalorder %s26, %s27
    %p38 = scmp.eq.s32.totalorder %s18, 0
    %p39 = por %p37, %p38
    %p40 = scmp.ne.s32.totalorder %s26, %s27
    %p41 = scmp.eq.s32.totalorder %s19, 1
    %p42 = por %p40, %p41
    %p44 = scmp.ne.s32.totalorder %s27, %s43
    %p45 = scmp.eq.s32.totalorder %s19, 0
    %p46 = por %p44, %p45
    %s48 = sadd.s32 %s47, 1
    %p51 = scmp.eq.s32.totalorder %s13, 1
    %p52 = scmp.ne.s32.totalorder %s47, %s49
    %p53 = scmp.eq.s32.totalorder %s13, 0
    %p54 = por %p52, %p53
    %p55 = scmp.ne.s32.totalorder %s47, %s49
    %p56 = scmp.eq.s32.totalorder %s18, 1
    %p57 = por %p55, %p56
    %p58 = scmp.ne.s32.totalorder %s49, %s50
    %p59 = scmp.eq.s32.totalorder %s18, 0
    %p60 = por %p58, %p59
    %p61 = scmp.ne.s32.totalorder %s49, %s50
    %p62 = scmp.eq.s32.totalorder %s19, 1
    %p63 = por %p61, %p62
    %p65 = scmp.ne.s32.totalorder %s50, %s64
    %p66 = scmp.eq.s32.totalorder %s19, 0
    %p67 = por %p65, %p66
    %s69 = sadd.s32 %s68, 1
    %p72 = scmp.eq.s32.totalorder %s13, 1
    %p73 = scmp.ne.s32.totalorder %s68, %s70
    %p74 = scmp.eq.s32.totalorder %s13, 0
    %p75 = por %p73, %p74
    %p76 = scmp.ne.s32.totalorder %s68, %s70
    %p77 = scmp.eq.s32.totalorder %s18, 1
    %p78 = por %p76, %p77
    %p79 = scmp.ne.s32.totalorder %s70, %s71
    %p80 = scmp.eq.s32.totalorder %s18, 0
    %p81 = por %p79, %p80
    %p82 = scmp.ne.s32.totalorder %s70, %s71
    %p83 = scmp.eq.s32.totalorder %s19, 1
    %p84 = por %p82, %p83
    %p86 = scmp.ne.s32.totalorder %s71, %s85
    %p87 = scmp.eq.s32.totalorder %s19, 0
    %p88 = por %p86, %p87
    %s90 = sadd.s32 %s89, 1
    %p93 = scmp.eq.s32.totalorder %s13, 1
    %p94 = scmp.ne.s32.totalorder %s89, %s91
    %p95 = scmp.eq.s32.totalorder %s13, 0
    %p96 = por %p94, %p95
    %p97 = scmp.ne.s32.totalorder %s89, %s91
    %p98 = scmp.eq.s32.totalorder %s18, 1
    %p99 = por %p97, %p98
    %p100 = scmp.ne.s32.totalorder %s91, %s92
    %p101 = scmp.eq.s32.totalorder %s18, 0
    %p102 = por %p100, %p101
    %p103 = scmp.ne.s32.totalorder %s91, %s92
    %p104 = scmp.eq.s32.totalorder %s19, 1
    %p105 = por %p103, %p104
    %p107 = scmp.ne.s32.totalorder %s92, %s106
    %p108 = scmp.eq.s32.totalorder %s19, 0
    %p109 = por %p107, %p108
    %s111 = sadd.s32 %s110, 1
    %p114 = scmp.eq.s32.totalorder %s13, 1
    %p115 = scmp.ne.s32.totalorder %s110, %s112
    %p116 = scmp.eq.s32.totalorder %s13, 0
    %p117 = por %p115, %p116
    %p118 = scmp.ne.s32.totalorder %s110, %s112
    %p119 = scmp.eq.s32.totalorder %s18, 1
    %p120 = por %p118, %p119
    %p121 = scmp.ne.s32.totalorder %s112, %s113
    %p122 = scmp.eq.s32.totalorder %s18, 0
    %p123 = por %p121, %p122
    %p124 = scmp.ne.s32.totalorder %s112, %s113
    %p125 = scmp.eq.s32.totalorder %s19, 1
    %p126 = por %p124, %p125
    %p128 = scmp.ne.s32.totalorder %s113, %s127
    %p129 = scmp.eq.s32.totalorder %s19, 0
    %p130 = por %p128, %p129
    %s132 = sadd.s32 %s131, 1
    %p135 = scmp.eq.s32.totalorder %s13, 1
    %p136 = scmp.ne.s32.totalorder %s131, %s133
    %p137 = scmp.eq.s32.totalorder %s13, 0
    %p138 = por %p136, %p137
    %p139 = scmp.ne.s32.totalorder %s131, %s133
    %p140 = scmp.eq.s32.totalorder %s18, 1
    %p141 = por %p139, %p140
    %p142 = scmp.ne.s32.totalorder %s133, %s134
    %p143 = scmp.eq.s32.totalorder %s18, 0
    %p144 = por %p142, %p143
    %p145 = scmp.ne.s32.totalorder %s133, %s134
    %p146 = scmp.eq.s32.totalorder %s19, 1
    %p147 = por %p145, %p146
    %p149 = scmp.ne.s32.totalorder %s134, %s148
    %p150 = scmp.eq.s32.totalorder %s19, 0
    %p151 = por %p149, %p150
    %s153 = sadd.s32 %s152, 1
    %p156 = scmp.eq.s32.totalorder %s13, 1
    %p157 = scmp.ne.s32.totalorder %s152, %s154
    %p158 = scmp.eq.s32.totalorder %s13, 0
    %p159 = por %p157, %p158
    %p160 = scmp.ne.s32.totalorder %s152, %s154
    %p161 = scmp.eq.s32.totalorder %s18, 1
    %p162 = por %p160, %p161
    %p163 = scmp.ne.s32.totalorder %s154, %s155
    %p164 = scmp.eq.s32.totalorder %s18, 0
    %p165 = por %p163, %p164
    %p166 = scmp.ne.s32.totalorder %s154, %s155
    %p167 = scmp.eq.s32.totalorder %s19, 1
    %p168 = por %p166, %p167
    %p170 = scmp.ne.s32.totalorder %s155, %s169
    %p171 = scmp.eq.s32.totalorder %s19, 0
    %p172 = por %p170, %p171
    %s173 = ssub.s32 %s13, %s20
    %p174 = scmp.eq.s32.totalorder %s173, 0
    %s176 = sadd.s32 %s175, 1
    %s177 = scalar_select %p174, %s175, %s176
    %p180 = pneg %p174
    %p181 = scmp.eq.s32.totalorder %s13, 1
    %p182 = por %p180, %p181
    %p183 = scmp.ne.s32.totalorder %s175, %s178
    %p184 = scmp.eq.s32.totalorder %s13, 0
    %p185 = por %p183, %p184
    %p186 = scmp.ne.s32.totalorder %s175, %s178
    %p187 = scmp.eq.s32.totalorder %s18, 1
    %p188 = por %p186, %p187
    %p189 = scmp.ne.s32.totalorder %s178, %s179
    %p190 = scmp.eq.s32.totalorder %s18, 0
    %p191 = por %p189, %p190
    %p192 = scmp.ne.s32.totalorder %s178, %s179
    %p193 = scmp.eq.s32.totalorder %s19, 1
    %p194 = por %p192, %p193
    %p196 = scmp.ne.s32.totalorder %s179, %s195
    %p197 = scmp.eq.s32.totalorder %s19, 0
    %p198 = por %p196, %p197
    %p199 = scmp.le.s32.totalorder 1, %s13
    %p200 = scmp.lt.s32.totalorder %s13, 3
    %p201 = pnand %p199, %p200
    %p202 = pneg %p201
    // Predicated region
    $region9: #{tpu_custom_call.1} parent=5 // pred_check
      _
    $region10: #{tpu_custom_call.1} parent=5 // pred_check_branch
      %204 = sbr.rel (%p201) target = $region12
    $region11: #{tpu_custom_call.1} parent=5 // pred_region
      %s205 = ssub.s32 %s13, 1
      // Predicated region
      $region13: #{tpu_custom_call.1} parent=11 // pred_check
        %p206 = pneg %p60
      $region14: #{tpu_custom_call.1} parent=11 // pred_check_branch
        %208 = sbr.rel (%p206) target = $region16
      $region15: #{tpu_custom_call.1} parent=11 // pred_region
        _
      $region16: #{tpu_custom_call.1} parent=11 // pred_fallthru
        _
      // Predicated region
      $region17: #{tpu_custom_call.1} parent=11 // pred_check
        %p209 = pneg %p81
      $region18: #{tpu_custom_call.1} parent=11 // pred_check_branch
        %211 = sbr.rel (%p209) target = $region20
      $region19: #{tpu_custom_call.1} parent=11 // pred_region
        _
      $region20: #{tpu_custom_call.1} parent=11 // pred_fallthru
        _
      // Predicated region
      $region21: #{tpu_custom_call.1} parent=11 // pred_check
        %p212 = pneg %p102
      $region22: #{tpu_custom_call.1} parent=11 // pred_check_branch
        %214 = sbr.rel (%p212) target = $region24
      $region23: #{tpu_custom_call.1} parent=11 // pred_region
        _
      $region24: #{tpu_custom_call.1} parent=11 // pred_fallthru
        _
      // Predicated region
      $region25: #{tpu_custom_call.1} parent=11 // pred_check
        %p215 = pneg %p123
      $region26: #{tpu_custom_call.1} parent=11 // pred_check_branch
        %217 = sbr.rel (%p215) target = $region28
      $region27: #{tpu_custom_call.1} parent=11 // pred_region
        _
      $region28: #{tpu_custom_call.1} parent=11 // pred_fallthru
        _
      // Predicated region
      $region29: #{tpu_custom_call.1} parent=11 // pred_check
        %p218 = pneg %p144
      $region30: #{tpu_custom_call.1} parent=11 // pred_check_branch
        %220 = sbr.rel (%p218) target = $region32
      $region31: #{tpu_custom_call.1} parent=11 // pred_region
        _
      $region32: #{tpu_custom_call.1} parent=11 // pred_fallthru
        _
      // Predicated region
      $region33: #{tpu_custom_call.1} parent=11 // pred_check
        %p221 = pneg %p165
      $region34: #{tpu_custom_call.1} parent=11 // pred_check_branch
        %223 = sbr.rel (%p221) target = $region36
      $region35: #{tpu_custom_call.1} parent=11 // pred_region
        _
      $region36: #{tpu_custom_call.1} parent=11 // pred_fallthru
        _
    $region12: #{tpu_custom_call.1} parent=5 // pred_fallthru
      _
    %p224 = scmp.lt.s32.totalorder %s13, 2
    // Predicated region
    $region37: #{tpu_custom_call.1} parent=5 // pred_check
      %p225 = pneg %p224
    $region38: #{tpu_custom_call.1} parent=5 // pred_check_branch
      %227 = sbr.rel (%p225) target = $region40
    $region39: #{tpu_custom_call.1} parent=5 // pred_region
      // Predicated region
      $region41: #{tpu_custom_call.1} parent=39 // pred_check
        %p228 = pneg %p33
      $region42: #{tpu_custom_call.1} parent=39 // pred_check_branch
        %230 = sbr.rel (%p228) target = $region44
      $region43: #{tpu_custom_call.1} parent=39 // pred_region
        %p231 = scmp.lt.s32.totalorder %s13, 1
        %s232 = scalar_select %p231, %s13, 1
        %s233 = smul.addr %s232, 57
        %s234 = smul.addr %s233, 8
        %s235 = scalar_lea.vmem %s0, %s234
      $region44: #{tpu_custom_call.1} parent=39 // pred_fallthru
        _
    $region40: #{tpu_custom_call.1} parent=5 // pred_fallthru
      _
    %p236 = scmp.le.s32.totalorder 1, %s13
    %p237 = scmp.lt.s32.totalorder %s13, 3
    %p238 = pnand %p236, %p237
    %p239 = pneg %p238
    // Predicated region
    $region45: #{tpu_custom_call.1} parent=5 // pred_check
      _
    $region46: #{tpu_custom_call.1} parent=5 // pred_check_branch
      %241 = sbr.rel (%p238) target = $region48
    $region47: #{tpu_custom_call.1} parent=5 // pred_region
      %s242 = ssub.s32 %s13, 1
      %p243 = scmp.lt.s32.totalorder %s18, 1
      %s244 = scalar_select %p243, %s18, 1
      %s245 = smul.addr %s244, 57
      %s246 = smul.addr %s245, 8
      %s247 = scalar_lea.vmem %s0, %s246
      %p248 = pneg %p39
      %p249 = pneg %p36
      %p250 = pneg %p60
      %p251 = pneg %p57
      %p252 = pneg %p81
      %p253 = pneg %p78
      %p254 = pneg %p102
      %p255 = pneg %p99
      %p256 = pneg %p123
      %p257 = pneg %p120
      %p258 = pneg %p144
      %p259 = pneg %p141
      %p260 = pneg %p165
      %p261 = pneg %p162
      %p262 = pneg %p191
      %p263 = pneg %p188
      %p264 = scmp.lt.s32.totalorder %s18, 1
      %s265 = scalar_select %p264, %s18, 1
      %s266 = smul.addr %s265, 48
      %s267 = smul.addr %s266, 8
      %s268 = scalar_lea.vmem %s7, %s267
      %p269 = scmp.lt.s32.totalorder %s18, 1
      %s270 = scalar_select %p269, %s18, 1
      %s271 = smul.addr %s270, 57
      %s272 = smul.addr %s271, 8
      %s273 = scalar_lea.vmem %s0, %s272
      %p274 = scmp.lt.s32.totalorder %s18, 1
      %s275 = scalar_select %p274, %s18, 1
      %s276 = smul.addr %s275, 48
      %s277 = smul.addr %s276, 8
      %s278 = scalar_lea.vmem %s7, %s277
      %vm279 = vcmask 64512
      %280 = vst.msk [vmem:[#allocation2] sm:$0xff] %vm279, 0.0
      %281 = vst.msk [vmem:[#allocation2 + $0x8] sm:$0xff] %vm279, 0.0
      %282 = vst.msk [vmem:[#allocation2 + $0x10] sm:$0xff] %vm279, 0.0
      %vm283 = vcmask 57344
      %284 = vst.msk [vmem:[#allocation2 + $0x18] sm:$0x1] %vm283, 0.0
      %285 = vst.msk [vmem:[#allocation2 + $0x199] sm:$0xff] %vm279, 0.0
      %286 = vst.msk [vmem:[#allocation2 + $0x1a1] sm:$0xff] %vm279, 0.0
      %287 = vst.msk [vmem:[#allocation2 + $0x1a9] sm:$0xff] %vm279, 0.0
      %288 = vst.msk [vmem:[#allocation2 + $0x1b1] sm:$0xff] %vm279, 0.0
      %289 = vst.msk [vmem:[#allocation2 + $0x1b9] sm:$0xff] %vm279, 0.0
      %vm290 = vcmask 63488
      %291 = vst.msk [vmem:[#allocation2 + $0x1c1] sm:$0x7f] %vm290, 0.0
      %v292 = vld [vmem:[%s6] sm:$0xff]
      %v293 = vld [vmem:[%s6 + $0x8] sm:$0xff]
      %v294 = vld [vmem:[%s6 + $0x10] sm:$0xff]
      %v295 = vld [vmem:[%s6 + $0x18] sm:$0xff]
      %v296 = vld [vmem:[%s6 + $0x20] sm:$0xff]
      %v297 = vld [vmem:[%s6 + $0x28] sm:$0xff]
      %v298 = vld [vmem:[%s6 + $0x30] sm:$0xff]
      %v299 = vld [vmem:[%s6 + $0x38] sm:$0xff]
      %v300 = vld [vmem:[%s6 + $0x40] sm:$0xff]
      %v301 = vld [vmem:[%s6 + $0x48] sm:$0xff]
      %v302 = vld [vmem:[%s6 + $0x50] sm:$0xff]
      %v303 = vld [vmem:[%s6 + $0x58] sm:$0xff]
      %v304 = vld [vmem:[%s6 + $0x60] sm:$0xff]
      %v305 = vld [vmem:[%s6 + $0x68] sm:$0xff]
      %v306 = vld [vmem:[%s6 + $0x70] sm:$0xff]
      %v307 = vld [vmem:[%s6 + $0x78] sm:$0xff]
      %v308 = vld [vmem:[%s6 + $0x80] sm:$0xff]
      %v309 = vld [vmem:[%s6 + $0x88] sm:$0xff]
      %v310 = vld [vmem:[%s6 + $0x90] sm:$0xff]
      %v311 = vld [vmem:[%s6 + $0x98] sm:$0xff]
      %v312 = vld [vmem:[%s6 + $0xa0] sm:$0xff]
      %v313 = vld [vmem:[%s6 + $0xa8] sm:$0xff]
      %v314 = vld [vmem:[%s6 + $0xb0] sm:$0xff]
      %v315 = vld [vmem:[%s6 + $0xb8] sm:$0xff]
      %v316 = vld [vmem:[%s6 + $0xc0] sm:$0xff]
      %v317 = vld [vmem:[%s6 + $0xc8] sm:$0xff]
      %v318 = vld [vmem:[%s6 + $0xd0] sm:$0xff]
      %v319 = vld [vmem:[%s6 + $0xd8] sm:$0xff]
      %v320 = vld [vmem:[%s6 + $0xe0] sm:$0xff]
      %v321 = vld [vmem:[%s6 + $0xe8] sm:$0xff]
      %v322 = vld [vmem:[%s6 + $0xf0] sm:$0xff]
      %v323 = vld [vmem:[%s6 + $0xf8] sm:$0xff]
      %v324 = vld [vmem:[%s6 + $0x100] sm:$0xff]
      %v325 = vld [vmem:[%s6 + $0x108] sm:$0xff]
      %v326 = vld [vmem:[%s6 + $0x110] sm:$0xff]
      %v327 = vld [vmem:[%s6 + $0x118] sm:$0xff]
      %v328 = vld [vmem:[%s6 + $0x120] sm:$0xff]
      %v329 = vld [vmem:[%s6 + $0x128] sm:$0xff]
      %v330 = vld [vmem:[%s6 + $0x130] sm:$0xff]
      %v331 = vld [vmem:[%s6 + $0x138] sm:$0xff]
      %v332 = vld [vmem:[%s6 + $0x140] sm:$0xff]
      %v333 = vld [vmem:[%s6 + $0x148] sm:$0xff]
      %v334 = vld [vmem:[%s6 + $0x150] sm:$0xff]
      %v335 = vld [vmem:[%s6 + $0x158] sm:$0xff]
      %v336 = vld [vmem:[%s6 + $0x160] sm:$0xff]
      %v337 = vld [vmem:[%s6 + $0x168] sm:$0xff]
      %v338 = vld [vmem:[%s6 + $0x170] sm:$0xff]
      %v339 = vld [vmem:[%s6 + $0x178] sm:$0xff]
      %v340 = vld [vmem:[%s273] sm:$0xff]
      %v341 = vld [vmem:[%s273 + $0x8] sm:$0xff]
      %v342 = vld [vmem:[%s273 + $0x10] sm:$0xff]
      %v343 = vld [vmem:[%s273 + $0x18] sm:$0xff]
      %v344 = vld [vmem:[%s273 + $0x20] sm:$0xff]
      %v345 = vld [vmem:[%s273 + $0x28] sm:$0xff]
      %v346 = vld [vmem:[%s273 + $0x30] sm:$0xff]
      %v347 = vld [vmem:[%s273 + $0x38] sm:$0xff]
      %v348 = vld [vmem:[%s273 + $0x40] sm:$0xff]
      %v349 = vld [vmem:[%s273 + $0x48] sm:$0xff]
      %v350 = vld [vmem:[%s273 + $0x50] sm:$0xff]
      %v351 = vld [vmem:[%s273 + $0x58] sm:$0xff]
      %v352 = vld [vmem:[%s273 + $0x60] sm:$0xff]
      %v353 = vld [vmem:[%s273 + $0x68] sm:$0xff]
      %v354 = vld [vmem:[%s273 + $0x70] sm:$0xff]
      %v355 = vld [vmem:[%s273 + $0x78] sm:$0xff]
      %v356 = vld [vmem:[%s273 + $0x80] sm:$0xff]
      %v357 = vld [vmem:[%s273 + $0x88] sm:$0xff]
      %v358 = vld [vmem:[%s273 + $0x90] sm:$0xff]
      %v359 = vld [vmem:[%s273 + $0x98] sm:$0xff]
      %v360 = vld [vmem:[%s273 + $0xa0] sm:$0xff]
      %v361 = vld [vmem:[%s273 + $0xa8] sm:$0xff]
      %v362 = vld [vmem:[%s273 + $0xb0] sm:$0xff]
      %v363 = vld [vmem:[%s273 + $0xb8] sm:$0xff]
      %v364 = vld [vmem:[%s273 + $0xc0] sm:$0xff]
      %v365 = vld [vmem:[%s273 + $0xc8] sm:$0xff]
      %v366 = vld [vmem:[%s273 + $0xd0] sm:$0xff]
      %v367 = vld [vmem:[%s273 + $0xd8] sm:$0xff]
      %v368 = vld [vmem:[%s273 + $0xe0] sm:$0xff]
      %v369 = vld [vmem:[%s273 + $0xe8] sm:$0xff]
      %v370 = vld [vmem:[%s273 + $0xf0] sm:$0xff]
      %v371 = vld [vmem:[%s273 + $0xf8] sm:$0xff]
      %v372 = vld [vmem:[%s273 + $0x100] sm:$0xff]
      %v373 = vld [vmem:[%s273 + $0x108] sm:$0xff]
      %v374 = vld [vmem:[%s273 + $0x110] sm:$0xff]
      %v375 = vld [vmem:[%s273 + $0x118] sm:$0xff]
      %v376 = vld [vmem:[%s273 + $0x120] sm:$0xff]
      %v377 = vld [vmem:[%s273 + $0x128] sm:$0xff]
      %v378 = vld [vmem:[%s273 + $0x130] sm:$0xff]
      %v379 = vld [vmem:[%s273 + $0x138] sm:$0xff]
      %v380 = vld [vmem:[%s273 + $0x140] sm:$0xff]
      %v381 = vld [vmem:[%s273 + $0x148] sm:$0xff]
      %v382 = vld [vmem:[%s273 + $0x150] sm:$0xff]
      %v383 = vld [vmem:[%s273 + $0x158] sm:$0xff]
      %v384 = vld [vmem:[%s273 + $0x160] sm:$0xff]
      %v385 = vld [vmem:[%s273 + $0x168] sm:$0xff]
      %v386 = vld [vmem:[%s273 + $0x170] sm:$0xff]
      %v387 = vld [vmem:[%s273 + $0x178] sm:$0xff]
      %v388 = vld [vmem:[%s273 + $0x1] sm:$0xff]
      %v389 = vld [vmem:[%s273 + $0x9] sm:$0xff]
      %v390 = vld [vmem:[%s273 + $0x11] sm:$0xff]
      %v391 = vld [vmem:[%s273 + $0x19] sm:$0xff]
      %v392 = vld [vmem:[%s273 + $0x21] sm:$0xff]
      %v393 = vld [vmem:[%s273 + $0x29] sm:$0xff]
      %v394 = vld [vmem:[%s273 + $0x31] sm:$0xff]
      %v395 = vld [vmem:[%s273 + $0x39] sm:$0xff]
      %v396 = vld [vmem:[%s273 + $0x41] sm:$0xff]
      %v397 = vld [vmem:[%s273 + $0x49] sm:$0xff]
      %v398 = vld [vmem:[%s273 + $0x51] sm:$0xff]
      %v399 = vld [vmem:[%s273 + $0x59] sm:$0xff]
      %v400 = vld [vmem:[%s273 + $0x61] sm:$0xff]
      %v401 = vld [vmem:[%s273 + $0x69] sm:$0xff]
      %v402 = vld [vmem:[%s273 + $0x71] sm:$0xff]
      %v403 = vld [vmem:[%s273 + $0x79] sm:$0xff]
      %v404 = vld [vmem:[%s273 + $0x81] sm:$0xff]
      %v405 = vld [vmem:[%s273 + $0x89] sm:$0xff]
      %v406 = vld [vmem:[%s273 + $0x91] sm:$0xff]
      %v407 = vld [vmem:[%s273 + $0x99] sm:$0xff]
      %v408 = vld [vmem:[%s273 + $0xa1] sm:$0xff]
      %v409 = vld [vmem:[%s273 + $0xa9] sm:$0xff]
      %v410 = vld [vmem:[%s273 + $0xb1] sm:$0xff]
      %v411 = vld [vmem:[%s273 + $0xb9] sm:$0xff]
      %v412 = vld [vmem:[%s273 + $0xc1] sm:$0xff]
      %v413 = vld [vmem:[%s273 + $0xc9] sm:$0xff]
      %v414 = vld [vmem:[%s273 + $0xd1] sm:$0xff]
      %v415 = vld [vmem:[%s273 + $0xd9] sm:$0xff]
      %v416 = vld [vmem:[%s273 + $0xe1] sm:$0xff]
      %v417 = vld [vmem:[%s273 + $0xe9] sm:$0xff]
      %v418 = vld [vmem:[%s273 + $0xf1] sm:$0xff]
      %v419 = vld [vmem:[%s273 + $0xf9] sm:$0xff]
      %v420 = vld [vmem:[%s273 + $0x101] sm:$0xff]
      %v421 = vld [vmem:[%s273 + $0x109] sm:$0xff]
      %v422 = vld [vmem:[%s273 + $0x111] sm:$0xff]
      %v423 = vld [vmem:[%s273 + $0x119] sm:$0xff]
      %v424 = vld [vmem:[%s273 + $0x121] sm:$0xff]
      %v425 = vld [vmem:[%s273 + $0x129] sm:$0xff]
      %v426 = vld [vmem:[%s273 + $0x131] sm:$0xff]
      %v427 = vld [vmem:[%s273 + $0x139] sm:$0xff]
      %v428 = vld [vmem:[%s273 + $0x141] sm:$0xff]
      %v429 = vld [vmem:[%s273 + $0x149] sm:$0xff]
      %v430 = vld [vmem:[%s273 + $0x151] sm:$0xff]
      %v431 = vld [vmem:[%s273 + $0x159] sm:$0xff]
      %v432 = vld [vmem:[%s273 + $0x161] sm:$0xff]
      %v433 = vld [vmem:[%s273 + $0x169] sm:$0xff]
      %v434 = vld [vmem:[%s273 + $0x171] sm:$0xff]
      %v435 = vld [vmem:[%s273 + $0x179] sm:$0xff]
      %v436 = vld [vmem:[%s273 + $0x2] sm:$0xff]
      %v437 = vld [vmem:[%s273 + $0xa] sm:$0xff]
      %v438 = vld [vmem:[%s273 + $0x12] sm:$0xff]
      %v439 = vld [vmem:[%s273 + $0x1a] sm:$0xff]
      %v440 = vld [vmem:[%s273 + $0x22] sm:$0xff]
      %v441 = vld [vmem:[%s273 + $0x2a] sm:$0xff]
      %v442 = vld [vmem:[%s273 + $0x32] sm:$0xff]
      %v443 = vld [vmem:[%s273 + $0x3a] sm:$0xff]
      %v444 = vld [vmem:[%s273 + $0x42] sm:$0xff]
      %v445 = vld [vmem:[%s273 + $0x4a] sm:$0xff]
      %v446 = vld [vmem:[%s273 + $0x52] sm:$0xff]
      %v447 = vld [vmem:[%s273 + $0x5a] sm:$0xff]
      %v448 = vld [vmem:[%s273 + $0x62] sm:$0xff]
      %v449 = vld [vmem:[%s273 + $0x6a] sm:$0xff]
      %v450 = vld [vmem:[%s273 + $0x72] sm:$0xff]
      %v451 = vld [vmem:[%s273 + $0x7a] sm:$0xff]
      %v452 = vld [vmem:[%s273 + $0x82] sm:$0xff]
      %v453 = vld [vmem:[%s273 + $0x8a] sm:$0xff]
      %v454 = vld [vmem:[%s273 + $0x92] sm:$0xff]
      %v455 = vld [vmem:[%s273 + $0x9a] sm:$0xff]
      %v456 = vld [vmem:[%s273 + $0xa2] sm:$0xff]
      %v457 = vld [vmem:[%s273 + $0xaa] sm:$0xff]
      %v458 = vld [vmem:[%s273 + $0xb2] sm:$0xff]
      %v459 = vld [vmem:[%s273 + $0xba] sm:$0xff]
      %v460 = vld [vmem:[%s273 + $0xc2] sm:$0xff]
      %v461 = vld [vmem:[%s273 + $0xca] sm:$0xff]
      %v462 = vld [vmem:[%s273 + $0xd2] sm:$0xff]
      %v463 = vld [vmem:[%s273 + $0xda] sm:$0xff]
      %v464 = vld [vmem:[%s273 + $0xe2] sm:$0xff]
      %v465 = vld [vmem:[%s273 + $0xea] sm:$0xff]
      %v466 = vld [vmem:[%s273 + $0xf2] sm:$0xff]
      %v467 = vld [vmem:[%s273 + $0xfa] sm:$0xff]
      %v468 = vld [vmem:[%s273 + $0x102] sm:$0xff]
      %v469 = vld [vmem:[%s273 + $0x10a] sm:$0xff]
      %v470 = vld [vmem:[%s273 + $0x112] sm:$0xff]
      %v471 = vld [vmem:[%s273 + $0x11a] sm:$0xff]
      %v472 = vld [vmem:[%s273 + $0x122] sm:$0xff]
      %v473 = vld [vmem:[%s273 + $0x12a] sm:$0xff]
      %v474 = vld [vmem:[%s273 + $0x132] sm:$0xff]
      %v475 = vld [vmem:[%s273 + $0x13a] sm:$0xff]
      %v476 = vld [vmem:[%s273 + $0x142] sm:$0xff]
      %v477 = vld [vmem:[%s273 + $0x14a] sm:$0xff]
      %v478 = vld [vmem:[%s273 + $0x152] sm:$0xff]
      %v479 = vld [vmem:[%s273 + $0x15a] sm:$0xff]
      %v480 = vld [vmem:[%s273 + $0x162] sm:$0xff]
      %v481 = vld [vmem:[%s273 + $0x16a] sm:$0xff]
      %v482 = vld [vmem:[%s273 + $0x172] sm:$0xff]
      %v483 = vld [vmem:[%s273 + $0x17a] sm:$0xff]
      %v484 = vld [vmem:[%s273 + $0x180] sm:$0xff]
      %v485 = vld [vmem:[%s273 + $0x188] sm:$0xff]
      %v486 = vld [vmem:[%s273 + $0x190] sm:$0xff]
      %v487 = vld [vmem:[%s273 + $0x181] sm:$0xff]
      %v488 = vld [vmem:[%s273 + $0x189] sm:$0xff]
      %v489 = vld [vmem:[%s273 + $0x191] sm:$0xff]
      %v490 = vld [vmem:[%s273 + $0x182] sm:$0xff]
      %v491 = vld [vmem:[%s273 + $0x18a] sm:$0xff]
      %v492 = vld [vmem:[%s273 + $0x192] sm:$0xff]
      %v493 = vld [vmem:[%s273 + $0x198] sm:$0xff]
      %v494 = vld [vmem:[%s273 + $0x1a0] sm:$0xff]
      %v495 = vld [vmem:[%s273 + $0x1a8] sm:$0xff]
      %v496 = vld [vmem:[%s273 + $0x199] sm:$0xff]
      %v497 = vld [vmem:[%s273 + $0x1a1] sm:$0xff]
      %v498 = vld [vmem:[%s273 + $0x1a9] sm:$0xff]
      %v499 = vld [vmem:[%s273 + $0x19a] sm:$0xff]
      %v500 = vld [vmem:[%s273 + $0x1a2] sm:$0xff]
      %v501 = vld [vmem:[%s273 + $0x1aa] sm:$0xff]
      %550 = vrot.lane.b32.xlu0 %v388, 4
      %v551 = vpop.permute.xlu0 %550
      %552 = vrot.lane.b32.xlu0 %v389, 4
      %v553 = vpop.permute.xlu0 %552
      %554 = vrot.lane.b32.xlu0 %v390, 4
      %v555 = vpop.permute.xlu0 %554
      %556 = vrot.lane.b32.xlu0 %v391, 4
      %v557 = vpop.permute.xlu0 %556
      %558 = vrot.lane.b32.xlu0 %v392, 4
      %v559 = vpop.permute.xlu0 %558
      %560 = vrot.lane.b32.xlu0 %v393, 4
      %v561 = vpop.permute.xlu0 %560
      %562 = vrot.lane.b32.xlu0 %v394, 4
      %v563 = vpop.permute.xlu0 %562
      %564 = vrot.lane.b32.xlu0 %v395, 4
      %v565 = vpop.permute.xlu0 %564
      %566 = vrot.lane.b32.xlu0 %v396, 4
      %v567 = vpop.permute.xlu0 %566
      %568 = vrot.lane.b32.xlu0 %v397, 4
      %v569 = vpop.permute.xlu0 %568
      %570 = vrot.lane.b32.xlu0 %v398, 4
      %v571 = vpop.permute.xlu0 %570
      %572 = vrot.lane.b32.xlu0 %v399, 4
      %v573 = vpop.permute.xlu0 %572
      %574 = vrot.lane.b32.xlu0 %v400, 4
      %v575 = vpop.permute.xlu0 %574
      %576 = vrot.lane.b32.xlu0 %v401, 4
      %v577 = vpop.permute.xlu0 %576
      %578 = vrot.lane.b32.xlu0 %v402, 4
      %v579 = vpop.permute.xlu0 %578
      %580 = vrot.lane.b32.xlu0 %v403, 4
      %v581 = vpop.permute.xlu0 %580
      %582 = vrot.lane.b32.xlu0 %v404, 4
      %v583 = vpop.permute.xlu0 %582
      %584 = vrot.lane.b32.xlu0 %v405, 4
      %v585 = vpop.permute.xlu0 %584
      %586 = vrot.lane.b32.xlu0 %v406, 4
      %v587 = vpop.permute.xlu0 %586
      %588 = vrot.lane.b32.xlu0 %v407, 4
      %v589 = vpop.permute.xlu0 %588
      %590 = vrot.lane.b32.xlu0 %v408, 4
      %v591 = vpop.permute.xlu0 %590
      %592 = vrot.lane.b32.xlu0 %v409, 4
      %v593 = vpop.permute.xlu0 %592
      %594 = vrot.lane.b32.xlu0 %v410, 4
      %v595 = vpop.permute.xlu0 %594
      %596 = vrot.lane.b32.xlu0 %v411, 4
      %v597 = vpop.permute.xlu0 %596
      %598 = vrot.lane.b32.xlu0 %v412, 4
      %v599 = vpop.permute.xlu0 %598
      %600 = vrot.lane.b32.xlu0 %v413, 4
      %v601 = vpop.permute.xlu0 %600
      %602 = vrot.lane.b32.xlu0 %v414, 4
      %v603 = vpop.permute.xlu0 %602
      %604 = vrot.lane.b32.xlu0 %v415, 4
      %v605 = vpop.permute.xlu0 %604
      %606 = vrot.lane.b32.xlu0 %v416, 4
      %v607 = vpop.permute.xlu0 %606
      %608 = vrot.lane.b32.xlu0 %v417, 4
      %v609 = vpop.permute.xlu0 %608
      %610 = vrot.lane.b32.xlu0 %v418, 4
      %v611 = vpop.permute.xlu0 %610
      %612 = vrot.lane.b32.xlu0 %v419, 4
      %v613 = vpop.permute.xlu0 %612
      %614 = vrot.lane.b32.xlu0 %v420, 4
      %v615 = vpop.permute.xlu0 %614
      %616 = vrot.lane.b32.xlu0 %v421, 4
      %v617 = vpop.permute.xlu0 %616
      %618 = vrot.lane.b32.xlu0 %v422, 4
      %v619 = vpop.permute.xlu0 %618
      %620 = vrot.lane.b32.xlu0 %v423, 4
      %v621 = vpop.permute.xlu0 %620
      %622 = vrot.lane.b32.xlu0 %v424, 4
      %v623 = vpop.permute.xlu0 %622
      %624 = vrot.lane.b32.xlu0 %v425, 4
      %v625 = vpop.permute.xlu0 %624
      %626 = vrot.lane.b32.xlu0 %v426, 4
      %v627 = vpop.permute.xlu0 %626
      %628 = vrot.lane.b32.xlu0 %v427, 4
      %v629 = vpop.permute.xlu0 %628
      %630 = vrot.lane.b32.xlu0 %v428, 4
      %v631 = vpop.permute.xlu0 %630
      %632 = vrot.lane.b32.xlu0 %v429, 4
      %v633 = vpop.permute.xlu0 %632
      %634 = vrot.lane.b32.xlu0 %v430, 4
      %v635 = vpop.permute.xlu0 %634
      %636 = vrot.lane.b32.xlu0 %v431, 4
      %v637 = vpop.permute.xlu0 %636
      %638 = vrot.lane.b32.xlu0 %v432, 4
      %v639 = vpop.permute.xlu0 %638
      %640 = vrot.lane.b32.xlu0 %v433, 4
      %v641 = vpop.permute.xlu0 %640
      %642 = vrot.lane.b32.xlu0 %v434, 4
      %v643 = vpop.permute.xlu0 %642
      %644 = vrot.lane.b32.xlu0 %v435, 4
      %v645 = vpop.permute.xlu0 %644
      %742 = vrot.lane.b32.xlu0 %v436, 8
      %v743 = vpop.permute.xlu0 %742
      %744 = vrot.lane.b32.xlu0 %v437, 8
      %v745 = vpop.permute.xlu0 %744
      %746 = vrot.lane.b32.xlu0 %v438, 8
      %v747 = vpop.permute.xlu0 %746
      %748 = vrot.lane.b32.xlu0 %v439, 8
      %v749 = vpop.permute.xlu0 %748
      %750 = vrot.lane.b32.xlu0 %v440, 8
      %v751 = vpop.permute.xlu0 %750
      %752 = vrot.lane.b32.xlu0 %v441, 8
      %v753 = vpop.permute.xlu0 %752
      %754 = vrot.lane.b32.xlu0 %v442, 8
      %v755 = vpop.permute.xlu0 %754
      %756 = vrot.lane.b32.xlu0 %v443, 8
      %v757 = vpop.permute.xlu0 %756
      %758 = vrot.lane.b32.xlu0 %v444, 8
      %v759 = vpop.permute.xlu0 %758
      %760 = vrot.lane.b32.xlu0 %v445, 8
      %v761 = vpop.permute.xlu0 %760
      %762 = vrot.lane.b32.xlu0 %v446, 8
      %v763 = vpop.permute.xlu0 %762
      %764 = vrot.lane.b32.xlu0 %v447, 8
      %v765 = vpop.permute.xlu0 %764
      %766 = vrot.lane.b32.xlu0 %v448, 8
      %v767 = vpop.permute.xlu0 %766
      %768 = vrot.lane.b32.xlu0 %v449, 8
      %v769 = vpop.permute.xlu0 %768
      %770 = vrot.lane.b32.xlu0 %v450, 8
      %v771 = vpop.permute.xlu0 %770
      %772 = vrot.lane.b32.xlu0 %v451, 8
      %v773 = vpop.permute.xlu0 %772
      %774 = vrot.lane.b32.xlu0 %v452, 8
      %v775 = vpop.permute.xlu0 %774
      %776 = vrot.lane.b32.xlu0 %v453, 8
      %v777 = vpop.permute.xlu0 %776
      %778 = vrot.lane.b32.xlu0 %v454, 8
      %v779 = vpop.permute.xlu0 %778
      %780 = vrot.lane.b32.xlu0 %v455, 8
      %v781 = vpop.permute.xlu0 %780
      %782 = vrot.lane.b32.xlu0 %v456, 8
      %v783 = vpop.permute.xlu0 %782
      %784 = vrot.lane.b32.xlu0 %v457, 8
      %v785 = vpop.permute.xlu0 %784
      %786 = vrot.lane.b32.xlu0 %v458, 8
      %v787 = vpop.permute.xlu0 %786
      %788 = vrot.lane.b32.xlu0 %v459, 8
      %v789 = vpop.permute.xlu0 %788
      %790 = vrot.lane.b32.xlu0 %v460, 8
      %v791 = vpop.permute.xlu0 %790
      %792 = vrot.lane.b32.xlu0 %v461, 8
      %v793 = vpop.permute.xlu0 %792
      %794 = vrot.lane.b32.xlu0 %v462, 8
      %v795 = vpop.permute.xlu0 %794
      %796 = vrot.lane.b32.xlu0 %v463, 8
      %v797 = vpop.permute.xlu0 %796
      %798 = vrot.lane.b32.xlu0 %v464, 8
      %v799 = vpop.permute.xlu0 %798
      %800 = vrot.lane.b32.xlu0 %v465, 8
      %v801 = vpop.permute.xlu0 %800
      %802 = vrot.lane.b32.xlu0 %v466, 8
      %v803 = vpop.permute.xlu0 %802
      %804 = vrot.lane.b32.xlu0 %v467, 8
      %v805 = vpop.permute.xlu0 %804
      %806 = vrot.lane.b32.xlu0 %v468, 8
      %v807 = vpop.permute.xlu0 %806
      %808 = vrot.lane.b32.xlu0 %v469, 8
      %v809 = vpop.permute.xlu0 %808
      %810 = vrot.lane.b32.xlu0 %v470, 8
      %v811 = vpop.permute.xlu0 %810
      %812 = vrot.lane.b32.xlu0 %v471, 8
      %v813 = vpop.permute.xlu0 %812
      %814 = vrot.lane.b32.xlu0 %v472, 8
      %v815 = vpop.permute.xlu0 %814
      %816 = vrot.lane.b32.xlu0 %v473, 8
      %v817 = vpop.permute.xlu0 %816
      %818 = vrot.lane.b32.xlu0 %v474, 8
      %v819 = vpop.permute.xlu0 %818
      %820 = vrot.lane.b32.xlu0 %v475, 8
      %v821 = vpop.permute.xlu0 %820
      %822 = vrot.lane.b32.xlu0 %v476, 8
      %v823 = vpop.permute.xlu0 %822
      %824 = vrot.lane.b32.xlu0 %v477, 8
      %v825 = vpop.permute.xlu0 %824
      %826 = vrot.lane.b32.xlu0 %v478, 8
      %v827 = vpop.permute.xlu0 %826
      %828 = vrot.lane.b32.xlu0 %v479, 8
      %v829 = vpop.permute.xlu0 %828
      %830 = vrot.lane.b32.xlu0 %v480, 8
      %v831 = vpop.permute.xlu0 %830
      %832 = vrot.lane.b32.xlu0 %v481, 8
      %v833 = vpop.permute.xlu0 %832
      %834 = vrot.lane.b32.xlu0 %v482, 8
      %v835 = vpop.permute.xlu0 %834
      %836 = vrot.lane.b32.xlu0 %v483, 8
      %v837 = vpop.permute.xlu0 %836
      %934 = vrot.lane.b32.xlu0 %v343, 12
      %v935 = vpop.permute.xlu0 %934
      %936 = vrot.lane.b32.xlu0 %v344, 12
      %v937 = vpop.permute.xlu0 %936
      %938 = vrot.lane.b32.xlu0 %v345, 12
      %v939 = vpop.permute.xlu0 %938
      %940 = vrot.lane.b32.xlu0 %v346, 12
      %v941 = vpop.permute.xlu0 %940
      %942 = vrot.lane.b32.xlu0 %v347, 12
      %v943 = vpop.permute.xlu0 %942
      %944 = vrot.lane.b32.xlu0 %v348, 12
      %v945 = vpop.permute.xlu0 %944
      %946 = vrot.lane.b32.xlu0 %v349, 12
      %v947 = vpop.permute.xlu0 %946
      %948 = vrot.lane.b32.xlu0 %v350, 12
      %v949 = vpop.permute.xlu0 %948
      %950 = vrot.lane.b32.xlu0 %v351, 12
      %v951 = vpop.permute.xlu0 %950
      %952 = vrot.lane.b32.xlu0 %v352, 12
      %v953 = vpop.permute.xlu0 %952
      %954 = vrot.lane.b32.xlu0 %v353, 12
      %v955 = vpop.permute.xlu0 %954
      %956 = vrot.lane.b32.xlu0 %v354, 12
      %v957 = vpop.permute.xlu0 %956
      %958 = vrot.lane.b32.xlu0 %v355, 12
      %v959 = vpop.permute.xlu0 %958
      %960 = vrot.lane.b32.xlu0 %v356, 12
      %v961 = vpop.permute.xlu0 %960
      %962 = vrot.lane.b32.xlu0 %v357, 12
      %v963 = vpop.permute.xlu0 %962
      %964 = vrot.lane.b32.xlu0 %v358, 12
      %v965 = vpop.permute.xlu0 %964
      %966 = vrot.lane.b32.xlu0 %v359, 12
      %v967 = vpop.permute.xlu0 %966
      %968 = vrot.lane.b32.xlu0 %v360, 12
      %v969 = vpop.permute.xlu0 %968
      %970 = vrot.lane.b32.xlu0 %v361, 12
      %v971 = vpop.permute.xlu0 %970
      %972 = vrot.lane.b32.xlu0 %v362, 12
      %v973 = vpop.permute.xlu0 %972
      %974 = vrot.lane.b32.xlu0 %v363, 12
      %v975 = vpop.permute.xlu0 %974
      %976 = vrot.lane.b32.xlu0 %v364, 12
      %v977 = vpop.permute.xlu0 %976
      %978 = vrot.lane.b32.xlu0 %v365, 12
      %v979 = vpop.permute.xlu0 %978
      %980 = vrot.lane.b32.xlu0 %v366, 12
      %v981 = vpop.permute.xlu0 %980
      %982 = vrot.lane.b32.xlu0 %v367, 12
      %v983 = vpop.permute.xlu0 %982
      %984 = vrot.lane.b32.xlu0 %v368, 12
      %v985 = vpop.permute.xlu0 %984
      %986 = vrot.lane.b32.xlu0 %v369, 12
      %v987 = vpop.permute.xlu0 %986
      %988 = vrot.lane.b32.xlu0 %v370, 12
      %v989 = vpop.permute.xlu0 %988
      %990 = vrot.lane.b32.xlu0 %v371, 12
      %v991 = vpop.permute.xlu0 %990
      %992 = vrot.lane.b32.xlu0 %v372, 12
      %v993 = vpop.permute.xlu0 %992
      %994 = vrot.lane.b32.xlu0 %v373, 12
      %v995 = vpop.permute.xlu0 %994
      %996 = vrot.lane.b32.xlu0 %v374, 12
      %v997 = vpop.permute.xlu0 %996
      %998 = vrot.lane.b32.xlu0 %v375, 12
      %v999 = vpop.permute.xlu0 %998
      %1000 = vrot.lane.b32.xlu0 %v376, 12
      %v1001 = vpop.permute.xlu0 %1000
      %1002 = vrot.lane.b32.xlu0 %v377, 12
      %v1003 = vpop.permute.xlu0 %1002
      %1004 = vrot.lane.b32.xlu0 %v378, 12
      %v1005 = vpop.permute.xlu0 %1004
      %1006 = vrot.lane.b32.xlu0 %v379, 12
      %v1007 = vpop.permute.xlu0 %1006
      %1008 = vrot.lane.b32.xlu0 %v380, 12
      %v1009 = vpop.permute.xlu0 %1008
      %1010 = vrot.lane.b32.xlu0 %v381, 12
      %v1011 = vpop.permute.xlu0 %1010
      %1012 = vrot.lane.b32.xlu0 %v382, 12
      %v1013 = vpop.permute.xlu0 %1012
      %1014 = vrot.lane.b32.xlu0 %v383, 12
      %v1015 = vpop.permute.xlu0 %1014
      %1016 = vrot.lane.b32.xlu0 %v384, 12
      %v1017 = vpop.permute.xlu0 %1016
      %1018 = vrot.lane.b32.xlu0 %v385, 12
      %v1019 = vpop.permute.xlu0 %1018
      %1020 = vrot.lane.b32.xlu0 %v386, 12
      %v1021 = vpop.permute.xlu0 %1020
      %1022 = vrot.lane.b32.xlu0 %v387, 12
      %v1023 = vpop.permute.xlu0 %1022
      %1024 = vrot.lane.b32.xlu0 %v484, 12
      %v1025 = vpop.permute.xlu0 %1024
      %1026 = vrot.lane.b32.xlu0 %v485, 12
      %v1027 = vpop.permute.xlu0 %1026
      %1028 = vrot.lane.b32.xlu0 %v486, 12
      %v1029 = vpop.permute.xlu0 %1028
      %1081 = vrot.lane.b32.xlu0 %v391, 16
      %v1082 = vpop.permute.xlu0 %1081
      %1083 = vrot.lane.b32.xlu0 %v392, 16
      %v1084 = vpop.permute.xlu0 %1083
      %1085 = vrot.lane.b32.xlu0 %v393, 16
      %v1086 = vpop.permute.xlu0 %1085
      %1087 = vrot.lane.b32.xlu0 %v394, 16
      %v1088 = vpop.permute.xlu0 %1087
      %1089 = vrot.lane.b32.xlu0 %v395, 16
      %v1090 = vpop.permute.xlu0 %1089
      %1091 = vrot.lane.b32.xlu0 %v396, 16
      %v1092 = vpop.permute.xlu0 %1091
      %1093 = vrot.lane.b32.xlu0 %v397, 16
      %v1094 = vpop.permute.xlu0 %1093
      %1095 = vrot.lane.b32.xlu0 %v398, 16
      %v1096 = vpop.permute.xlu0 %1095
      %1097 = vrot.lane.b32.xlu0 %v399, 16
      %v1098 = vpop.permute.xlu0 %1097
      %1099 = vrot.lane.b32.xlu0 %v400, 16
      %v1100 = vpop.permute.xlu0 %1099
      %1101 = vrot.lane.b32.xlu0 %v401, 16
      %v1102 = vpop.permute.xlu0 %1101
      %1103 = vrot.lane.b32.xlu0 %v402, 16
      %v1104 = vpop.permute.xlu0 %1103
      %1105 = vrot.lane.b32.xlu0 %v403, 16
      %v1106 = vpop.permute.xlu0 %1105
      %1107 = vrot.lane.b32.xlu0 %v404, 16
      %v1108 = vpop.permute.xlu0 %1107
      %1109 = vrot.lane.b32.xlu0 %v405, 16
      %v1110 = vpop.permute.xlu0 %1109
      %1111 = vrot.lane.b32.xlu0 %v406, 16
      %v1112 = vpop.permute.xlu0 %1111
      %1113 = vrot.lane.b32.xlu0 %v407, 16
      %v1114 = vpop.permute.xlu0 %1113
      %1115 = vrot.lane.b32.xlu0 %v408, 16
      %v1116 = vpop.permute.xlu0 %1115
      %1117 = vrot.lane.b32.xlu0 %v409, 16
      %v1118 = vpop.permute.xlu0 %1117
      %1119 = vrot.lane.b32.xlu0 %v410, 16
      %v1120 = vpop.permute.xlu0 %1119
      %1121 = vrot.lane.b32.xlu0 %v411, 16
      %v1122 = vpop.permute.xlu0 %1121
      %1123 = vrot.lane.b32.xlu0 %v412, 16
      %v1124 = vpop.permute.xlu0 %1123
      %1125 = vrot.lane.b32.xlu0 %v413, 16
      %v1126 = vpop.permute.xlu0 %1125
      %1127 = vrot.lane.b32.xlu0 %v414, 16
      %v1128 = vpop.permute.xlu0 %1127
      %1129 = vrot.lane.b32.xlu0 %v415, 16
      %v1130 = vpop.permute.xlu0 %1129
      %1131 = vrot.lane.b32.xlu0 %v416, 16
      %v1132 = vpop.permute.xlu0 %1131
      %1133 = vrot.lane.b32.xlu0 %v417, 16
      %v1134 = vpop.permute.xlu0 %1133
      %1135 = vrot.lane.b32.xlu0 %v418, 16
      %v1136 = vpop.permute.xlu0 %1135
      %1137 = vrot.lane.b32.xlu0 %v419, 16
      %v1138 = vpop.permute.xlu0 %1137
      %1139 = vrot.lane.b32.xlu0 %v420, 16
      %v1140 = vpop.permute.xlu0 %1139
      %1141 = vrot.lane.b32.xlu0 %v421, 16
      %v1142 = vpop.permute.xlu0 %1141
      %1143 = vrot.lane.b32.xlu0 %v422, 16
      %v1144 = vpop.permute.xlu0 %1143
      %1145 = vrot.lane.b32.xlu0 %v423, 16
      %v1146 = vpop.permute.xlu0 %1145
      %1147 = vrot.lane.b32.xlu0 %v424, 16
      %v1148 = vpop.permute.xlu0 %1147
      %1149 = vrot.lane.b32.xlu0 %v425, 16
      %v1150 = vpop.permute.xlu0 %1149
      %1151 = vrot.lane.b32.xlu0 %v426, 16
      %v1152 = vpop.permute.xlu0 %1151
      %1153 = vrot.lane.b32.xlu0 %v427, 16
      %v1154 = vpop.permute.xlu0 %1153
      %1155 = vrot.lane.b32.xlu0 %v428, 16
      %v1156 = vpop.permute.xlu0 %1155
      %1157 = vrot.lane.b32.xlu0 %v429, 16
      %v1158 = vpop.permute.xlu0 %1157
      %1159 = vrot.lane.b32.xlu0 %v430, 16
      %v1160 = vpop.permute.xlu0 %1159
      %1161 = vrot.lane.b32.xlu0 %v431, 16
      %v1162 = vpop.permute.xlu0 %1161
      %1163 = vrot.lane.b32.xlu0 %v432, 16
      %v1164 = vpop.permute.xlu0 %1163
      %1165 = vrot.lane.b32.xlu0 %v433, 16
      %v1166 = vpop.permute.xlu0 %1165
      %1167 = vrot.lane.b32.xlu0 %v434, 16
      %v1168 = vpop.permute.xlu0 %1167
      %1169 = vrot.lane.b32.xlu0 %v435, 16
      %v1170 = vpop.permute.xlu0 %1169
      %1171 = vrot.lane.b32.xlu0 %v487, 16
      %v1172 = vpop.permute.xlu0 %1171
      %1173 = vrot.lane.b32.xlu0 %v488, 16
      %v1174 = vpop.permute.xlu0 %1173
      %1175 = vrot.lane.b32.xlu0 %v489, 16
      %v1176 = vpop.permute.xlu0 %1175
      %1228 = vrot.lane.b32.xlu0 %v439, 20
      %v1229 = vpop.permute.xlu0 %1228
      %1230 = vrot.lane.b32.xlu0 %v440, 20
      %v1231 = vpop.permute.xlu0 %1230
      %1232 = vrot.lane.b32.xlu0 %v441, 20
      %v1233 = vpop.permute.xlu0 %1232
      %1234 = vrot.lane.b32.xlu0 %v442, 20
      %v1235 = vpop.permute.xlu0 %1234
      %1236 = vrot.lane.b32.xlu0 %v443, 20
      %v1237 = vpop.permute.xlu0 %1236
      %1238 = vrot.lane.b32.xlu0 %v444, 20
      %v1239 = vpop.permute.xlu0 %1238
      %1240 = vrot.lane.b32.xlu0 %v445, 20
      %v1241 = vpop.permute.xlu0 %1240
      %1242 = vrot.lane.b32.xlu0 %v446, 20
      %v1243 = vpop.permute.xlu0 %1242
      %1244 = vrot.lane.b32.xlu0 %v447, 20
      %v1245 = vpop.permute.xlu0 %1244
      %1246 = vrot.lane.b32.xlu0 %v448, 20
      %v1247 = vpop.permute.xlu0 %1246
      %1248 = vrot.lane.b32.xlu0 %v449, 20
      %v1249 = vpop.permute.xlu0 %1248
      %1250 = vrot.lane.b32.xlu0 %v450, 20
      %v1251 = vpop.permute.xlu0 %1250
      %1252 = vrot.lane.b32.xlu0 %v451, 20
      %v1253 = vpop.permute.xlu0 %1252
      %1254 = vrot.lane.b32.xlu0 %v452, 20
      %v1255 = vpop.permute.xlu0 %1254
      %1256 = vrot.lane.b32.xlu0 %v453, 20
      %v1257 = vpop.permute.xlu0 %1256
      %1258 = vrot.lane.b32.xlu0 %v454, 20
      %v1259 = vpop.permute.xlu0 %1258
      %1260 = vrot.lane.b32.xlu0 %v455, 20
      %v1261 = vpop.permute.xlu0 %1260
      %1262 = vrot.lane.b32.xlu0 %v456, 20
      %v1263 = vpop.permute.xlu0 %1262
      %1264 = vrot.lane.b32.xlu0 %v457, 20
      %v1265 = vpop.permute.xlu0 %1264
      %1266 = vrot.lane.b32.xlu0 %v458, 20
      %v1267 = vpop.permute.xlu0 %1266
      %1268 = vrot.lane.b32.xlu0 %v459, 20
      %v1269 = vpop.permute.xlu0 %1268
      %1270 = vrot.lane.b32.xlu0 %v460, 20
      %v1271 = vpop.permute.xlu0 %1270
      %1272 = vrot.lane.b32.xlu0 %v461, 20
      %v1273 = vpop.permute.xlu0 %1272
      %1274 = vrot.lane.b32.xlu0 %v462, 20
      %v1275 = vpop.permute.xlu0 %1274
      %1276 = vrot.lane.b32.xlu0 %v463, 20
      %v1277 = vpop.permute.xlu0 %1276
      %1278 = vrot.lane.b32.xlu0 %v464, 20
      %v1279 = vpop.permute.xlu0 %1278
      %1280 = vrot.lane.b32.xlu0 %v465, 20
      %v1281 = vpop.permute.xlu0 %1280
      %1282 = vrot.lane.b32.xlu0 %v466, 20
      %v1283 = vpop.permute.xlu0 %1282
      %1284 = vrot.lane.b32.xlu0 %v467, 20
      %v1285 = vpop.permute.xlu0 %1284
      %1286 = vrot.lane.b32.xlu0 %v468, 20
      %v1287 = vpop.permute.xlu0 %1286
      %1288 = vrot.lane.b32.xlu0 %v469, 20
      %v1289 = vpop.permute.xlu0 %1288
      %1290 = vrot.lane.b32.xlu0 %v470, 20
      %v1291 = vpop.permute.xlu0 %1290
      %1292 = vrot.lane.b32.xlu0 %v471, 20
      %v1293 = vpop.permute.xlu0 %1292
      %1294 = vrot.lane.b32.xlu0 %v472, 20
      %v1295 = vpop.permute.xlu0 %1294
      %1296 = vrot.lane.b32.xlu0 %v473, 20
      %v1297 = vpop.permute.xlu0 %1296
      %1298 = vrot.lane.b32.xlu0 %v474, 20
      %v1299 = vpop.permute.xlu0 %1298
      %1300 = vrot.lane.b32.xlu0 %v475, 20
      %v1301 = vpop.permute.xlu0 %1300
      %1302 = vrot.lane.b32.xlu0 %v476, 20
      %v1303 = vpop.permute.xlu0 %1302
      %1304 = vrot.lane.b32.xlu0 %v477, 20
      %v1305 = vpop.permute.xlu0 %1304
      %1306 = vrot.lane.b32.xlu0 %v478, 20
      %v1307 = vpop.permute.xlu0 %1306
      %1308 = vrot.lane.b32.xlu0 %v479, 20
      %v1309 = vpop.permute.xlu0 %1308
      %1310 = vrot.lane.b32.xlu0 %v480, 20
      %v1311 = vpop.permute.xlu0 %1310
      %1312 = vrot.lane.b32.xlu0 %v481, 20
      %v1313 = vpop.permute.xlu0 %1312
      %1314 = vrot.lane.b32.xlu0 %v482, 20
      %v1315 = vpop.permute.xlu0 %1314
      %1316 = vrot.lane.b32.xlu0 %v483, 20
      %v1317 = vpop.permute.xlu0 %1316
      %1318 = vrot.lane.b32.xlu0 %v490, 20
      %v1319 = vpop.permute.xlu0 %1318
      %1320 = vrot.lane.b32.xlu0 %v491, 20
      %v1321 = vpop.permute.xlu0 %1320
      %1322 = vrot.lane.b32.xlu0 %v492, 20
      %v1323 = vpop.permute.xlu0 %1322
      %1375 = vrot.lane.b32.xlu0 %v346, 24
      %v1376 = vpop.permute.xlu0 %1375
      %1377 = vrot.lane.b32.xlu0 %v347, 24
      %v1378 = vpop.permute.xlu0 %1377
      %1379 = vrot.lane.b32.xlu0 %v348, 24
      %v1380 = vpop.permute.xlu0 %1379
      %1381 = vrot.lane.b32.xlu0 %v349, 24
      %v1382 = vpop.permute.xlu0 %1381
      %1383 = vrot.lane.b32.xlu0 %v350, 24
      %v1384 = vpop.permute.xlu0 %1383
      %1385 = vrot.lane.b32.xlu0 %v351, 24
      %v1386 = vpop.permute.xlu0 %1385
      %1387 = vrot.lane.b32.xlu0 %v352, 24
      %v1388 = vpop.permute.xlu0 %1387
      %1389 = vrot.lane.b32.xlu0 %v353, 24
      %v1390 = vpop.permute.xlu0 %1389
      %1391 = vrot.lane.b32.xlu0 %v354, 24
      %v1392 = vpop.permute.xlu0 %1391
      %1393 = vrot.lane.b32.xlu0 %v355, 24
      %v1394 = vpop.permute.xlu0 %1393
      %1395 = vrot.lane.b32.xlu0 %v356, 24
      %v1396 = vpop.permute.xlu0 %1395
      %1397 = vrot.lane.b32.xlu0 %v357, 24
      %v1398 = vpop.permute.xlu0 %1397
      %1399 = vrot.lane.b32.xlu0 %v358, 24
      %v1400 = vpop.permute.xlu0 %1399
      %1401 = vrot.lane.b32.xlu0 %v359, 24
      %v1402 = vpop.permute.xlu0 %1401
      %1403 = vrot.lane.b32.xlu0 %v360, 24
      %v1404 = vpop.permute.xlu0 %1403
      %1405 = vrot.lane.b32.xlu0 %v361, 24
      %v1406 = vpop.permute.xlu0 %1405
      %1407 = vrot.lane.b32.xlu0 %v362, 24
      %v1408 = vpop.permute.xlu0 %1407
      %1409 = vrot.lane.b32.xlu0 %v363, 24
      %v1410 = vpop.permute.xlu0 %1409
      %1411 = vrot.lane.b32.xlu0 %v364, 24
      %v1412 = vpop.permute.xlu0 %1411
      %1413 = vrot.lane.b32.xlu0 %v365, 24
      %v1414 = vpop.permute.xlu0 %1413
      %1415 = vrot.lane.b32.xlu0 %v366, 24
      %v1416 = vpop.permute.xlu0 %1415
      %1417 = vrot.lane.b32.xlu0 %v367, 24
      %v1418 = vpop.permute.xlu0 %1417
      %1419 = vrot.lane.b32.xlu0 %v368, 24
      %v1420 = vpop.permute.xlu0 %1419
      %1421 = vrot.lane.b32.xlu0 %v369, 24
      %v1422 = vpop.permute.xlu0 %1421
      %1423 = vrot.lane.b32.xlu0 %v370, 24
      %v1424 = vpop.permute.xlu0 %1423
      %1425 = vrot.lane.b32.xlu0 %v371, 24
      %v1426 = vpop.permute.xlu0 %1425
      %1427 = vrot.lane.b32.xlu0 %v372, 24
      %v1428 = vpop.permute.xlu0 %1427
      %1429 = vrot.lane.b32.xlu0 %v373, 24
      %v1430 = vpop.permute.xlu0 %1429
      %1431 = vrot.lane.b32.xlu0 %v374, 24
      %v1432 = vpop.permute.xlu0 %1431
      %1433 = vrot.lane.b32.xlu0 %v375, 24
      %v1434 = vpop.permute.xlu0 %1433
      %1435 = vrot.lane.b32.xlu0 %v376, 24
      %v1436 = vpop.permute.xlu0 %1435
      %1437 = vrot.lane.b32.xlu0 %v377, 24
      %v1438 = vpop.permute.xlu0 %1437
      %1439 = vrot.lane.b32.xlu0 %v378, 24
      %v1440 = vpop.permute.xlu0 %1439
      %1441 = vrot.lane.b32.xlu0 %v379, 24
      %v1442 = vpop.permute.xlu0 %1441
      %1443 = vrot.lane.b32.xlu0 %v380, 24
      %v1444 = vpop.permute.xlu0 %1443
      %1445 = vrot.lane.b32.xlu0 %v381, 24
      %v1446 = vpop.permute.xlu0 %1445
      %1447 = vrot.lane.b32.xlu0 %v382, 24
      %v1448 = vpop.permute.xlu0 %1447
      %1449 = vrot.lane.b32.xlu0 %v383, 24
      %v1450 = vpop.permute.xlu0 %1449
      %1451 = vrot.lane.b32.xlu0 %v384, 24
      %v1452 = vpop.permute.xlu0 %1451
      %1453 = vrot.lane.b32.xlu0 %v385, 24
      %v1454 = vpop.permute.xlu0 %1453
      %1455 = vrot.lane.b32.xlu0 %v386, 24
      %v1456 = vpop.permute.xlu0 %1455
      %1457 = vrot.lane.b32.xlu0 %v387, 24
      %v1458 = vpop.permute.xlu0 %1457
      %1459 = vrot.lane.b32.xlu0 %v484, 24
      %v1460 = vpop.permute.xlu0 %1459
      %1461 = vrot.lane.b32.xlu0 %v485, 24
      %v1462 = vpop.permute.xlu0 %1461
      %1463 = vrot.lane.b32.xlu0 %v486, 24
      %v1464 = vpop.permute.xlu0 %1463
      %1465 = vrot.lane.b32.xlu0 %v493, 24
      %v1466 = vpop.permute.xlu0 %1465
      %1467 = vrot.lane.b32.xlu0 %v494, 24
      %v1468 = vpop.permute.xlu0 %1467
      %1469 = vrot.lane.b32.xlu0 %v495, 24
      %v1470 = vpop.permute.xlu0 %1469
      %1522 = vrot.lane.b32.xlu0 %v394, 28
      %v1523 = vpop.permute.xlu0 %1522
      %1524 = vrot.lane.b32.xlu0 %v395, 28
      %v1525 = vpop.permute.xlu0 %1524
      %1526 = vrot.lane.b32.xlu0 %v396, 28
      %v1527 = vpop.permute.xlu0 %1526
      %1528 = vrot.lane.b32.xlu0 %v397, 28
      %v1529 = vpop.permute.xlu0 %1528
      %1530 = vrot.lane.b32.xlu0 %v398, 28
      %v1531 = vpop.permute.xlu0 %1530
      %1532 = vrot.lane.b32.xlu0 %v399, 28
      %v1533 = vpop.permute.xlu0 %1532
      %1534 = vrot.lane.b32.xlu0 %v400, 28
      %v1535 = vpop.permute.xlu0 %1534
      %1536 = vrot.lane.b32.xlu0 %v401, 28
      %v1537 = vpop.permute.xlu0 %1536
      %1538 = vrot.lane.b32.xlu0 %v402, 28
      %v1539 = vpop.permute.xlu0 %1538
      %1540 = vrot.lane.b32.xlu0 %v403, 28
      %v1541 = vpop.permute.xlu0 %1540
      %1542 = vrot.lane.b32.xlu0 %v404, 28
      %v1543 = vpop.permute.xlu0 %1542
      %1544 = vrot.lane.b32.xlu0 %v405, 28
      %v1545 = vpop.permute.xlu0 %1544
      %1546 = vrot.lane.b32.xlu0 %v406, 28
      %v1547 = vpop.permute.xlu0 %1546
      %1548 = vrot.lane.b32.xlu0 %v407, 28
      %v1549 = vpop.permute.xlu0 %1548
      %1550 = vrot.lane.b32.xlu0 %v408, 28
      %v1551 = vpop.permute.xlu0 %1550
      %1552 = vrot.lane.b32.xlu0 %v409, 28
      %v1553 = vpop.permute.xlu0 %1552
      %1554 = vrot.lane.b32.xlu0 %v410, 28
      %v1555 = vpop.permute.xlu0 %1554
      %1556 = vrot.lane.b32.xlu0 %v411, 28
      %v1557 = vpop.permute.xlu0 %1556
      %1558 = vrot.lane.b32.xlu0 %v412, 28
      %v1559 = vpop.permute.xlu0 %1558
      %1560 = vrot.lane.b32.xlu0 %v413, 28
      %v1561 = vpop.permute.xlu0 %1560
      %1562 = vrot.lane.b32.xlu0 %v414, 28
      %v1563 = vpop.permute.xlu0 %1562
      %1564 = vrot.lane.b32.xlu0 %v415, 28
      %v1565 = vpop.permute.xlu0 %1564
      %1566 = vrot.lane.b32.xlu0 %v416, 28
      %v1567 = vpop.permute.xlu0 %1566
      %1568 = vrot.lane.b32.xlu0 %v417, 28
      %v1569 = vpop.permute.xlu0 %1568
      %1570 = vrot.lane.b32.xlu0 %v418, 28
      %v1571 = vpop.permute.xlu0 %1570
      %1572 = vrot.lane.b32.xlu0 %v419, 28
      %v1573 = vpop.permute.xlu0 %1572
      %1574 = vrot.lane.b32.xlu0 %v420, 28
      %v1575 = vpop.permute.xlu0 %1574
      %1576 = vrot.lane.b32.xlu0 %v421, 28
      %v1577 = vpop.permute.xlu0 %1576
      %1578 = vrot.lane.b32.xlu0 %v422, 28
      %v1579 = vpop.permute.xlu0 %1578
      %1580 = vrot.lane.b32.xlu0 %v423, 28
      %v1581 = vpop.permute.xlu0 %1580
      %1582 = vrot.lane.b32.xlu0 %v424, 28
      %v1583 = vpop.permute.xlu0 %1582
      %1584 = vrot.lane.b32.xlu0 %v425, 28
      %v1585 = vpop.permute.xlu0 %1584
      %1586 = vrot.lane.b32.xlu0 %v426, 28
      %v1587 = vpop.permute.xlu0 %1586
      %1588 = vrot.lane.b32.xlu0 %v427, 28
      %v1589 = vpop.permute.xlu0 %1588
      %1590 = vrot.lane.b32.xlu0 %v428, 28
      %v1591 = vpop.permute.xlu0 %1590
      %1592 = vrot.lane.b32.xlu0 %v429, 28
      %v1593 = vpop.permute.xlu0 %1592
      %1594 = vrot.lane.b32.xlu0 %v430, 28
      %v1595 = vpop.permute.xlu0 %1594
      %1596 = vrot.lane.b32.xlu0 %v431, 28
      %v1597 = vpop.permute.xlu0 %1596
      %1598 = vrot.lane.b32.xlu0 %v432, 28
      %v1599 = vpop.permute.xlu0 %1598
      %1600 = vrot.lane.b32.xlu0 %v433, 28
      %v1601 = vpop.permute.xlu0 %1600
      %1602 = vrot.lane.b32.xlu0 %v434, 28
      %v1603 = vpop.permute.xlu0 %1602
      %1604 = vrot.lane.b32.xlu0 %v435, 28
      %v1605 = vpop.permute.xlu0 %1604
      %1606 = vrot.lane.b32.xlu0 %v487, 28
      %v1607 = vpop.permute.xlu0 %1606
      %1608 = vrot.lane.b32.xlu0 %v488, 28
      %v1609 = vpop.permute.xlu0 %1608
      %1610 = vrot.lane.b32.xlu0 %v489, 28
      %v1611 = vpop.permute.xlu0 %1610
      %1612 = vrot.lane.b32.xlu0 %v496, 28
      %v1613 = vpop.permute.xlu0 %1612
      %1614 = vrot.lane.b32.xlu0 %v497, 28
      %v1615 = vpop.permute.xlu0 %1614
      %1616 = vrot.lane.b32.xlu0 %v498, 28
      %v1617 = vpop.permute.xlu0 %1616
      %1669 = vrot.lane.b32.xlu0 %v442, 32
      %v1670 = vpop.permute.xlu0 %1669
      %1671 = vrot.lane.b32.xlu0 %v443, 32
      %v1672 = vpop.permute.xlu0 %1671
      %1673 = vrot.lane.b32.xlu0 %v444, 32
      %v1674 = vpop.permute.xlu0 %1673
      %1675 = vrot.lane.b32.xlu0 %v445, 32
      %v1676 = vpop.permute.xlu0 %1675
      %1677 = vrot.lane.b32.xlu0 %v446, 32
      %v1678 = vpop.permute.xlu0 %1677
      %1679 = vrot.lane.b32.xlu0 %v447, 32
      %v1680 = vpop.permute.xlu0 %1679
      %1681 = vrot.lane.b32.xlu0 %v448, 32
      %v1682 = vpop.permute.xlu0 %1681
      %1683 = vrot.lane.b32.xlu0 %v449, 32
      %v1684 = vpop.permute.xlu0 %1683
      %1685 = vrot.lane.b32.xlu0 %v450, 32
      %v1686 = vpop.permute.xlu0 %1685
      %1687 = vrot.lane.b32.xlu0 %v451, 32
      %v1688 = vpop.permute.xlu0 %1687
      %1689 = vrot.lane.b32.xlu0 %v452, 32
      %v1690 = vpop.permute.xlu0 %1689
      %1691 = vrot.lane.b32.xlu0 %v453, 32
      %v1692 = vpop.permute.xlu0 %1691
      %1693 = vrot.lane.b32.xlu0 %v454, 32
      %v1694 = vpop.permute.xlu0 %1693
      %1695 = vrot.lane.b32.xlu0 %v455, 32
      %v1696 = vpop.permute.xlu0 %1695
      %1697 = vrot.lane.b32.xlu0 %v456, 32
      %v1698 = vpop.permute.xlu0 %1697
      %1699 = vrot.lane.b32.xlu0 %v457, 32
      %v1700 = vpop.permute.xlu0 %1699
      %1701 = vrot.lane.b32.xlu0 %v458, 32
      %v1702 = vpop.permute.xlu0 %1701
      %1703 = vrot.lane.b32.xlu0 %v459, 32
      %v1704 = vpop.permute.xlu0 %1703
      %1705 = vrot.lane.b32.xlu0 %v460, 32
      %v1706 = vpop.permute.xlu0 %1705
      %1707 = vrot.lane.b32.xlu0 %v461, 32
      %v1708 = vpop.permute.xlu0 %1707
      %1709 = vrot.lane.b32.xlu0 %v462, 32
      %v1710 = vpop.permute.xlu0 %1709
      %1711 = vrot.lane.b32.xlu0 %v463, 32
      %v1712 = vpop.permute.xlu0 %1711
      %1713 = vrot.lane.b32.xlu0 %v464, 32
      %v1714 = vpop.permute.xlu0 %1713
      %1715 = vrot.lane.b32.xlu0 %v465, 32
      %v1716 = vpop.permute.xlu0 %1715
      %1717 = vrot.lane.b32.xlu0 %v466, 32
      %v1718 = vpop.permute.xlu0 %1717
      %1719 = vrot.lane.b32.xlu0 %v467, 32
      %v1720 = vpop.permute.xlu0 %1719
      %1721 = vrot.lane.b32.xlu0 %v468, 32
      %v1722 = vpop.permute.xlu0 %1721
      %1723 = vrot.lane.b32.xlu0 %v469, 32
      %v1724 = vpop.permute.xlu0 %1723
      %1725 = vrot.lane.b32.xlu0 %v470, 32
      %v1726 = vpop.permute.xlu0 %1725
      %1727 = vrot.lane.b32.xlu0 %v471, 32
      %v1728 = vpop.permute.xlu0 %1727
      %1729 = vrot.lane.b32.xlu0 %v472, 32
      %v1730 = vpop.permute.xlu0 %1729
      %1731 = vrot.lane.b32.xlu0 %v473, 32
      %v1732 = vpop.permute.xlu0 %1731
      %1733 = vrot.lane.b32.xlu0 %v474, 32
      %v1734 = vpop.permute.xlu0 %1733
      %1735 = vrot.lane.b32.xlu0 %v475, 32
      %v1736 = vpop.permute.xlu0 %1735
      %1737 = vrot.lane.b32.xlu0 %v476, 32
      %v1738 = vpop.permute.xlu0 %1737
      %1739 = vrot.lane.b32.xlu0 %v477, 32
      %v1740 = vpop.permute.xlu0 %1739
      %1741 = vrot.lane.b32.xlu0 %v478, 32
      %v1742 = vpop.permute.xlu0 %1741
      %1743 = vrot.lane.b32.xlu0 %v479, 32
      %v1744 = vpop.permute.xlu0 %1743
      %1745 = vrot.lane.b32.xlu0 %v480, 32
      %v1746 = vpop.permute.xlu0 %1745
      %1747 = vrot.lane.b32.xlu0 %v481, 32
      %v1748 = vpop.permute.xlu0 %1747
      %1749 = vrot.lane.b32.xlu0 %v482, 32
      %v1750 = vpop.permute.xlu0 %1749
      %1751 = vrot.lane.b32.xlu0 %v483, 32
      %v1752 = vpop.permute.xlu0 %1751
      %1753 = vrot.lane.b32.xlu0 %v490, 32
      %v1754 = vpop.permute.xlu0 %1753
      %1755 = vrot.lane.b32.xlu0 %v491, 32
      %v1756 = vpop.permute.xlu0 %1755
      %1757 = vrot.lane.b32.xlu0 %v492, 32
      %v1758 = vpop.permute.xlu0 %1757
      %1759 = vrot.lane.b32.xlu0 %v499, 32
      %v1760 = vpop.permute.xlu0 %1759
      %1761 = vrot.lane.b32.xlu0 %v500, 32
      %v1762 = vpop.permute.xlu0 %1761
      %1763 = vrot.lane.b32.xlu0 %v501, 32
      %v1764 = vpop.permute.xlu0 %1763
      %vm1813 = vcmask 31744
      %v1814 = vsel %vm1813, %v340, %v551
      %v1815 = vsel %vm1813, %v341, %v553
      %v1816 = vsel %vm1813, %v342, %v555
      %v1817 = vsel %vm1813, %v343, %v557
      %v1818 = vsel %vm1813, %v344, %v559
      %v1819 = vsel %vm1813, %v345, %v561
      %v1820 = vsel %vm1813, %v346, %v563
      %v1821 = vsel %vm1813, %v347, %v565
      %v1822 = vsel %vm1813, %v348, %v567
      %v1823 = vsel %vm1813, %v349, %v569
      %v1824 = vsel %vm1813, %v350, %v571
      %v1825 = vsel %vm1813, %v351, %v573
      %v1826 = vsel %vm1813, %v352, %v575
      %v1827 = vsel %vm1813, %v353, %v577
      %v1828 = vsel %vm1813, %v354, %v579
      %v1829 = vsel %vm1813, %v355, %v581
      %v1830 = vsel %vm1813, %v356, %v583
      %v1831 = vsel %vm1813, %v357, %v585
      %v1832 = vsel %vm1813, %v358, %v587
      %v1833 = vsel %vm1813, %v359, %v589
      %v1834 = vsel %vm1813, %v360, %v591
      %v1835 = vsel %vm1813, %v361, %v593
      %v1836 = vsel %vm1813, %v362, %v595
      %v1837 = vsel %vm1813, %v363, %v597
      %v1838 = vsel %vm1813, %v364, %v599
      %v1839 = vsel %vm1813, %v365, %v601
      %v1840 = vsel %vm1813, %v366, %v603
      %v1841 = vsel %vm1813, %v367, %v605
      %v1842 = vsel %vm1813, %v368, %v607
      %v1843 = vsel %vm1813, %v369, %v609
      %v1844 = vsel %vm1813, %v370, %v611
      %v1845 = vsel %vm1813, %v371, %v613
      %v1846 = vsel %vm1813, %v372, %v615
      %v1847 = vsel %vm1813, %v373, %v617
      %v1848 = vsel %vm1813, %v374, %v619
      %v1849 = vsel %vm1813, %v375, %v621
      %v1850 = vsel %vm1813, %v376, %v623
      %v1851 = vsel %vm1813, %v377, %v625
      %v1852 = vsel %vm1813, %v378, %v627
      %v1853 = vsel %vm1813, %v379, %v629
      %v1854 = vsel %vm1813, %v380, %v631
      %v1855 = vsel %vm1813, %v381, %v633
      %v1856 = vsel %vm1813, %v382, %v635
      %v1857 = vsel %vm1813, %v383, %v637
      %v1858 = vsel %vm1813, %v384, %v639
      %v1859 = vsel %vm1813, %v385, %v641
      %v1860 = vsel %vm1813, %v386, %v643
      %v1861 = vsel %vm1813, %v387, %v645
      %v1862 = vsel %vm279, %v1814, %v743
      %v1863 = vsel %vm279, %v1815, %v745
      %v1864 = vsel %vm279, %v1816, %v747
      %v1865 = vsel %vm279, %v1817, %v749
      %v1866 = vsel %vm279, %v1818, %v751
      %v1867 = vsel %vm279, %v1819, %v753
      %v1868 = vsel %vm279, %v1820, %v755
      %v1869 = vsel %vm279, %v1821, %v757
      %v1870 = vsel %vm279, %v1822, %v759
      %v1871 = vsel %vm279, %v1823, %v761
      %v1872 = vsel %vm279, %v1824, %v763
      %v1873 = vsel %vm279, %v1825, %v765
      %v1874 = vsel %vm279, %v1826, %v767
      %v1875 = vsel %vm279, %v1827, %v769
      %v1876 = vsel %vm279, %v1828, %v771
      %v1877 = vsel %vm279, %v1829, %v773
      %v1878 = vsel %vm279, %v1830, %v775
      %v1879 = vsel %vm279, %v1831, %v777
      %v1880 = vsel %vm279, %v1832, %v779
      %v1881 = vsel %vm279, %v1833, %v781
      %v1882 = vsel %vm279, %v1834, %v783
      %v1883 = vsel %vm279, %v1835, %v785
      %v1884 = vsel %vm279, %v1836, %v787
      %v1885 = vsel %vm279, %v1837, %v789
      %v1886 = vsel %vm279, %v1838, %v791
      %v1887 = vsel %vm279, %v1839, %v793
      %v1888 = vsel %vm279, %v1840, %v795
      %v1889 = vsel %vm279, %v1841, %v797
      %v1890 = vsel %vm279, %v1842, %v799
      %v1891 = vsel %vm279, %v1843, %v801
      %v1892 = vsel %vm279, %v1844, %v803
      %v1893 = vsel %vm279, %v1845, %v805
      %v1894 = vsel %vm279, %v1846, %v807
      %v1895 = vsel %vm279, %v1847, %v809
      %v1896 = vsel %vm279, %v1848, %v811
      %v1897 = vsel %vm279, %v1849, %v813
      %v1898 = vsel %vm279, %v1850, %v815
      %v1899 = vsel %vm279, %v1851, %v817
      %v1900 = vsel %vm279, %v1852, %v819
      %v1901 = vsel %vm279, %v1853, %v821
      %v1902 = vsel %vm279, %v1854, %v823
      %v1903 = vsel %vm279, %v1855, %v825
      %v1904 = vsel %vm279, %v1856, %v827
      %v1905 = vsel %vm279, %v1857, %v829
      %v1906 = vsel %vm279, %v1858, %v831
      %v1907 = vsel %vm279, %v1859, %v833
      %v1908 = vsel %vm279, %v1860, %v835
      %v1909 = vsel %vm279, %v1861, %v837
      %vm1910 = vcmask 97280
      %v1911 = vsel %vm1910, %v1862, %v935
      %v1912 = vsel %vm1910, %v1863, %v937
      %v1913 = vsel %vm1910, %v1864, %v939
      %v1914 = vsel %vm1910, %v1865, %v941
      %v1915 = vsel %vm1910, %v1866, %v943
      %v1916 = vsel %vm1910, %v1867, %v945
      %v1917 = vsel %vm1910, %v1868, %v947
      %v1918 = vsel %vm1910, %v1869, %v949
      %v1919 = vsel %vm1910, %v1870, %v951
      %v1920 = vsel %vm1910, %v1871, %v953
      %v1921 = vsel %vm1910, %v1872, %v955
      %v1922 = vsel %vm1910, %v1873, %v957
      %v1923 = vsel %vm1910, %v1874, %v959
      %v1924 = vsel %vm1910, %v1875, %v961
      %v1925 = vsel %vm1910, %v1876, %v963
      %v1926 = vsel %vm1910, %v1877, %v965
      %v1927 = vsel %vm1910, %v1878, %v967
      %v1928 = vsel %vm1910, %v1879, %v969
      %v1929 = vsel %vm1910, %v1880, %v971
      %v1930 = vsel %vm1910, %v1881, %v973
      %v1931 = vsel %vm1910, %v1882, %v975
      %v1932 = vsel %vm1910, %v1883, %v977
      %v1933 = vsel %vm1910, %v1884, %v979
      %v1934 = vsel %vm1910, %v1885, %v981
      %v1935 = vsel %vm1910, %v1886, %v983
      %v1936 = vsel %vm1910, %v1887, %v985
      %v1937 = vsel %vm1910, %v1888, %v987
      %v1938 = vsel %vm1910, %v1889, %v989
      %v1939 = vsel %vm1910, %v1890, %v991
      %v1940 = vsel %vm1910, %v1891, %v993
      %v1941 = vsel %vm1910, %v1892, %v995
      %v1942 = vsel %vm1910, %v1893, %v997
      %v1943 = vsel %vm1910, %v1894, %v999
      %v1944 = vsel %vm1910, %v1895, %v1001
      %v1945 = vsel %vm1910, %v1896, %v1003
      %v1946 = vsel %vm1910, %v1897, %v1005
      %v1947 = vsel %vm1910, %v1898, %v1007
      %v1948 = vsel %vm1910, %v1899, %v1009
      %v1949 = vsel %vm1910, %v1900, %v1011
      %v1950 = vsel %vm1910, %v1901, %v1013
      %v1951 = vsel %vm1910, %v1902, %v1015
      %v1952 = vsel %vm1910, %v1903, %v1017
      %v1953 = vsel %vm1910, %v1904, %v1019
      %v1954 = vsel %vm1910, %v1905, %v1021
      %v1955 = vsel %vm1910, %v1906, %v1023
      %v1956 = vsel %vm1910, %v1907, %v1025
      %v1957 = vsel %vm1910, %v1908, %v1027
      %v1958 = vsel %vm1910, %v1909, %v1029
      %vm1959 = vcmask 130048
      %v1960 = vsel %vm1959, %v1911, %v1082
      %v1961 = vsel %vm1959, %v1912, %v1084
      %v1962 = vsel %vm1959, %v1913, %v1086
      %v1963 = vsel %vm1959, %v1914, %v1088
      %v1964 = vsel %vm1959, %v1915, %v1090
      %v1965 = vsel %vm1959, %v1916, %v1092
      %v1966 = vsel %vm1959, %v1917, %v1094
      %v1967 = vsel %vm1959, %v1918, %v1096
      %v1968 = vsel %vm1959, %v1919, %v1098
      %v1969 = vsel %vm1959, %v1920, %v1100
      %v1970 = vsel %vm1959, %v1921, %v1102
      %v1971 = vsel %vm1959, %v1922, %v1104
      %v1972 = vsel %vm1959, %v1923, %v1106
      %v1973 = vsel %vm1959, %v1924, %v1108
      %v1974 = vsel %vm1959, %v1925, %v1110
      %v1975 = vsel %vm1959, %v1926, %v1112
      %v1976 = vsel %vm1959, %v1927, %v1114
      %v1977 = vsel %vm1959, %v1928, %v1116
      %v1978 = vsel %vm1959, %v1929, %v1118
      %v1979 = vsel %vm1959, %v1930, %v1120
      %v1980 = vsel %vm1959, %v1931, %v1122
      %v1981 = vsel %vm1959, %v1932, %v1124
      %v1982 = vsel %vm1959, %v1933, %v1126
      %v1983 = vsel %vm1959, %v1934, %v1128
      %v1984 = vsel %vm1959, %v1935, %v1130
      %v1985 = vsel %vm1959, %v1936, %v1132
      %v1986 = vsel %vm1959, %v1937, %v1134
      %v1987 = vsel %vm1959, %v1938, %v1136
      %v1988 = vsel %vm1959, %v1939, %v1138
      %v1989 = vsel %vm1959, %v1940, %v1140
      %v1990 = vsel %vm1959, %v1941, %v1142
      %v1991 = vsel %vm1959, %v1942, %v1144
      %v1992 = vsel %vm1959, %v1943, %v1146
      %v1993 = vsel %vm1959, %v1944, %v1148
      %v1994 = vsel %vm1959, %v1945, %v1150
      %v1995 = vsel %vm1959, %v1946, %v1152
      %v1996 = vsel %vm1959, %v1947, %v1154
      %v1997 = vsel %vm1959, %v1948, %v1156
      %v1998 = vsel %vm1959, %v1949, %v1158
      %v1999 = vsel %vm1959, %v1950, %v1160
      %v2000 = vsel %vm1959, %v1951, %v1162
      %v2001 = vsel %vm1959, %v1952, %v1164
      %v2002 = vsel %vm1959, %v1953, %v1166
      %v2003 = vsel %vm1959, %v1954, %v1168
      %v2004 = vsel %vm1959, %v1955, %v1170
      %v2005 = vsel %vm1959, %v1956, %v1172
      %v2006 = vsel %vm1959, %v1957, %v1174
      %v2007 = vsel %vm1959, %v1958, %v1176
      %vm2008 = vcmask 162816
      %v2009 = vsel %vm2008, %v1960, %v1229
      %v2010 = vsel %vm2008, %v1961, %v1231
      %v2011 = vsel %vm2008, %v1962, %v1233
      %v2012 = vsel %vm2008, %v1963, %v1235
      %v2013 = vsel %vm2008, %v1964, %v1237
      %v2014 = vsel %vm2008, %v1965, %v1239
      %v2015 = vsel %vm2008, %v1966, %v1241
      %v2016 = vsel %vm2008, %v1967, %v1243
      %v2017 = vsel %vm2008, %v1968, %v1245
      %v2018 = vsel %vm2008, %v1969, %v1247
      %v2019 = vsel %vm2008, %v1970, %v1249
      %v2020 = vsel %vm2008, %v1971, %v1251
      %v2021 = vsel %vm2008, %v1972, %v1253
      %v2022 = vsel %vm2008, %v1973, %v1255
      %v2023 = vsel %vm2008, %v1974, %v1257
      %v2024 = vsel %vm2008, %v1975, %v1259
      %v2025 = vsel %vm2008, %v1976, %v1261
      %v2026 = vsel %vm2008, %v1977, %v1263
      %v2027 = vsel %vm2008, %v1978, %v1265
      %v2028 = vsel %vm2008, %v1979, %v1267
      %v2029 = vsel %vm2008, %v1980, %v1269
      %v2030 = vsel %vm2008, %v1981, %v1271
      %v2031 = vsel %vm2008, %v1982, %v1273
      %v2032 = vsel %vm2008, %v1983, %v1275
      %v2033 = vsel %vm2008, %v1984, %v1277
      %v2034 = vsel %vm2008, %v1985, %v1279
      %v2035 = vsel %vm2008, %v1986, %v1281
      %v2036 = vsel %vm2008, %v1987, %v1283
      %v2037 = vsel %vm2008, %v1988, %v1285
      %v2038 = vsel %vm2008, %v1989, %v1287
      %v2039 = vsel %vm2008, %v1990, %v1289
      %v2040 = vsel %vm2008, %v1991, %v1291
      %v2041 = vsel %vm2008, %v1992, %v1293
      %v2042 = vsel %vm2008, %v1993, %v1295
      %v2043 = vsel %vm2008, %v1994, %v1297
      %v2044 = vsel %vm2008, %v1995, %v1299
      %v2045 = vsel %vm2008, %v1996, %v1301
      %v2046 = vsel %vm2008, %v1997, %v1303
      %v2047 = vsel %vm2008, %v1998, %v1305
      %v2048 = vsel %vm2008, %v1999, %v1307
      %v2049 = vsel %vm2008, %v2000, %v1309
      %v2050 = vsel %vm2008, %v2001, %v1311
      %v2051 = vsel %vm2008, %v2002, %v1313
      %v2052 = vsel %vm2008, %v2003, %v1315
      %v2053 = vsel %vm2008, %v2004, %v1317
      %v2054 = vsel %vm2008, %v2005, %v1319
      %v2055 = vsel %vm2008, %v2006, %v1321
      %v2056 = vsel %vm2008, %v2007, %v1323
      %vm2057 = vcmask 195584
      %v2058 = vsel %vm2057, %v2009, %v1376
      %v2059 = vsel %vm2057, %v2010, %v1378
      %v2060 = vsel %vm2057, %v2011, %v1380
      %v2061 = vsel %vm2057, %v2012, %v1382
      %v2062 = vsel %vm2057, %v2013, %v1384
      %v2063 = vsel %vm2057, %v2014, %v1386
      %v2064 = vsel %vm2057, %v2015, %v1388
      %v2065 = vsel %vm2057, %v2016, %v1390
      %v2066 = vsel %vm2057, %v2017, %v1392
      %v2067 = vsel %vm2057, %v2018, %v1394
      %v2068 = vsel %vm2057, %v2019, %v1396
      %v2069 = vsel %vm2057, %v2020, %v1398
      %v2070 = vsel %vm2057, %v2021, %v1400
      %v2071 = vsel %vm2057, %v2022, %v1402
      %v2072 = vsel %vm2057, %v2023, %v1404
      %v2073 = vsel %vm2057, %v2024, %v1406
      %v2074 = vsel %vm2057, %v2025, %v1408
      %v2075 = vsel %vm2057, %v2026, %v1410
      %v2076 = vsel %vm2057, %v2027, %v1412
      %v2077 = vsel %vm2057, %v2028, %v1414
      %v2078 = vsel %vm2057, %v2029, %v1416
      %v2079 = vsel %vm2057, %v2030, %v1418
      %v2080 = vsel %vm2057, %v2031, %v1420
      %v2081 = vsel %vm2057, %v2032, %v1422
      %v2082 = vsel %vm2057, %v2033, %v1424
      %v2083 = vsel %vm2057, %v2034, %v1426
      %v2084 = vsel %vm2057, %v2035, %v1428
      %v2085 = vsel %vm2057, %v2036, %v1430
      %v2086 = vsel %vm2057, %v2037, %v1432
      %v2087 = vsel %vm2057, %v2038, %v1434
      %v2088 = vsel %vm2057, %v2039, %v1436
      %v2089 = vsel %vm2057, %v2040, %v1438
      %v2090 = vsel %vm2057, %v2041, %v1440
      %v2091 = vsel %vm2057, %v2042, %v1442
      %v2092 = vsel %vm2057, %v2043, %v1444
      %v2093 = vsel %vm2057, %v2044, %v1446
      %v2094 = vsel %vm2057, %v2045, %v1448
      %v2095 = vsel %vm2057, %v2046, %v1450
      %v2096 = vsel %vm2057, %v2047, %v1452
      %v2097 = vsel %vm2057, %v2048, %v1454
      %v2098 = vsel %vm2057, %v2049, %v1456
      %v2099 = vsel %vm2057, %v2050, %v1458
      %v2100 = vsel %vm2057, %v2051, %v1460
      %v2101 = vsel %vm2057, %v2052, %v1462
      %v2102 = vsel %vm2057, %v2053, %v1464
      %v2103 = vsel %vm2057, %v2054, %v1466
      %v2104 = vsel %vm2057, %v2055, %v1468
      %v2105 = vsel %vm2057, %v2056, %v1470
      %vm2106 = vcmask 228352
      %v2107 = vsel %vm2106, %v2058, %v1523
      %v2108 = vsel %vm2106, %v2059, %v1525
      %v2109 = vsel %vm2106, %v2060, %v1527
      %v2110 = vsel %vm2106, %v2061, %v1529
      %v2111 = vsel %vm2106, %v2062, %v1531
      %v2112 = vsel %vm2106, %v2063, %v1533
      %v2113 = vsel %vm2106, %v2064, %v1535
      %v2114 = vsel %vm2106, %v2065, %v1537
      %v2115 = vsel %vm2106, %v2066, %v1539
      %v2116 = vsel %vm2106, %v2067, %v1541
      %v2117 = vsel %vm2106, %v2068, %v1543
      %v2118 = vsel %vm2106, %v2069, %v1545
      %v2119 = vsel %vm2106, %v2070, %v1547
      %v2120 = vsel %vm2106, %v2071, %v1549
      %v2121 = vsel %vm2106, %v2072, %v1551
      %v2122 = vsel %vm2106, %v2073, %v1553
      %v2123 = vsel %vm2106, %v2074, %v1555
      %v2124 = vsel %vm2106, %v2075, %v1557
      %v2125 = vsel %vm2106, %v2076, %v1559
      %v2126 = vsel %vm2106, %v2077, %v1561
      %v2127 = vsel %vm2106, %v2078, %v1563
      %v2128 = vsel %vm2106, %v2079, %v1565
      %v2129 = vsel %vm2106, %v2080, %v1567
      %v2130 = vsel %vm2106, %v2081, %v1569
      %v2131 = vsel %vm2106, %v2082, %v1571
      %v2132 = vsel %vm2106, %v2083, %v1573
      %v2133 = vsel %vm2106, %v2084, %v1575
      %v2134 = vsel %vm2106, %v2085, %v1577
      %v2135 = vsel %vm2106, %v2086, %v1579
      %v2136 = vsel %vm2106, %v2087, %v1581
      %v2137 = vsel %vm2106, %v2088, %v1583
      %v2138 = vsel %vm2106, %v2089, %v1585
      %v2139 = vsel %vm2106, %v2090, %v1587
      %v2140 = vsel %vm2106, %v2091, %v1589
      %v2141 = vsel %vm2106, %v2092, %v1591
      %v2142 = vsel %vm2106, %v2093, %v1593
      %v2143 = vsel %vm2106, %v2094, %v1595
      %v2144 = vsel %vm2106, %v2095, %v1597
      %v2145 = vsel %vm2106, %v2096, %v1599
      %v2146 = vsel %vm2106, %v2097, %v1601
      %v2147 = vsel %vm2106, %v2098, %v1603
      %v2148 = vsel %vm2106, %v2099, %v1605
      %v2149 = vsel %vm2106, %v2100, %v1607
      %v2150 = vsel %vm2106, %v2101, %v1609
      %v2151 = vsel %vm2106, %v2102, %v1611
      %v2152 = vsel %vm2106, %v2103, %v1613
      %v2153 = vsel %vm2106, %v2104, %v1615
      %v2154 = vsel %vm2106, %v2105, %v1617
      %vm2155 = vcmask 261120
      %v2156 = vsel %vm2155, %v2107, %v1670
      %v2157 = vsel %vm2155, %v2108, %v1672
      %v2158 = vsel %vm2155, %v2109, %v1674
      %v2159 = vsel %vm2155, %v2110, %v1676
      %v2160 = vsel %vm2155, %v2111, %v1678
      %v2161 = vsel %vm2155, %v2112, %v1680
      %v2162 = vsel %vm2155, %v2113, %v1682
      %v2163 = vsel %vm2155, %v2114, %v1684
      %v2164 = vsel %vm2155, %v2115, %v1686
      %v2165 = vsel %vm2155, %v2116, %v1688
      %v2166 = vsel %vm2155, %v2117, %v1690
      %v2167 = vsel %vm2155, %v2118, %v1692
      %v2168 = vsel %vm2155, %v2119, %v1694
      %v2169 = vsel %vm2155, %v2120, %v1696
      %v2170 = vsel %vm2155, %v2121, %v1698
      %v2171 = vsel %vm2155, %v2122, %v1700
      %v2172 = vsel %vm2155, %v2123, %v1702
      %v2173 = vsel %vm2155, %v2124, %v1704
      %v2174 = vsel %vm2155, %v2125, %v1706
      %v2175 = vsel %vm2155, %v2126, %v1708
      %v2176 = vsel %vm2155, %v2127, %v1710
      %v2177 = vsel %vm2155, %v2128, %v1712
      %v2178 = vsel %vm2155, %v2129, %v1714
      %v2179 = vsel %vm2155, %v2130, %v1716
      %v2180 = vsel %vm2155, %v2131, %v1718
      %v2181 = vsel %vm2155, %v2132, %v1720
      %v2182 = vsel %vm2155, %v2133, %v1722
      %v2183 = vsel %vm2155, %v2134, %v1724
      %v2184 = vsel %vm2155, %v2135, %v1726
      %v2185 = vsel %vm2155, %v2136, %v1728
      %v2186 = vsel %vm2155, %v2137, %v1730
      %v2187 = vsel %vm2155, %v2138, %v1732
      %v2188 = vsel %vm2155, %v2139, %v1734
      %v2189 = vsel %vm2155, %v2140, %v1736
      %v2190 = vsel %vm2155, %v2141, %v1738
      %v2191 = vsel %vm2155, %v2142, %v1740
      %v2192 = vsel %vm2155, %v2143, %v1742
      %v2193 = vsel %vm2155, %v2144, %v1744
      %v2194 = vsel %vm2155, %v2145, %v1746
      %v2195 = vsel %vm2155, %v2146, %v1748
      %v2196 = vsel %vm2155, %v2147, %v1750
      %v2197 = vsel %vm2155, %v2148, %v1752
      %v2198 = vsel %vm2155, %v2149, %v1754
      %v2199 = vsel %vm2155, %v2150, %v1756
      %v2200 = vsel %vm2155, %v2151, %v1758
      %v2201 = vsel %vm2155, %v2152, %v1760
      %v2202 = vsel %vm2155, %v2153, %v1762
      %v2203 = vsel %vm2155, %v2154, %v1764
      %v2204 = vld [vmem:[%s1] sm:$0xff]
      %v2205 = vld [vmem:[%s1 + $0x8] sm:$0xff]
      %v2206 = vld [vmem:[%s1 + $0x10] sm:$0xff]
      %v2207 = vld [vmem:[%s1 + $0x18] sm:$0xff]
      %v2208 = vld [vmem:[%s1 + $0x20] sm:$0xf]
      %v2209 = vld [vmem:[%s2] sm:$0x1]
      %v2211 = vlaneseq
      %v2212 = vshrl.u32 %v2211, 7
      %v2213 = vsub.s32 0, %v2212
      %v2214 = vrot.slane %v2209, %v2213
      %vm2216 = vcmask 293888
      %v2218 = vsel %vm2216, %v2156, 0
      %v2221 = vsel %vm2216, %v2157, 0
      %v2224 = vsel %vm2216, %v2158, 0
      %v2227 = vsel %vm2216, %v2159, 0
      %v2230 = vsel %vm2216, %v2160, 0
      %v2233 = vsel %vm2216, %v2161, 0
      %v2236 = vsel %vm2216, %v2162, 0
      %v2239 = vsel %vm2216, %v2163, 0
      %v2242 = vsel %vm2216, %v2164, 0
      %v2245 = vsel %vm2216, %v2165, 0
      %v2248 = vsel %vm2216, %v2166, 0
      %v2251 = vsel %vm2216, %v2167, 0
      %v2254 = vsel %vm2216, %v2168, 0
      %v2257 = vsel %vm2216, %v2169, 0
      %v2260 = vsel %vm2216, %v2170, 0
      %v2263 = vsel %vm2216, %v2171, 0
      %v2266 = vsel %vm2216, %v2172, 0
      %v2269 = vsel %vm2216, %v2173, 0
      %v2272 = vsel %vm2216, %v2174, 0
      %v2275 = vsel %vm2216, %v2175, 0
      %v2278 = vsel %vm2216, %v2176, 0
      %v2281 = vsel %vm2216, %v2177, 0
      %v2284 = vsel %vm2216, %v2178, 0
      %v2287 = vsel %vm2216, %v2179, 0
      %v2290 = vsel %vm2216, %v2180, 0
      %v2293 = vsel %vm2216, %v2181, 0
      %v2296 = vsel %vm2216, %v2182, 0
      %v2299 = vsel %vm2216, %v2183, 0
      %v2302 = vsel %vm2216, %v2184, 0
      %v2305 = vsel %vm2216, %v2185, 0
      %v2308 = vsel %vm2216, %v2186, 0
      %v2311 = vsel %vm2216, %v2187, 0
      %v2314 = vsel %vm2216, %v2188, 0
      %v2317 = vsel %vm2216, %v2189, 0
      %v2320 = vsel %vm2216, %v2190, 0
      %v2323 = vsel %vm2216, %v2191, 0
      %v2326 = vsel %vm2216, %v2192, 0
      %v2329 = vsel %vm2216, %v2193, 0
      %v2332 = vsel %vm2216, %v2194, 0
      %v2335 = vsel %vm2216, %v2195, 0
      %v2338 = vsel %vm2216, %v2196, 0
      %v2341 = vsel %vm2216, %v2197, 0
      %v2344 = vsel %vm2216, %v2198, 0
      %v2347 = vsel %vm2216, %v2199, 0
      %v2350 = vsel %vm2216, %v2200, 0
      %v2353 = vsel %vm2216, %v2201, 0
      %v2356 = vsel %vm2216, %v2202, 0
      %v2359 = vsel %vm2216, %v2203, 0
      %vm2361 = vcmask 1043456
      %v2363 = vsel %vm2361, %v2208, 0
      %2365 = vmatprep.subr.mxu0 0.0
      %2366 = vmatpush1.msra.mxu0 %v2204
      %2367 = vmatprep.subr.mxu0 0.0
      %2368 = vmatpush1.msra.mxu0 %v2205
      %2369 = vmatprep.subr.mxu0 0.0
      %2370 = vmatpush1.msra.mxu0 %v2206
      %2371 = vmatprep.subr.mxu0 0.0
      %2372 = vmatpush1.msra.mxu0 %v2207
      %2373 = vmatprep.subr.mxu0 0.0
      %2374 = vmatpush1.msra.mxu0 %v2363
      %2375 = vmatprep.subr.mxu0 0.0
      %2376 = vmatpush1.msra.mxu0 0.0
      %2377 = vmatprep.subr.mxu0 0.0
      %2378 = vmatpush1.msra.mxu0 0.0
      %2379 = vmatprep.subr.mxu0 0.0
      %2380 = vmatpush1.msra.mxu0 0.0
      %2381 = vmatprep.subr.mxu0 0.0
      %2382 = vmatpush1.msra.mxu0 0.0
      %2383 = vmatprep.subr.mxu0 0.0
      %2384 = vmatpush1.msra.mxu0 0.0
      %2385 = vmatprep.subr.mxu0 0.0
      %2386 = vmatpush1.msra.mxu0 0.0
      %2387 = vmatprep.subr.mxu0 0.0
      %2388 = vmatpush1.msra.mxu0 0.0
      %2389 = vmatprep.subr.mxu0 0.0
      %2390 = vmatpush1.msra.mxu0 0.0
      %2391 = vmatprep.subr.mxu0 0.0
      %2392 = vmatpush1.msra.mxu0 0.0
      %2393 = vmatprep.subr.mxu0 0.0
      %2394 = vmatpush1.msra.mxu0 0.0
      %2395 = vmatprep.subr.mxu0 0.0
      %2396 = vmatpush1.msra.mxu0 0.0
      %2397 = vmatprep.subr.mxu0 0.0
      %2398 = vmatpush1.msra.mxu0 0.0
      %2399 = vmatprep.subr.mxu0 0.0
      %2400 = vmatpush1.msra.mxu0 0.0
      %2401 = vmatprep.subr.mxu0 0.0
      %2402 = vmatpush1.msra.mxu0 0.0
      %2403 = vmatprep.subr.mxu0 0.0
      %2404 = vmatpush1.msra.mxu0 0.0
      %2405 = vmatprep.subr.mxu0 0.0
      %2406 = vmatpush1.msra.mxu0 0.0
      %2407 = vmatprep.subr.mxu0 0.0
      %2408 = vmatpush1.msra.mxu0 0.0
      %2409 = vmatprep.subr.mxu0 0.0
      %2410 = vmatpush1.msra.mxu0 0.0
      %2411 = vmatprep.subr.mxu0 0.0
      %2412 = vmatpush1.msra.mxu0 0.0
      %2413 = vmatprep.subr.mxu0 0.0
      %2414 = vmatpush1.msra.mxu0 0.0
      %2415 = vmatprep.subr.mxu0 0.0
      %2416 = vmatpush1.msra.mxu0 0.0
      %2417 = vmatprep.subr.mxu0 0.0
      %2418 = vmatpush1.msra.mxu0 0.0
      %2419 = vmatprep.subr.mxu0 0.0
      %2420 = vmatpush1.msra.mxu0 0.0
      %2421 = vmatprep.subr.mxu0 0.0
      %2422 = vmatpush1.msra.mxu0 0.0
      %2423 = vmatprep.subr.mxu0 0.0
      %2424 = vmatpush1.msra.mxu0 0.0
      %2425 = vmatprep.subr.mxu0 0.0
      %2426 = vmatpush1.msra.mxu0 0.0
      %2427 = vmatprep.subr.mxu0 0.0
      %2428 = vmatpush1.msra.mxu0 0.0
      %2429 = vmatprep.mubr.f32.mxu0 0.0
      %2430 = vmatmul.mubr.f32.gmra.mrb[0].mxu0 %v2218
      %v2431 = vpop.f32.mrb[0].mxu0
      %v2432 = vadd.f32 %v2214, %v2431
      %v2433 = vpop.f32.mrb[0].mxu0
      %2434 = vmatprep.mubr.f32.mxu0 0.0
      %2435 = vmatmul.mubr.f32.gmra.mrb[0].mxu0 %v2221
      %v2436 = vpop.f32.mrb[0].mxu0
      %v2437 = vadd.f32 %v2214, %v2436
      %v2438 = vpop.f32.mrb[0].mxu0
      %2439 = vmatprep.mubr.f32.mxu0 0.0
      %2440 = vmatmul.mubr.f32.gmra.mrb[0].mxu0 %v2224
      %v2441 = vpop.f32.mrb[0].mxu0
      %v2442 = vadd.f32 %v2214, %v2441
      %v2443 = vpop.f32.mrb[0].mxu0
      %2444 = vmatprep.mubr.f32.mxu0 0.0
      %2445 = vmatmul.mubr.f32.gmra.mrb[0].mxu0 %v2227
      %v2446 = vpop.f32.mrb[0].mxu0
      %v2447 = vadd.f32 %v2214, %v2446
      %v2448 = vpop.f32.mrb[0].mxu0
      %2449 = vmatprep.mubr.f32.mxu0 0.0
      %2450 = vmatmul.mubr.f32.gmra.mrb[0].mxu0 %v2230
      %v2451 = vpop.f32.mrb[0].mxu0
      %v2452 = vadd.f32 %v2214, %v2451
      %v2453 = vpop.f32.mrb[0].mxu0
      %2454 = vmatprep.mubr.f32.mxu0 0.0
      %2455 = vmatmul.mubr.f32.gmra.mrb[0].mxu0 %v2233
      %v2456 = vpop.f32.mrb[0].mxu0
      %v2457 = vadd.f32 %v2214, %v2456
      %v2458 = vpop.f32.mrb[0].mxu0
      %2459 = vmatprep.mubr.f32.mxu0 0.0
      %2460 = vmatmul.mubr.f32.gmra.mrb[0].mxu0 %v2236
      %v2461 = vpop.f32.mrb[0].mxu0
      %v2462 = vadd.f32 %v2214, %v2461
      %v2463 = vpop.f32.mrb[0].mxu0
      %2464 = vmatprep.mubr.f32.mxu0 0.0
      %2465 = vmatmul.mubr.f32.gmra.mrb[0].mxu0 %v2239
      %v2466 = vpop.f32.mrb[0].mxu0
      %v2467 = vadd.f32 %v2214, %v2466
      %v2468 = vpop.f32.mrb[0].mxu0
      %2469 = vmatprep.mubr.f32.mxu0 0.0
      %2470 = vmatmul.mubr.f32.gmra.mrb[0].mxu0 %v2242
      %v2471 = vpop.f32.mrb[0].mxu0
      %v2472 = vadd.f32 %v2214, %v2471
      %v2473 = vpop.f32.mrb[0].mxu0
      %2474 = vmatprep.mubr.f32.mxu0 0.0
      %2475 = vmatmul.mubr.f32.gmra.mrb[0].mxu0 %v2245
      %v2476 = vpop.f32.mrb[0].mxu0
      %v2477 = vadd.f32 %v2214, %v2476
      %v2478 = vpop.f32.mrb[0].mxu0
      %2479 = vmatprep.mubr.f32.mxu0 0.0
      %2480 = vmatmul.mubr.f32.gmra.mrb[0].mxu0 %v2248
      %v2481 = vpop.f32.mrb[0].mxu0
      %v2482 = vadd.f32 %v2214, %v2481
      %v2483 = vpop.f32.mrb[0].mxu0
      %2484 = vmatprep.mubr.f32.mxu0 0.0
      %2485 = vmatmul.mubr.f32.gmra.mrb[0].mxu0 %v2251
      %v2486 = vpop.f32.mrb[0].mxu0
      %v2487 = vadd.f32 %v2214, %v2486
      %v2488 = vpop.f32.mrb[0].mxu0
      %2489 = vmatprep.mubr.f32.mxu0 0.0
      %2490 = vmatmul.mubr.f32.gmra.mrb[0].mxu0 %v2254
      %v2491 = vpop.f32.mrb[0].mxu0
      %v2492 = vadd.f32 %v2214, %v2491
      %v2493 = vpop.f32.mrb[0].mxu0
      %2494 = vmatprep.mubr.f32.mxu0 0.0
      %2495 = vmatmul.mubr.f32.gmra.mrb[0].mxu0 %v2257
      %v2496 = vpop.f32.mrb[0].mxu0
      %v2497 = vadd.f32 %v2214, %v2496
      %v2498 = vpop.f32.mrb[0].mxu0
      %2499 = vmatprep.mubr.f32.mxu0 0.0
      %2500 = vmatmul.mubr.f32.gmra.mrb[0].mxu0 %v2260
      %v2501 = vpop.f32.mrb[0].mxu0
      %v2502 = vadd.f32 %v2214, %v2501
      %v2503 = vpop.f32.mrb[0].mxu0
      %2504 = vmatprep.mubr.f32.mxu0 0.0
      %2505 = vmatmul.mubr.f32.gmra.mrb[0].mxu0 %v2263
      %v2506 = vpop.f32.mrb[0].mxu0
      %v2507 = vadd.f32 %v2214, %v2506
      %v2508 = vpop.f32.mrb[0].mxu0
      %2509 = vmatprep.mubr.f32.mxu0 0.0
      %2510 = vmatmul.mubr.f32.gmra.mrb[0].mxu0 %v2266
      %v2511 = vpop.f32.mrb[0].mxu0
      %v2512 = vadd.f32 %v2214, %v2511
      %v2513 = vpop.f32.mrb[0].mxu0
      %2514 = vmatprep.mubr.f32.mxu0 0.0
      %2515 = vmatmul.mubr.f32.gmra.mrb[0].mxu0 %v2269
      %v2516 = vpop.f32.mrb[0].mxu0
      %v2517 = vadd.f32 %v2214, %v2516
      %v2518 = vpop.f32.mrb[0].mxu0
      %2519 = vmatprep.mubr.f32.mxu0 0.0
      %2520 = vmatmul.mubr.f32.gmra.mrb[0].mxu0 %v2272
      %v2521 = vpop.f32.mrb[0].mxu0
      %v2522 = vadd.f32 %v2214, %v2521
      %v2523 = vpop.f32.mrb[0].mxu0
      %2524 = vmatprep.mubr.f32.mxu0 0.0
      %2525 = vmatmul.mubr.f32.gmra.mrb[0].mxu0 %v2275
      %v2526 = vpop.f32.mrb[0].mxu0
      %v2527 = vadd.f32 %v2214, %v2526
      %v2528 = vpop.f32.mrb[0].mxu0
      %2529 = vmatprep.mubr.f32.mxu0 0.0
      %2530 = vmatmul.mubr.f32.gmra.mrb[0].mxu0 %v2278
      %v2531 = vpop.f32.mrb[0].mxu0
      %v2532 = vadd.f32 %v2214, %v2531
      %v2533 = vpop.f32.mrb[0].mxu0
      %2534 = vmatprep.mubr.f32.mxu0 0.0
      %2535 = vmatmul.mubr.f32.gmra.mrb[0].mxu0 %v2281
      %v2536 = vpop.f32.mrb[0].mxu0
      %v2537 = vadd.f32 %v2214, %v2536
      %v2538 = vpop.f32.mrb[0].mxu0
      %2539 = vmatprep.mubr.f32.mxu0 0.0
      %2540 = vmatmul.mubr.f32.gmra.mrb[0].mxu0 %v2284
      %v2541 = vpop.f32.mrb[0].mxu0
      %v2542 = vadd.f32 %v2214, %v2541
      %v2543 = vpop.f32.mrb[0].mxu0
      %2544 = vmatprep.mubr.f32.mxu0 0.0
      %2545 = vmatmul.mubr.f32.gmra.mrb[0].mxu0 %v2287
      %v2546 = vpop.f32.mrb[0].mxu0
      %v2547 = vadd.f32 %v2214, %v2546
      %v2548 = vpop.f32.mrb[0].mxu0
      %2549 = vmatprep.mubr.f32.mxu0 0.0
      %2550 = vmatmul.mubr.f32.gmra.mrb[0].mxu0 %v2290
      %v2551 = vpop.f32.mrb[0].mxu0
      %v2552 = vadd.f32 %v2214, %v2551
      %v2553 = vpop.f32.mrb[0].mxu0
      %2554 = vmatprep.mubr.f32.mxu0 0.0
      %2555 = vmatmul.mubr.f32.gmra.mrb[0].mxu0 %v2293
      %v2556 = vpop.f32.mrb[0].mxu0
      %v2557 = vadd.f32 %v2214, %v2556
      %v2558 = vpop.f32.mrb[0].mxu0
      %2559 = vmatprep.mubr.f32.mxu0 0.0
      %2560 = vmatmul.mubr.f32.gmra.mrb[0].mxu0 %v2296
      %v2561 = vpop.f32.mrb[0].mxu0
      %v2562 = vadd.f32 %v2214, %v2561
      %v2563 = vpop.f32.mrb[0].mxu0
      %2564 = vmatprep.mubr.f32.mxu0 0.0
      %2565 = vmatmul.mubr.f32.gmra.mrb[0].mxu0 %v2299
      %v2566 = vpop.f32.mrb[0].mxu0
      %v2567 = vadd.f32 %v2214, %v2566
      %v2568 = vpop.f32.mrb[0].mxu0
      %2569 = vmatprep.mubr.f32.mxu0 0.0
      %2570 = vmatmul.mubr.f32.gmra.mrb[0].mxu0 %v2302
      %v2571 = vpop.f32.mrb[0].mxu0
      %v2572 = vadd.f32 %v2214, %v2571
      %v2573 = vpop.f32.mrb[0].mxu0
      %2574 = vmatprep.mubr.f32.mxu0 0.0
      %2575 = vmatmul.mubr.f32.gmra.mrb[0].mxu0 %v2305
      %v2576 = vpop.f32.mrb[0].mxu0
      %v2577 = vadd.f32 %v2214, %v2576
      %v2578 = vpop.f32.mrb[0].mxu0
      %2579 = vmatprep.mubr.f32.mxu0 0.0
      %2580 = vmatmul.mubr.f32.gmra.mrb[0].mxu0 %v2308
      %v2581 = vpop.f32.mrb[0].mxu0
      %v2582 = vadd.f32 %v2214, %v2581
      %v2583 = vpop.f32.mrb[0].mxu0
      %2584 = vmatprep.mubr.f32.mxu0 0.0
      %2585 = vmatmul.mubr.f32.gmra.mrb[0].mxu0 %v2311
      %v2586 = vpop.f32.mrb[0].mxu0
      %v2587 = vadd.f32 %v2214, %v2586
      %v2588 = vpop.f32.mrb[0].mxu0
      %2589 = vmatprep.mubr.f32.mxu0 0.0
      %2590 = vmatmul.mubr.f32.gmra.mrb[0].mxu0 %v2314
      %v2591 = vpop.f32.mrb[0].mxu0
      %v2592 = vadd.f32 %v2214, %v2591
      %v2593 = vpop.f32.mrb[0].mxu0
      %2594 = vmatprep.mubr.f32.mxu0 0.0
      %2595 = vmatmul.mubr.f32.gmra.mrb[0].mxu0 %v2317
      %v2596 = vpop.f32.mrb[0].mxu0
      %v2597 = vadd.f32 %v2214, %v2596
      %v2598 = vpop.f32.mrb[0].mxu0
      %2599 = vmatprep.mubr.f32.mxu0 0.0
      %2600 = vmatmul.mubr.f32.gmra.mrb[0].mxu0 %v2320
      %v2601 = vpop.f32.mrb[0].mxu0
      %v2602 = vadd.f32 %v2214, %v2601
      %v2603 = vpop.f32.mrb[0].mxu0
      %2604 = vmatprep.mubr.f32.mxu0 0.0
      %2605 = vmatmul.mubr.f32.gmra.mrb[0].mxu0 %v2323
      %v2606 = vpop.f32.mrb[0].mxu0
      %v2607 = vadd.f32 %v2214, %v2606
      %v2608 = vpop.f32.mrb[0].mxu0
      %2609 = vmatprep.mubr.f32.mxu0 0.0
      %2610 = vmatmul.mubr.f32.gmra.mrb[0].mxu0 %v2326
      %v2611 = vpop.f32.mrb[0].mxu0
      %v2612 = vadd.f32 %v2214, %v2611
      %v2613 = vpop.f32.mrb[0].mxu0
      %2614 = vmatprep.mubr.f32.mxu0 0.0
      %2615 = vmatmul.mubr.f32.gmra.mrb[0].mxu0 %v2329
      %v2616 = vpop.f32.mrb[0].mxu0
      %v2617 = vadd.f32 %v2214, %v2616
      %v2618 = vpop.f32.mrb[0].mxu0
      %2619 = vmatprep.mubr.f32.mxu0 0.0
      %2620 = vmatmul.mubr.f32.gmra.mrb[0].mxu0 %v2332
      %v2621 = vpop.f32.mrb[0].mxu0
      %v2622 = vadd.f32 %v2214, %v2621
      %v2623 = vpop.f32.mrb[0].mxu0
      %2624 = vmatprep.mubr.f32.mxu0 0.0
      %2625 = vmatmul.mubr.f32.gmra.mrb[0].mxu0 %v2335
      %v2626 = vpop.f32.mrb[0].mxu0
      %v2627 = vadd.f32 %v2214, %v2626
      %v2628 = vpop.f32.mrb[0].mxu0
      %2629 = vmatprep.mubr.f32.mxu0 0.0
      %2630 = vmatmul.mubr.f32.gmra.mrb[0].mxu0 %v2338
      %v2631 = vpop.f32.mrb[0].mxu0
      %v2632 = vadd.f32 %v2214, %v2631
      %v2633 = vpop.f32.mrb[0].mxu0
      %2634 = vmatprep.mubr.f32.mxu0 0.0
      %2635 = vmatmul.mubr.f32.gmra.mrb[0].mxu0 %v2341
      %v2636 = vpop.f32.mrb[0].mxu0
      %v2637 = vadd.f32 %v2214, %v2636
      %v2638 = vpop.f32.mrb[0].mxu0
      %2639 = vmatprep.mubr.f32.mxu0 0.0
      %2640 = vmatmul.mubr.f32.gmra.mrb[0].mxu0 %v2344
      %v2641 = vpop.f32.mrb[0].mxu0
      %v2642 = vadd.f32 %v2214, %v2641
      %v2643 = vpop.f32.mrb[0].mxu0
      %2644 = vmatprep.mubr.f32.mxu0 0.0
      %2645 = vmatmul.mubr.f32.gmra.mrb[0].mxu0 %v2347
      %v2646 = vpop.f32.mrb[0].mxu0
      %v2647 = vadd.f32 %v2214, %v2646
      %v2648 = vpop.f32.mrb[0].mxu0
      %2649 = vmatprep.mubr.f32.mxu0 0.0
      %2650 = vmatmul.mubr.f32.gmra.mrb[0].mxu0 %v2350
      %v2651 = vpop.f32.mrb[0].mxu0
      %v2652 = vadd.f32 %v2214, %v2651
      %v2653 = vpop.f32.mrb[0].mxu0
      %2654 = vmatprep.mubr.f32.mxu0 0.0
      %2655 = vmatmul.mubr.f32.gmra.mrb[0].mxu0 %v2353
      %v2656 = vpop.f32.mrb[0].mxu0
      %v2657 = vadd.f32 %v2214, %v2656
      %v2658 = vpop.f32.mrb[0].mxu0
      %2659 = vmatprep.mubr.f32.mxu0 0.0
      %2660 = vmatmul.mubr.f32.gmra.mrb[0].mxu0 %v2356
      %v2661 = vpop.f32.mrb[0].mxu0
      %v2662 = vadd.f32 %v2214, %v2661
      %v2663 = vpop.f32.mrb[0].mxu0
      %2664 = vmatprep.mubr.f32.mxu0 0.0
      %2665 = vmatmul.mubr.f32.gmra.mrb[0].mxu0 %v2359
      %v2666 = vpop.f32.mrb[0].mxu0
      %v2667 = vadd.f32 %v2214, %v2666
      %v2668 = vpop.f32.mrb[0].mxu0
      %2669 = vdwg.mxu0
      %vm2670 = vcmp.ge.f32.partialorder %v2432, 0.0
      %vm2671 = vcmp.ge.f32.partialorder %v2437, 0.0
      %vm2672 = vcmp.ge.f32.partialorder %v2442, 0.0
      %vm2673 = vcmp.ge.f32.partialorder %v2447, 0.0
      %vm2674 = vcmp.ge.f32.partialorder %v2452, 0.0
      %vm2675 = vcmp.ge.f32.partialorder %v2457, 0.0
      %vm2676 = vcmp.ge.f32.partialorder %v2462, 0.0
      %vm2677 = vcmp.ge.f32.partialorder %v2467, 0.0
      %vm2678 = vcmp.ge.f32.partialorder %v2472, 0.0
      %vm2679 = vcmp.ge.f32.partialorder %v2477, 0.0
      %vm2680 = vcmp.ge.f32.partialorder %v2482, 0.0
      %vm2681 = vcmp.ge.f32.partialorder %v2487, 0.0
      %vm2682 = vcmp.ge.f32.partialorder %v2492, 0.0
      %vm2683 = vcmp.ge.f32.partialorder %v2497, 0.0
      %vm2684 = vcmp.ge.f32.partialorder %v2502, 0.0
      %vm2685 = vcmp.ge.f32.partialorder %v2507, 0.0
      %vm2686 = vcmp.ge.f32.partialorder %v2512, 0.0
      %vm2687 = vcmp.ge.f32.partialorder %v2517, 0.0
      %vm2688 = vcmp.ge.f32.partialorder %v2522, 0.0
      %vm2689 = vcmp.ge.f32.partialorder %v2527, 0.0
      %vm2690 = vcmp.ge.f32.partialorder %v2532, 0.0
      %vm2691 = vcmp.ge.f32.partialorder %v2537, 0.0
      %vm2692 = vcmp.ge.f32.partialorder %v2542, 0.0
      %vm2693 = vcmp.ge.f32.partialorder %v2547, 0.0
      %vm2694 = vcmp.ge.f32.partialorder %v2552, 0.0
      %vm2695 = vcmp.ge.f32.partialorder %v2557, 0.0
      %vm2696 = vcmp.ge.f32.partialorder %v2562, 0.0
      %vm2697 = vcmp.ge.f32.partialorder %v2567, 0.0
      %vm2698 = vcmp.ge.f32.partialorder %v2572, 0.0
      %vm2699 = vcmp.ge.f32.partialorder %v2577, 0.0
      %vm2700 = vcmp.ge.f32.partialorder %v2582, 0.0
      %vm2701 = vcmp.ge.f32.partialorder %v2587, 0.0
      %vm2702 = vcmp.ge.f32.partialorder %v2592, 0.0
      %vm2703 = vcmp.ge.f32.partialorder %v2597, 0.0
      %vm2704 = vcmp.ge.f32.partialorder %v2602, 0.0
      %vm2705 = vcmp.ge.f32.partialorder %v2607, 0.0
      %vm2706 = vcmp.ge.f32.partialorder %v2612, 0.0
      %vm2707 = vcmp.ge.f32.partialorder %v2617, 0.0
      %vm2708 = vcmp.ge.f32.partialorder %v2622, 0.0
      %vm2709 = vcmp.ge.f32.partialorder %v2627, 0.0
      %vm2710 = vcmp.ge.f32.partialorder %v2632, 0.0
      %vm2711 = vcmp.ge.f32.partialorder %v2637, 0.0
      %vm2712 = vcmp.ge.f32.partialorder %v2642, 0.0
      %vm2713 = vcmp.ge.f32.partialorder %v2647, 0.0
      %vm2714 = vcmp.ge.f32.partialorder %v2652, 0.0
      %vm2715 = vcmp.ge.f32.partialorder %v2657, 0.0
      %vm2716 = vcmp.ge.f32.partialorder %v2662, 0.0
      %vm2717 = vcmp.ge.f32.partialorder %v2667, 0.0
      %v2718 = vmul.f32 %v2432, 0.2
      %v2719 = vmul.f32 %v2437, 0.2
      %v2720 = vmul.f32 %v2442, 0.2
      %v2721 = vmul.f32 %v2447, 0.2
      %v2722 = vmul.f32 %v2452, 0.2
      %v2723 = vmul.f32 %v2457, 0.2
      %v2724 = vmul.f32 %v2462, 0.2
      %v2725 = vmul.f32 %v2467, 0.2
      %v2726 = vmul.f32 %v2472, 0.2
      %v2727 = vmul.f32 %v2477, 0.2
      %v2728 = vmul.f32 %v2482, 0.2
      %v2729 = vmul.f32 %v2487, 0.2
      %v2730 = vmul.f32 %v2492, 0.2
      %v2731 = vmul.f32 %v2497, 0.2
      %v2732 = vmul.f32 %v2502, 0.2
      %v2733 = vmul.f32 %v2507, 0.2
      %v2734 = vmul.f32 %v2512, 0.2
      %v2735 = vmul.f32 %v2517, 0.2
      %v2736 = vmul.f32 %v2522, 0.2
      %v2737 = vmul.f32 %v2527, 0.2
      %v2738 = vmul.f32 %v2532, 0.2
      %v2739 = vmul.f32 %v2537, 0.2
      %v2740 = vmul.f32 %v2542, 0.2
      %v2741 = vmul.f32 %v2547, 0.2
      %v2742 = vmul.f32 %v2552, 0.2
      %v2743 = vmul.f32 %v2557, 0.2
      %v2744 = vmul.f32 %v2562, 0.2
      %v2745 = vmul.f32 %v2567, 0.2
      %v2746 = vmul.f32 %v2572, 0.2
      %v2747 = vmul.f32 %v2577, 0.2
      %v2748 = vmul.f32 %v2582, 0.2
      %v2749 = vmul.f32 %v2587, 0.2
      %v2750 = vmul.f32 %v2592, 0.2
      %v2751 = vmul.f32 %v2597, 0.2
      %v2752 = vmul.f32 %v2602, 0.2
      %v2753 = vmul.f32 %v2607, 0.2
      %v2754 = vmul.f32 %v2612, 0.2
      %v2755 = vmul.f32 %v2617, 0.2
      %v2756 = vmul.f32 %v2622, 0.2
      %v2757 = vmul.f32 %v2627, 0.2
      %v2758 = vmul.f32 %v2632, 0.2
      %v2759 = vmul.f32 %v2637, 0.2
      %v2760 = vmul.f32 %v2642, 0.2
      %v2761 = vmul.f32 %v2647, 0.2
      %v2762 = vmul.f32 %v2652, 0.2
      %v2763 = vmul.f32 %v2657, 0.2
      %v2764 = vmul.f32 %v2662, 0.2
      %v2765 = vmul.f32 %v2667, 0.2
      %v2766 = vsel %vm2670, %v2432, %v2718
      %v2767 = vsel %vm2671, %v2437, %v2719
      %v2768 = vsel %vm2672, %v2442, %v2720
      %v2769 = vsel %vm2673, %v2447, %v2721
      %v2770 = vsel %vm2674, %v2452, %v2722
      %v2771 = vsel %vm2675, %v2457, %v2723
      %v2772 = vsel %vm2676, %v2462, %v2724
      %v2773 = vsel %vm2677, %v2467, %v2725
      %v2774 = vsel %vm2678, %v2472, %v2726
      %v2775 = vsel %vm2679, %v2477, %v2727
      %v2776 = vsel %vm2680, %v2482, %v2728
      %v2777 = vsel %vm2681, %v2487, %v2729
      %v2778 = vsel %vm2682, %v2492, %v2730
      %v2779 = vsel %vm2683, %v2497, %v2731
      %v2780 = vsel %vm2684, %v2502, %v2732
      %v2781 = vsel %vm2685, %v2507, %v2733
      %v2782 = vsel %vm2686, %v2512, %v2734
      %v2783 = vsel %vm2687, %v2517, %v2735
      %v2784 = vsel %vm2688, %v2522, %v2736
      %v2785 = vsel %vm2689, %v2527, %v2737
      %v2786 = vsel %vm2690, %v2532, %v2738
      %v2787 = vsel %vm2691, %v2537, %v2739
      %v2788 = vsel %vm2692, %v2542, %v2740
      %v2789 = vsel %vm2693, %v2547, %v2741
      %v2790 = vsel %vm2694, %v2552, %v2742
      %v2791 = vsel %vm2695, %v2557, %v2743
      %v2792 = vsel %vm2696, %v2562, %v2744
      %v2793 = vsel %vm2697, %v2567, %v2745
      %v2794 = vsel %vm2698, %v2572, %v2746
      %v2795 = vsel %vm2699, %v2577, %v2747
      %v2796 = vsel %vm2700, %v2582, %v2748
      %v2797 = vsel %vm2701, %v2587, %v2749
      %v2798 = vsel %vm2702, %v2592, %v2750
      %v2799 = vsel %vm2703, %v2597, %v2751
      %v2800 = vsel %vm2704, %v2602, %v2752
      %v2801 = vsel %vm2705, %v2607, %v2753
      %v2802 = vsel %vm2706, %v2612, %v2754
      %v2803 = vsel %vm2707, %v2617, %v2755
      %v2804 = vsel %vm2708, %v2622, %v2756
      %v2805 = vsel %vm2709, %v2627, %v2757
      %v2806 = vsel %vm2710, %v2632, %v2758
      %v2807 = vsel %vm2711, %v2637, %v2759
      %v2808 = vsel %vm2712, %v2642, %v2760
      %v2809 = vsel %vm2713, %v2647, %v2761
      %v2810 = vsel %vm2714, %v2652, %v2762
      %v2811 = vsel %vm2715, %v2657, %v2763
      %v2812 = vsel %vm2716, %v2662, %v2764
      %v2813 = vsel %vm2717, %v2667, %v2765
      %v2814 = vmul.f32 %v2766, 1.4142135
      %v2815 = vmul.f32 %v2767, 1.4142135
      %v2816 = vmul.f32 %v2768, 1.4142135
      %v2817 = vmul.f32 %v2769, 1.4142135
      %v2818 = vmul.f32 %v2770, 1.4142135
      %v2819 = vmul.f32 %v2771, 1.4142135
      %v2820 = vmul.f32 %v2772, 1.4142135
      %v2821 = vmul.f32 %v2773, 1.4142135
      %v2822 = vmul.f32 %v2774, 1.4142135
      %v2823 = vmul.f32 %v2775, 1.4142135
      %v2824 = vmul.f32 %v2776, 1.4142135
      %v2825 = vmul.f32 %v2777, 1.4142135
      %v2826 = vmul.f32 %v2778, 1.4142135
      %v2827 = vmul.f32 %v2779, 1.4142135
      %v2828 = vmul.f32 %v2780, 1.4142135
      %v2829 = vmul.f32 %v2781, 1.4142135
      %v2830 = vmul.f32 %v2782, 1.4142135
      %v2831 = vmul.f32 %v2783, 1.4142135
      %v2832 = vmul.f32 %v2784, 1.4142135
      %v2833 = vmul.f32 %v2785, 1.4142135
      %v2834 = vmul.f32 %v2786, 1.4142135
      %v2835 = vmul.f32 %v2787, 1.4142135
      %v2836 = vmul.f32 %v2788, 1.4142135
      %v2837 = vmul.f32 %v2789, 1.4142135
      %v2838 = vmul.f32 %v2790, 1.4142135
      %v2839 = vmul.f32 %v2791, 1.4142135
      %v2840 = vmul.f32 %v2792, 1.4142135
      %v2841 = vmul.f32 %v2793, 1.4142135
      %v2842 = vmul.f32 %v2794, 1.4142135
      %v2843 = vmul.f32 %v2795, 1.4142135
      %v2844 = vmul.f32 %v2796, 1.4142135
      %v2845 = vmul.f32 %v2797, 1.4142135
      %v2846 = vmul.f32 %v2798, 1.4142135
      %v2847 = vmul.f32 %v2799, 1.4142135
      %v2848 = vmul.f32 %v2800, 1.4142135
      %v2849 = vmul.f32 %v2801, 1.4142135
      %v2850 = vmul.f32 %v2802, 1.4142135
      %v2851 = vmul.f32 %v2803, 1.4142135
      %v2852 = vmul.f32 %v2804, 1.4142135
      %v2853 = vmul.f32 %v2805, 1.4142135
      %v2854 = vmul.f32 %v2806, 1.4142135
      %v2855 = vmul.f32 %v2807, 1.4142135
      %v2856 = vmul.f32 %v2808, 1.4142135
      %v2857 = vmul.f32 %v2809, 1.4142135
      %v2858 = vmul.f32 %v2810, 1.4142135
      %v2859 = vmul.f32 %v2811, 1.4142135
      %v2860 = vmul.f32 %v2812, 1.4142135
      %v2861 = vmul.f32 %v2813, 1.4142135
      %2863 = vset.pattern.permute.xlu0 0
      %2864 = vperm.xlu0 %2863, %v292
      %v2865 = vpop.permute.xlu0 %2864
      %2868 = vset.pattern.permute.xlu0 0
      %2869 = vperm.xlu0 %2868, %v293
      %v2870 = vpop.permute.xlu0 %2869
      %2873 = vset.pattern.permute.xlu0 0
      %2874 = vperm.xlu0 %2873, %v294
      %v2875 = vpop.permute.xlu0 %2874
      %2878 = vset.pattern.permute.xlu0 0
      %2879 = vperm.xlu0 %2878, %v295
      %v2880 = vpop.permute.xlu0 %2879
      %2883 = vset.pattern.permute.xlu0 0
      %2884 = vperm.xlu0 %2883, %v296
      %v2885 = vpop.permute.xlu0 %2884
      %2888 = vset.pattern.permute.xlu0 0
      %2889 = vperm.xlu0 %2888, %v297
      %v2890 = vpop.permute.xlu0 %2889
      %2893 = vset.pattern.permute.xlu0 0
      %2894 = vperm.xlu0 %2893, %v298
      %v2895 = vpop.permute.xlu0 %2894
      %2898 = vset.pattern.permute.xlu0 0
      %2899 = vperm.xlu0 %2898, %v299
      %v2900 = vpop.permute.xlu0 %2899
      %2903 = vset.pattern.permute.xlu0 0
      %2904 = vperm.xlu0 %2903, %v300
      %v2905 = vpop.permute.xlu0 %2904
      %2908 = vset.pattern.permute.xlu0 0
      %2909 = vperm.xlu0 %2908, %v301
      %v2910 = vpop.permute.xlu0 %2909
      %2913 = vset.pattern.permute.xlu0 0
      %2914 = vperm.xlu0 %2913, %v302
      %v2915 = vpop.permute.xlu0 %2914
      %2918 = vset.pattern.permute.xlu0 0
      %2919 = vperm.xlu0 %2918, %v303
      %v2920 = vpop.permute.xlu0 %2919
      %2923 = vset.pattern.permute.xlu0 0
      %2924 = vperm.xlu0 %2923, %v304
      %v2925 = vpop.permute.xlu0 %2924
      %2928 = vset.pattern.permute.xlu0 0
      %2929 = vperm.xlu0 %2928, %v305
      %v2930 = vpop.permute.xlu0 %2929
      %2933 = vset.pattern.permute.xlu0 0
      %2934 = vperm.xlu0 %2933, %v306
      %v2935 = vpop.permute.xlu0 %2934
      %2938 = vset.pattern.permute.xlu0 0
      %2939 = vperm.xlu0 %2938, %v307
      %v2940 = vpop.permute.xlu0 %2939
      %2943 = vset.pattern.permute.xlu0 0
      %2944 = vperm.xlu0 %2943, %v308
      %v2945 = vpop.permute.xlu0 %2944
      %2948 = vset.pattern.permute.xlu0 0
      %2949 = vperm.xlu0 %2948, %v309
      %v2950 = vpop.permute.xlu0 %2949
      %2953 = vset.pattern.permute.xlu0 0
      %2954 = vperm.xlu0 %2953, %v310
      %v2955 = vpop.permute.xlu0 %2954
      %2958 = vset.pattern.permute.xlu0 0
      %2959 = vperm.xlu0 %2958, %v311
      %v2960 = vpop.permute.xlu0 %2959
      %2963 = vset.pattern.permute.xlu0 0
      %2964 = vperm.xlu0 %2963, %v312
      %v2965 = vpop.permute.xlu0 %2964
      %2968 = vset.pattern.permute.xlu0 0
      %2969 = vperm.xlu0 %2968, %v313
      %v2970 = vpop.permute.xlu0 %2969
      %2973 = vset.pattern.permute.xlu0 0
      %2974 = vperm.xlu0 %2973, %v314
      %v2975 = vpop.permute.xlu0 %2974
      %2978 = vset.pattern.permute.xlu0 0
      %2979 = vperm.xlu0 %2978, %v315
      %v2980 = vpop.permute.xlu0 %2979
      %2983 = vset.pattern.permute.xlu0 0
      %2984 = vperm.xlu0 %2983, %v316
      %v2985 = vpop.permute.xlu0 %2984
      %2988 = vset.pattern.permute.xlu0 0
      %2989 = vperm.xlu0 %2988, %v317
      %v2990 = vpop.permute.xlu0 %2989
      %2993 = vset.pattern.permute.xlu0 0
      %2994 = vperm.xlu0 %2993, %v318
      %v2995 = vpop.permute.xlu0 %2994
      %2998 = vset.pattern.permute.xlu0 0
      %2999 = vperm.xlu0 %2998, %v319
      %v3000 = vpop.permute.xlu0 %2999
      %3003 = vset.pattern.permute.xlu0 0
      %3004 = vperm.xlu0 %3003, %v320
      %v3005 = vpop.permute.xlu0 %3004
      %3008 = vset.pattern.permute.xlu0 0
      %3009 = vperm.xlu0 %3008, %v321
      %v3010 = vpop.permute.xlu0 %3009
      %3013 = vset.pattern.permute.xlu0 0
      %3014 = vperm.xlu0 %3013, %v322
      %v3015 = vpop.permute.xlu0 %3014
      %3018 = vset.pattern.permute.xlu0 0
      %3019 = vperm.xlu0 %3018, %v323
      %v3020 = vpop.permute.xlu0 %3019
      %3023 = vset.pattern.permute.xlu0 0
      %3024 = vperm.xlu0 %3023, %v324
      %v3025 = vpop.permute.xlu0 %3024
      %3028 = vset.pattern.permute.xlu0 0
      %3029 = vperm.xlu0 %3028, %v325
      %v3030 = vpop.permute.xlu0 %3029
      %3033 = vset.pattern.permute.xlu0 0
      %3034 = vperm.xlu0 %3033, %v326
      %v3035 = vpop.permute.xlu0 %3034
      %3038 = vset.pattern.permute.xlu0 0
      %3039 = vperm.xlu0 %3038, %v327
      %v3040 = vpop.permute.xlu0 %3039
      %3043 = vset.pattern.permute.xlu0 0
      %3044 = vperm.xlu0 %3043, %v328
      %v3045 = vpop.permute.xlu0 %3044
      %3048 = vset.pattern.permute.xlu0 0
      %3049 = vperm.xlu0 %3048, %v329
      %v3050 = vpop.permute.xlu0 %3049
      %3053 = vset.pattern.permute.xlu0 0
      %3054 = vperm.xlu0 %3053, %v330
      %v3055 = vpop.permute.xlu0 %3054
      %3058 = vset.pattern.permute.xlu0 0
      %3059 = vperm.xlu0 %3058, %v331
      %v3060 = vpop.permute.xlu0 %3059
      %3063 = vset.pattern.permute.xlu0 0
      %3064 = vperm.xlu0 %3063, %v332
      %v3065 = vpop.permute.xlu0 %3064
      %3068 = vset.pattern.permute.xlu0 0
      %3069 = vperm.xlu0 %3068, %v333
      %v3070 = vpop.permute.xlu0 %3069
      %3073 = vset.pattern.permute.xlu0 0
      %3074 = vperm.xlu0 %3073, %v334
      %v3075 = vpop.permute.xlu0 %3074
      %3078 = vset.pattern.permute.xlu0 0
      %3079 = vperm.xlu0 %3078, %v335
      %v3080 = vpop.permute.xlu0 %3079
      %3083 = vset.pattern.permute.xlu0 0
      %3084 = vperm.xlu0 %3083, %v336
      %v3085 = vpop.permute.xlu0 %3084
      %3088 = vset.pattern.permute.xlu0 0
      %3089 = vperm.xlu0 %3088, %v337
      %v3090 = vpop.permute.xlu0 %3089
      %3093 = vset.pattern.permute.xlu0 0
      %3094 = vperm.xlu0 %3093, %v338
      %v3095 = vpop.permute.xlu0 %3094
      %3098 = vset.pattern.permute.xlu0 0
      %3099 = vperm.xlu0 %3098, %v339
      %v3100 = vpop.permute.xlu0 %3099
      %v3102 = vmul.f32 %v2814, %v2865
      %v3103 = vmul.f32 %v2815, %v2870
      %v3104 = vmul.f32 %v2816, %v2875
      %v3105 = vmul.f32 %v2817, %v2880
      %v3106 = vmul.f32 %v2818, %v2885
      %v3107 = vmul.f32 %v2819, %v2890
      %v3108 = vmul.f32 %v2820, %v2895
      %v3109 = vmul.f32 %v2821, %v2900
      %v3110 = vmul.f32 %v2822, %v2905
      %v3111 = vmul.f32 %v2823, %v2910
      %v3112 = vmul.f32 %v2824, %v2915
      %v3113 = vmul.f32 %v2825, %v2920
      %v3114 = vmul.f32 %v2826, %v2925
      %v3115 = vmul.f32 %v2827, %v2930
      %v3116 = vmul.f32 %v2828, %v2935
      %v3117 = vmul.f32 %v2829, %v2940
      %v3118 = vmul.f32 %v2830, %v2945
      %v3119 = vmul.f32 %v2831, %v2950
      %v3120 = vmul.f32 %v2832, %v2955
      %v3121 = vmul.f32 %v2833, %v2960
      %v3122 = vmul.f32 %v2834, %v2965
      %v3123 = vmul.f32 %v2835, %v2970
      %v3124 = vmul.f32 %v2836, %v2975
      %v3125 = vmul.f32 %v2837, %v2980
      %v3126 = vmul.f32 %v2838, %v2985
      %v3127 = vmul.f32 %v2839, %v2990
      %v3128 = vmul.f32 %v2840, %v2995
      %v3129 = vmul.f32 %v2841, %v3000
      %v3130 = vmul.f32 %v2842, %v3005
      %v3131 = vmul.f32 %v2843, %v3010
      %v3132 = vmul.f32 %v2844, %v3015
      %v3133 = vmul.f32 %v2845, %v3020
      %v3134 = vmul.f32 %v2846, %v3025
      %v3135 = vmul.f32 %v2847, %v3030
      %v3136 = vmul.f32 %v2848, %v3035
      %v3137 = vmul.f32 %v2849, %v3040
      %v3138 = vmul.f32 %v2850, %v3045
      %v3139 = vmul.f32 %v2851, %v3050
      %v3140 = vmul.f32 %v2852, %v3055
      %v3141 = vmul.f32 %v2853, %v3060
      %v3142 = vmul.f32 %v2854, %v3065
      %v3143 = vmul.f32 %v2855, %v3070
      %v3144 = vmul.f32 %v2856, %v3075
      %v3145 = vmul.f32 %v2857, %v3080
      %v3146 = vmul.f32 %v2858, %v3085
      %v3147 = vmul.f32 %v2859, %v3090
      %v3148 = vmul.f32 %v2860, %v3095
      %v3149 = vmul.f32 %v2861, %v3100
      %3150 = vst.msk [vmem:[#allocation2 + $0x19] sm:$0xff] %vm279, %v3102
      %3151 = vst.msk [vmem:[#allocation2 + $0x21] sm:$0xff] %vm279, %v3103
      %3152 = vst.msk [vmem:[#allocation2 + $0x29] sm:$0xff] %vm279, %v3104
      %3153 = vst.msk [vmem:[#allocation2 + $0x31] sm:$0xff] %vm279, %v3105
      %3154 = vst.msk [vmem:[#allocation2 + $0x39] sm:$0xff] %vm279, %v3106
      %3155 = vst.msk [vmem:[#allocation2 + $0x41] sm:$0xff] %vm279, %v3107
      %3156 = vst.msk [vmem:[#allocation2 + $0x49] sm:$0xff] %vm279, %v3108
      %3157 = vst.msk [vmem:[#allocation2 + $0x51] sm:$0xff] %vm279, %v3109
      %3158 = vst.msk [vmem:[#allocation2 + $0x59] sm:$0xff] %vm279, %v3110
      %3159 = vst.msk [vmem:[#allocation2 + $0x61] sm:$0xff] %vm279, %v3111
      %3160 = vst.msk [vmem:[#allocation2 + $0x69] sm:$0xff] %vm279, %v3112
      %3161 = vst.msk [vmem:[#allocation2 + $0x71] sm:$0xff] %vm279, %v3113
      %3162 = vst.msk [vmem:[#allocation2 + $0x79] sm:$0xff] %vm279, %v3114
      %3163 = vst.msk [vmem:[#allocation2 + $0x81] sm:$0xff] %vm279, %v3115
      %3164 = vst.msk [vmem:[#allocation2 + $0x89] sm:$0xff] %vm279, %v3116
      %3165 = vst.msk [vmem:[#allocation2 + $0x91] sm:$0xff] %vm279, %v3117
      %3166 = vst.msk [vmem:[#allocation2 + $0x99] sm:$0xff] %vm279, %v3118
      %3167 = vst.msk [vmem:[#allocation2 + $0xa1] sm:$0xff] %vm279, %v3119
      %3168 = vst.msk [vmem:[#allocation2 + $0xa9] sm:$0xff] %vm279, %v3120
      %3169 = vst.msk [vmem:[#allocation2 + $0xb1] sm:$0xff] %vm279, %v3121
      %3170 = vst.msk [vmem:[#allocation2 + $0xb9] sm:$0xff] %vm279, %v3122
      %3171 = vst.msk [vmem:[#allocation2 + $0xc1] sm:$0xff] %vm279, %v3123
      %3172 = vst.msk [vmem:[#allocation2 + $0xc9] sm:$0xff] %vm279, %v3124
      %3173 = vst.msk [vmem:[#allocation2 + $0xd1] sm:$0xff] %vm279, %v3125
      %3174 = vst.msk [vmem:[#allocation2 + $0xd9] sm:$0xff] %vm279, %v3126
      %3175 = vst.msk [vmem:[#allocation2 + $0xe1] sm:$0xff] %vm279, %v3127
      %3176 = vst.msk [vmem:[#allocation2 + $0xe9] sm:$0xff] %vm279, %v3128
      %3177 = vst.msk [vmem:[#allocation2 + $0xf1] sm:$0xff] %vm279, %v3129
      %3178 = vst.msk [vmem:[#allocation2 + $0xf9] sm:$0xff] %vm279, %v3130
      %3179 = vst.msk [vmem:[#allocation2 + $0x101] sm:$0xff] %vm279, %v3131
      %3180 = vst.msk [vmem:[#allocation2 + $0x109] sm:$0xff] %vm279, %v3132
      %3181 = vst.msk [vmem:[#allocation2 + $0x111] sm:$0xff] %vm279, %v3133
      %3182 = vst.msk [vmem:[#allocation2 + $0x119] sm:$0xff] %vm279, %v3134
      %3183 = vst.msk [vmem:[#allocation2 + $0x121] sm:$0xff] %vm279, %v3135
      %3184 = vst.msk [vmem:[#allocation2 + $0x129] sm:$0xff] %vm279, %v3136
      %3185 = vst.msk [vmem:[#allocation2 + $0x131] sm:$0xff] %vm279, %v3137
      %3186 = vst.msk [vmem:[#allocation2 + $0x139] sm:$0xff] %vm279, %v3138
      %3187 = vst.msk [vmem:[#allocation2 + $0x141] sm:$0xff] %vm279, %v3139
      %3188 = vst.msk [vmem:[#allocation2 + $0x149] sm:$0xff] %vm279, %v3140
      %3189 = vst.msk [vmem:[#allocation2 + $0x151] sm:$0xff] %vm279, %v3141
      %3190 = vst.msk [vmem:[#allocation2 + $0x159] sm:$0xff] %vm279, %v3142
      %3191 = vst.msk [vmem:[#allocation2 + $0x161] sm:$0xff] %vm279, %v3143
      %3192 = vst.msk [vmem:[#allocation2 + $0x169] sm:$0xff] %vm279, %v3144
      %3193 = vst.msk [vmem:[#allocation2 + $0x171] sm:$0xff] %vm279, %v3145
      %3194 = vst.msk [vmem:[#allocation2 + $0x179] sm:$0xff] %vm279, %v3146
      %3195 = vst.msk [vmem:[#allocation2 + $0x181] sm:$0xff] %vm279, %v3147
      %3196 = vst.msk [vmem:[#allocation2 + $0x189] sm:$0xff] %vm279, %v3148
      %3197 = vst.msk [vmem:[#allocation2 + $0x191] sm:$0xff] %vm279, %v3149
      %v3198 = vld [vmem:[#allocation2] sm:$0xff]
      %v3199 = vld [vmem:[#allocation2 + $0x8] sm:$0xff]
      %v3200 = vld [vmem:[#allocation2 + $0x10] sm:$0xff]
      %v3201 = vld [vmem:[#allocation2 + $0x18] sm:$0xff]
      %v3202 = vld [vmem:[#allocation2 + $0x20] sm:$0xff]
      %v3203 = vld [vmem:[#allocation2 + $0x28] sm:$0xff]
      %v3204 = vld [vmem:[#allocation2 + $0x30] sm:$0xff]
      %v3205 = vld [vmem:[#allocation2 + $0x38] sm:$0xff]
      %v3206 = vld [vmem:[#allocation2 + $0x40] sm:$0xff]
      %v3207 = vld [vmem:[#allocation2 + $0x48] sm:$0xff]
      %v3208 = vld [vmem:[#allocation2 + $0x50] sm:$0xff]
      %v3209 = vld [vmem:[#allocation2 + $0x58] sm:$0xff]
      %v3210 = vld [vmem:[#allocation2 + $0x60] sm:$0xff]
      %v3211 = vld [vmem:[#allocation2 + $0x68] sm:$0xff]
      %v3212 = vld [vmem:[#allocation2 + $0x70] sm:$0xff]
      %v3213 = vld [vmem:[#allocation2 + $0x78] sm:$0xff]
      %v3214 = vld [vmem:[#allocation2 + $0x80] sm:$0xff]
      %v3215 = vld [vmem:[#allocation2 + $0x88] sm:$0xff]
      %v3216 = vld [vmem:[#allocation2 + $0x90] sm:$0xff]
      %v3217 = vld [vmem:[#allocation2 + $0x98] sm:$0xff]
      %v3218 = vld [vmem:[#allocation2 + $0xa0] sm:$0xff]
      %v3219 = vld [vmem:[#allocation2 + $0xa8] sm:$0xff]
      %v3220 = vld [vmem:[#allocation2 + $0xb0] sm:$0xff]
      %v3221 = vld [vmem:[#allocation2 + $0xb8] sm:$0xff]
      %v3222 = vld [vmem:[#allocation2 + $0xc0] sm:$0xff]
      %v3223 = vld [vmem:[#allocation2 + $0xc8] sm:$0xff]
      %v3224 = vld [vmem:[#allocation2 + $0xd0] sm:$0xff]
      %v3225 = vld [vmem:[#allocation2 + $0xd8] sm:$0xff]
      %v3226 = vld [vmem:[#allocation2 + $0xe0] sm:$0xff]
      %v3227 = vld [vmem:[#allocation2 + $0xe8] sm:$0xff]
      %v3228 = vld [vmem:[#allocation2 + $0xf0] sm:$0xff]
      %v3229 = vld [vmem:[#allocation2 + $0xf8] sm:$0xff]
      %v3230 = vld [vmem:[#allocation2 + $0x100] sm:$0xff]
      %v3231 = vld [vmem:[#allocation2 + $0x108] sm:$0xff]
      %v3232 = vld [vmem:[#allocation2 + $0x110] sm:$0xff]
      %v3233 = vld [vmem:[#allocation2 + $0x118] sm:$0xff]
      %v3234 = vld [vmem:[#allocation2 + $0x120] sm:$0xff]
      %v3235 = vld [vmem:[#allocation2 + $0x128] sm:$0xff]
      %v3236 = vld [vmem:[#allocation2 + $0x130] sm:$0xff]
      %v3237 = vld [vmem:[#allocation2 + $0x138] sm:$0xff]
      %v3238 = vld [vmem:[#allocation2 + $0x140] sm:$0xff]
      %v3239 = vld [vmem:[#allocation2 + $0x148] sm:$0xff]
      %v3240 = vld [vmem:[#allocation2 + $0x150] sm:$0xff]
      %v3241 = vld [vmem:[#allocation2 + $0x158] sm:$0xff]
      %v3242 = vld [vmem:[#allocation2 + $0x160] sm:$0xff]
      %v3243 = vld [vmem:[#allocation2 + $0x168] sm:$0xff]
      %v3244 = vld [vmem:[#allocation2 + $0x170] sm:$0xff]
      %v3245 = vld [vmem:[#allocation2 + $0x178] sm:$0xff]
      %v3246 = vld [vmem:[#allocation2 + $0x1] sm:$0xff]
      %v3247 = vld [vmem:[#allocation2 + $0x9] sm:$0xff]
      %v3248 = vld [vmem:[#allocation2 + $0x11] sm:$0xff]
      %v3249 = vld [vmem:[#allocation2 + $0x19] sm:$0xff]
      %v3250 = vld [vmem:[#allocation2 + $0x21] sm:$0xff]
      %v3251 = vld [vmem:[#allocation2 + $0x29] sm:$0xff]
      %v3252 = vld [vmem:[#allocation2 + $0x31] sm:$0xff]
      %v3253 = vld [vmem:[#allocation2 + $0x39] sm:$0xff]
      %v3254 = vld [vmem:[#allocation2 + $0x41] sm:$0xff]
      %v3255 = vld [vmem:[#allocation2 + $0x49] sm:$0xff]
      %v3256 = vld [vmem:[#allocation2 + $0x51] sm:$0xff]
      %v3257 = vld [vmem:[#allocation2 + $0x59] sm:$0xff]
      %v3258 = vld [vmem:[#allocation2 + $0x61] sm:$0xff]
      %v3259 = vld [vmem:[#allocation2 + $0x69] sm:$0xff]
      %v3260 = vld [vmem:[#allocation2 + $0x71] sm:$0xff]
      %v3261 = vld [vmem:[#allocation2 + $0x79] sm:$0xff]
      %v3262 = vld [vmem:[#allocation2 + $0x81] sm:$0xff]
      %v3263 = vld [vmem:[#allocation2 + $0x89] sm:$0xff]
      %v3264 = vld [vmem:[#allocation2 + $0x91] sm:$0xff]
      %v3265 = vld [vmem:[#allocation2 + $0x99] sm:$0xff]
      %v3266 = vld [vmem:[#allocation2 + $0xa1] sm:$0xff]
      %v3267 = vld [vmem:[#allocation2 + $0xa9] sm:$0xff]
      %v3268 = vld [vmem:[#allocation2 + $0xb1] sm:$0xff]
      %v3269 = vld [vmem:[#allocation2 + $0xb9] sm:$0xff]
      %v3270 = vld [vmem:[#allocation2 + $0xc1] sm:$0xff]
      %v3271 = vld [vmem:[#allocation2 + $0xc9] sm:$0xff]
      %v3272 = vld [vmem:[#allocation2 + $0xd1] sm:$0xff]
      %v3273 = vld [vmem:[#allocation2 + $0xd9] sm:$0xff]
      %v3274 = vld [vmem:[#allocation2 + $0xe1] sm:$0xff]
      %v3275 = vld [vmem:[#allocation2 + $0xe9] sm:$0xff]
      %v3276 = vld [vmem:[#allocation2 + $0xf1] sm:$0xff]
      %v3277 = vld [vmem:[#allocation2 + $0xf9] sm:$0xff]
      %v3278 = vld [vmem:[#allocation2 + $0x101] sm:$0xff]
      %v3279 = vld [vmem:[#allocation2 + $0x109] sm:$0xff]
      %v3280 = vld [vmem:[#allocation2 + $0x111] sm:$0xff]
      %v3281 = vld [vmem:[#allocation2 + $0x119] sm:$0xff]
      %v3282 = vld [vmem:[#allocation2 + $0x121] sm:$0xff]
      %v3283 = vld [vmem:[#allocation2 + $0x129] sm:$0xff]
      %v3284 = vld [vmem:[#allocation2 + $0x131] sm:$0xff]
      %v3285 = vld [vmem:[#allocation2 + $0x139] sm:$0xff]
      %v3286 = vld [vmem:[#allocation2 + $0x141] sm:$0xff]
      %v3287 = vld [vmem:[#allocation2 + $0x149] sm:$0xff]
      %v3288 = vld [vmem:[#allocation2 + $0x151] sm:$0xff]
      %v3289 = vld [vmem:[#allocation2 + $0x159] sm:$0xff]
      %v3290 = vld [vmem:[#allocation2 + $0x161] sm:$0xff]
      %v3291 = vld [vmem:[#allocation2 + $0x169] sm:$0xff]
      %v3292 = vld [vmem:[#allocation2 + $0x171] sm:$0xff]
      %v3293 = vld [vmem:[#allocation2 + $0x179] sm:$0xff]
      %v3294 = vld [vmem:[#allocation2 + $0x2] sm:$0xff]
      %v3295 = vld [vmem:[#allocation2 + $0xa] sm:$0xff]
      %v3296 = vld [vmem:[#allocation2 + $0x12] sm:$0xff]
      %v3297 = vld [vmem:[#allocation2 + $0x1a] sm:$0xff]
      %v3298 = vld [vmem:[#allocation2 + $0x22] sm:$0xff]
      %v3299 = vld [vmem:[#allocation2 + $0x2a] sm:$0xff]
      %v3300 = vld [vmem:[#allocation2 + $0x32] sm:$0xff]
      %v3301 = vld [vmem:[#allocation2 + $0x3a] sm:$0xff]
      %v3302 = vld [vmem:[#allocation2 + $0x42] sm:$0xff]
      %v3303 = vld [vmem:[#allocation2 + $0x4a] sm:$0xff]
      %v3304 = vld [vmem:[#allocation2 + $0x52] sm:$0xff]
      %v3305 = vld [vmem:[#allocation2 + $0x5a] sm:$0xff]
      %v3306 = vld [vmem:[#allocation2 + $0x62] sm:$0xff]
      %v3307 = vld [vmem:[#allocation2 + $0x6a] sm:$0xff]
      %v3308 = vld [vmem:[#allocation2 + $0x72] sm:$0xff]
      %v3309 = vld [vmem:[#allocation2 + $0x7a] sm:$0xff]
      %v3310 = vld [vmem:[#allocation2 + $0x82] sm:$0xff]
      %v3311 = vld [vmem:[#allocation2 + $0x8a] sm:$0xff]
      %v3312 = vld [vmem:[#allocation2 + $0x92] sm:$0xff]
      %v3313 = vld [vmem:[#allocation2 + $0x9a] sm:$0xff]
      %v3314 = vld [vmem:[#allocation2 + $0xa2] sm:$0xff]
      %v3315 = vld [vmem:[#allocation2 + $0xaa] sm:$0xff]
      %v3316 = vld [vmem:[#allocation2 + $0xb2] sm:$0xff]
      %v3317 = vld [vmem:[#allocation2 + $0xba] sm:$0xff]
      %v3318 = vld [vmem:[#allocation2 + $0xc2] sm:$0xff]
      %v3319 = vld [vmem:[#allocation2 + $0xca] sm:$0xff]
      %v3320 = vld [vmem:[#allocation2 + $0xd2] sm:$0xff]
      %v3321 = vld [vmem:[#allocation2 + $0xda] sm:$0xff]
      %v3322 = vld [vmem:[#allocation2 + $0xe2] sm:$0xff]
      %v3323 = vld [vmem:[#allocation2 + $0xea] sm:$0xff]
      %v3324 = vld [vmem:[#allocation2 + $0xf2] sm:$0xff]
      %v3325 = vld [vmem:[#allocation2 + $0xfa] sm:$0xff]
      %v3326 = vld [vmem:[#allocation2 + $0x102] sm:$0xff]
      %v3327 = vld [vmem:[#allocation2 + $0x10a] sm:$0xff]
      %v3328 = vld [vmem:[#allocation2 + $0x112] sm:$0xff]
      %v3329 = vld [vmem:[#allocation2 + $0x11a] sm:$0xff]
      %v3330 = vld [vmem:[#allocation2 + $0x122] sm:$0xff]
      %v3331 = vld [vmem:[#allocation2 + $0x12a] sm:$0xff]
      %v3332 = vld [vmem:[#allocation2 + $0x132] sm:$0xff]
      %v3333 = vld [vmem:[#allocation2 + $0x13a] sm:$0xff]
      %v3334 = vld [vmem:[#allocation2 + $0x142] sm:$0xff]
      %v3335 = vld [vmem:[#allocation2 + $0x14a] sm:$0xff]
      %v3336 = vld [vmem:[#allocation2 + $0x152] sm:$0xff]
      %v3337 = vld [vmem:[#allocation2 + $0x15a] sm:$0xff]
      %v3338 = vld [vmem:[#allocation2 + $0x162] sm:$0xff]
      %v3339 = vld [vmem:[#allocation2 + $0x16a] sm:$0xff]
      %v3340 = vld [vmem:[#allocation2 + $0x172] sm:$0xff]
      %v3341 = vld [vmem:[#allocation2 + $0x17a] sm:$0xff]
      %v3342 = vld [vmem:[#allocation2 + $0x180] sm:$0xff]
      %v3343 = vld [vmem:[#allocation2 + $0x188] sm:$0xff]
      %v3344 = vld [vmem:[#allocation2 + $0x190] sm:$0xff]
      %v3345 = vld [vmem:[#allocation2 + $0x181] sm:$0xff]
      %v3346 = vld [vmem:[#allocation2 + $0x189] sm:$0xff]
      %v3347 = vld [vmem:[#allocation2 + $0x191] sm:$0xff]
      %v3348 = vld [vmem:[#allocation2 + $0x182] sm:$0xff]
      %v3349 = vld [vmem:[#allocation2 + $0x18a] sm:$0xff]
      %v3350 = vld [vmem:[#allocation2 + $0x192] sm:$0xff]
      %v3351 = vld [vmem:[#allocation2 + $0x198] sm:$0xff]
      %v3352 = vld [vmem:[#allocation2 + $0x1a0] sm:$0xff]
      %v3353 = vld [vmem:[#allocation2 + $0x1a8] sm:$0xff]
      %v3354 = vld [vmem:[#allocation2 + $0x199] sm:$0xff]
      %v3355 = vld [vmem:[#allocation2 + $0x1a1] sm:$0xff]
      %v3356 = vld [vmem:[#allocation2 + $0x1a9] sm:$0xff]
      %v3357 = vld [vmem:[#allocation2 + $0x19a] sm:$0xff]
      %v3358 = vld [vmem:[#allocation2 + $0x1a2] sm:$0xff]
      %v3359 = vld [vmem:[#allocation2 + $0x1aa] sm:$0xff]
      %3408 = vrot.lane.b32.xlu0 %v3246, 8
      %v3409 = vpop.permute.xlu0 %3408
      %3410 = vrot.lane.b32.xlu0 %v3247, 8
      %v3411 = vpop.permute.xlu0 %3410
      %3412 = vrot.lane.b32.xlu0 %v3248, 8
      %v3413 = vpop.permute.xlu0 %3412
      %3414 = vrot.lane.b32.xlu0 %v3249, 8
      %v3415 = vpop.permute.xlu0 %3414
      %3416 = vrot.lane.b32.xlu0 %v3250, 8
      %v3417 = vpop.permute.xlu0 %3416
      %3418 = vrot.lane.b32.xlu0 %v3251, 8
      %v3419 = vpop.permute.xlu0 %3418
      %3420 = vrot.lane.b32.xlu0 %v3252, 8
      %v3421 = vpop.permute.xlu0 %3420
      %3422 = vrot.lane.b32.xlu0 %v3253, 8
      %v3423 = vpop.permute.xlu0 %3422
      %3424 = vrot.lane.b32.xlu0 %v3254, 8
      %v3425 = vpop.permute.xlu0 %3424
      %3426 = vrot.lane.b32.xlu0 %v3255, 8
      %v3427 = vpop.permute.xlu0 %3426
      %3428 = vrot.lane.b32.xlu0 %v3256, 8
      %v3429 = vpop.permute.xlu0 %3428
      %3430 = vrot.lane.b32.xlu0 %v3257, 8
      %v3431 = vpop.permute.xlu0 %3430
      %3432 = vrot.lane.b32.xlu0 %v3258, 8
      %v3433 = vpop.permute.xlu0 %3432
      %3434 = vrot.lane.b32.xlu0 %v3259, 8
      %v3435 = vpop.permute.xlu0 %3434
      %3436 = vrot.lane.b32.xlu0 %v3260, 8
      %v3437 = vpop.permute.xlu0 %3436
      %3438 = vrot.lane.b32.xlu0 %v3261, 8
      %v3439 = vpop.permute.xlu0 %3438
      %3440 = vrot.lane.b32.xlu0 %v3262, 8
      %v3441 = vpop.permute.xlu0 %3440
      %3442 = vrot.lane.b32.xlu0 %v3263, 8
      %v3443 = vpop.permute.xlu0 %3442
      %3444 = vrot.lane.b32.xlu0 %v3264, 8
      %v3445 = vpop.permute.xlu0 %3444
      %3446 = vrot.lane.b32.xlu0 %v3265, 8
      %v3447 = vpop.permute.xlu0 %3446
      %3448 = vrot.lane.b32.xlu0 %v3266, 8
      %v3449 = vpop.permute.xlu0 %3448
      %3450 = vrot.lane.b32.xlu0 %v3267, 8
      %v3451 = vpop.permute.xlu0 %3450
      %3452 = vrot.lane.b32.xlu0 %v3268, 8
      %v3453 = vpop.permute.xlu0 %3452
      %3454 = vrot.lane.b32.xlu0 %v3269, 8
      %v3455 = vpop.permute.xlu0 %3454
      %3456 = vrot.lane.b32.xlu0 %v3270, 8
      %v3457 = vpop.permute.xlu0 %3456
      %3458 = vrot.lane.b32.xlu0 %v3271, 8
      %v3459 = vpop.permute.xlu0 %3458
      %3460 = vrot.lane.b32.xlu0 %v3272, 8
      %v3461 = vpop.permute.xlu0 %3460
      %3462 = vrot.lane.b32.xlu0 %v3273, 8
      %v3463 = vpop.permute.xlu0 %3462
      %3464 = vrot.lane.b32.xlu0 %v3274, 8
      %v3465 = vpop.permute.xlu0 %3464
      %3466 = vrot.lane.b32.xlu0 %v3275, 8
      %v3467 = vpop.permute.xlu0 %3466
      %3468 = vrot.lane.b32.xlu0 %v3276, 8
      %v3469 = vpop.permute.xlu0 %3468
      %3470 = vrot.lane.b32.xlu0 %v3277, 8
      %v3471 = vpop.permute.xlu0 %3470
      %3472 = vrot.lane.b32.xlu0 %v3278, 8
      %v3473 = vpop.permute.xlu0 %3472
      %3474 = vrot.lane.b32.xlu0 %v3279, 8
      %v3475 = vpop.permute.xlu0 %3474
      %3476 = vrot.lane.b32.xlu0 %v3280, 8
      %v3477 = vpop.permute.xlu0 %3476
      %3478 = vrot.lane.b32.xlu0 %v3281, 8
      %v3479 = vpop.permute.xlu0 %3478
      %3480 = vrot.lane.b32.xlu0 %v3282, 8
      %v3481 = vpop.permute.xlu0 %3480
      %3482 = vrot.lane.b32.xlu0 %v3283, 8
      %v3483 = vpop.permute.xlu0 %3482
      %3484 = vrot.lane.b32.xlu0 %v3284, 8
      %v3485 = vpop.permute.xlu0 %3484
      %3486 = vrot.lane.b32.xlu0 %v3285, 8
      %v3487 = vpop.permute.xlu0 %3486
      %3488 = vrot.lane.b32.xlu0 %v3286, 8
      %v3489 = vpop.permute.xlu0 %3488
      %3490 = vrot.lane.b32.xlu0 %v3287, 8
      %v3491 = vpop.permute.xlu0 %3490
      %3492 = vrot.lane.b32.xlu0 %v3288, 8
      %v3493 = vpop.permute.xlu0 %3492
      %3494 = vrot.lane.b32.xlu0 %v3289, 8
      %v3495 = vpop.permute.xlu0 %3494
      %3496 = vrot.lane.b32.xlu0 %v3290, 8
      %v3497 = vpop.permute.xlu0 %3496
      %3498 = vrot.lane.b32.xlu0 %v3291, 8
      %v3499 = vpop.permute.xlu0 %3498
      %3500 = vrot.lane.b32.xlu0 %v3292, 8
      %v3501 = vpop.permute.xlu0 %3500
      %3502 = vrot.lane.b32.xlu0 %v3293, 8
      %v3503 = vpop.permute.xlu0 %3502
      %3600 = vrot.lane.b32.xlu0 %v3294, 16
      %v3601 = vpop.permute.xlu0 %3600
      %3602 = vrot.lane.b32.xlu0 %v3295, 16
      %v3603 = vpop.permute.xlu0 %3602
      %3604 = vrot.lane.b32.xlu0 %v3296, 16
      %v3605 = vpop.permute.xlu0 %3604
      %3606 = vrot.lane.b32.xlu0 %v3297, 16
      %v3607 = vpop.permute.xlu0 %3606
      %3608 = vrot.lane.b32.xlu0 %v3298, 16
      %v3609 = vpop.permute.xlu0 %3608
      %3610 = vrot.lane.b32.xlu0 %v3299, 16
      %v3611 = vpop.permute.xlu0 %3610
      %3612 = vrot.lane.b32.xlu0 %v3300, 16
      %v3613 = vpop.permute.xlu0 %3612
      %3614 = vrot.lane.b32.xlu0 %v3301, 16
      %v3615 = vpop.permute.xlu0 %3614
      %3616 = vrot.lane.b32.xlu0 %v3302, 16
      %v3617 = vpop.permute.xlu0 %3616
      %3618 = vrot.lane.b32.xlu0 %v3303, 16
      %v3619 = vpop.permute.xlu0 %3618
      %3620 = vrot.lane.b32.xlu0 %v3304, 16
      %v3621 = vpop.permute.xlu0 %3620
      %3622 = vrot.lane.b32.xlu0 %v3305, 16
      %v3623 = vpop.permute.xlu0 %3622
      %3624 = vrot.lane.b32.xlu0 %v3306, 16
      %v3625 = vpop.permute.xlu0 %3624
      %3626 = vrot.lane.b32.xlu0 %v3307, 16
      %v3627 = vpop.permute.xlu0 %3626
      %3628 = vrot.lane.b32.xlu0 %v3308, 16
      %v3629 = vpop.permute.xlu0 %3628
      %3630 = vrot.lane.b32.xlu0 %v3309, 16
      %v3631 = vpop.permute.xlu0 %3630
      %3632 = vrot.lane.b32.xlu0 %v3310, 16
      %v3633 = vpop.permute.xlu0 %3632
      %3634 = vrot.lane.b32.xlu0 %v3311, 16
      %v3635 = vpop.permute.xlu0 %3634
      %3636 = vrot.lane.b32.xlu0 %v3312, 16
      %v3637 = vpop.permute.xlu0 %3636
      %3638 = vrot.lane.b32.xlu0 %v3313, 16
      %v3639 = vpop.permute.xlu0 %3638
      %3640 = vrot.lane.b32.xlu0 %v3314, 16
      %v3641 = vpop.permute.xlu0 %3640
      %3642 = vrot.lane.b32.xlu0 %v3315, 16
      %v3643 = vpop.permute.xlu0 %3642
      %3644 = vrot.lane.b32.xlu0 %v3316, 16
      %v3645 = vpop.permute.xlu0 %3644
      %3646 = vrot.lane.b32.xlu0 %v3317, 16
      %v3647 = vpop.permute.xlu0 %3646
      %3648 = vrot.lane.b32.xlu0 %v3318, 16
      %v3649 = vpop.permute.xlu0 %3648
      %3650 = vrot.lane.b32.xlu0 %v3319, 16
      %v3651 = vpop.permute.xlu0 %3650
      %3652 = vrot.lane.b32.xlu0 %v3320, 16
      %v3653 = vpop.permute.xlu0 %3652
      %3654 = vrot.lane.b32.xlu0 %v3321, 16
      %v3655 = vpop.permute.xlu0 %3654
      %3656 = vrot.lane.b32.xlu0 %v3322, 16
      %v3657 = vpop.permute.xlu0 %3656
      %3658 = vrot.lane.b32.xlu0 %v3323, 16
      %v3659 = vpop.permute.xlu0 %3658
      %3660 = vrot.lane.b32.xlu0 %v3324, 16
      %v3661 = vpop.permute.xlu0 %3660
      %3662 = vrot.lane.b32.xlu0 %v3325, 16
      %v3663 = vpop.permute.xlu0 %3662
      %3664 = vrot.lane.b32.xlu0 %v3326, 16
      %v3665 = vpop.permute.xlu0 %3664
      %3666 = vrot.lane.b32.xlu0 %v3327, 16
      %v3667 = vpop.permute.xlu0 %3666
      %3668 = vrot.lane.b32.xlu0 %v3328, 16
      %v3669 = vpop.permute.xlu0 %3668
      %3670 = vrot.lane.b32.xlu0 %v3329, 16
      %v3671 = vpop.permute.xlu0 %3670
      %3672 = vrot.lane.b32.xlu0 %v3330, 16
      %v3673 = vpop.permute.xlu0 %3672
      %3674 = vrot.lane.b32.xlu0 %v3331, 16
      %v3675 = vpop.permute.xlu0 %3674
      %3676 = vrot.lane.b32.xlu0 %v3332, 16
      %v3677 = vpop.permute.xlu0 %3676
      %3678 = vrot.lane.b32.xlu0 %v3333, 16
      %v3679 = vpop.permute.xlu0 %3678
      %3680 = vrot.lane.b32.xlu0 %v3334, 16
      %v3681 = vpop.permute.xlu0 %3680
      %3682 = vrot.lane.b32.xlu0 %v3335, 16
      %v3683 = vpop.permute.xlu0 %3682
      %3684 = vrot.lane.b32.xlu0 %v3336, 16
      %v3685 = vpop.permute.xlu0 %3684
      %3686 = vrot.lane.b32.xlu0 %v3337, 16
      %v3687 = vpop.permute.xlu0 %3686
      %3688 = vrot.lane.b32.xlu0 %v3338, 16
      %v3689 = vpop.permute.xlu0 %3688
      %3690 = vrot.lane.b32.xlu0 %v3339, 16
      %v3691 = vpop.permute.xlu0 %3690
      %3692 = vrot.lane.b32.xlu0 %v3340, 16
      %v3693 = vpop.permute.xlu0 %3692
      %3694 = vrot.lane.b32.xlu0 %v3341, 16
      %v3695 = vpop.permute.xlu0 %3694
      %3792 = vrot.lane.b32.xlu0 %v3201, 24
      %v3793 = vpop.permute.xlu0 %3792
      %3794 = vrot.lane.b32.xlu0 %v3202, 24
      %v3795 = vpop.permute.xlu0 %3794
      %3796 = vrot.lane.b32.xlu0 %v3203, 24
      %v3797 = vpop.permute.xlu0 %3796
      %3798 = vrot.lane.b32.xlu0 %v3204, 24
      %v3799 = vpop.permute.xlu0 %3798
      %3800 = vrot.lane.b32.xlu0 %v3205, 24
      %v3801 = vpop.permute.xlu0 %3800
      %3802 = vrot.lane.b32.xlu0 %v3206, 24
      %v3803 = vpop.permute.xlu0 %3802
      %3804 = vrot.lane.b32.xlu0 %v3207, 24
      %v3805 = vpop.permute.xlu0 %3804
      %3806 = vrot.lane.b32.xlu0 %v3208, 24
      %v3807 = vpop.permute.xlu0 %3806
      %3808 = vrot.lane.b32.xlu0 %v3209, 24
      %v3809 = vpop.permute.xlu0 %3808
      %3810 = vrot.lane.b32.xlu0 %v3210, 24
      %v3811 = vpop.permute.xlu0 %3810
      %3812 = vrot.lane.b32.xlu0 %v3211, 24
      %v3813 = vpop.permute.xlu0 %3812
      %3814 = vrot.lane.b32.xlu0 %v3212, 24
      %v3815 = vpop.permute.xlu0 %3814
      %3816 = vrot.lane.b32.xlu0 %v3213, 24
      %v3817 = vpop.permute.xlu0 %3816
      %3818 = vrot.lane.b32.xlu0 %v3214, 24
      %v3819 = vpop.permute.xlu0 %3818
      %3820 = vrot.lane.b32.xlu0 %v3215, 24
      %v3821 = vpop.permute.xlu0 %3820
      %3822 = vrot.lane.b32.xlu0 %v3216, 24
      %v3823 = vpop.permute.xlu0 %3822
      %3824 = vrot.lane.b32.xlu0 %v3217, 24
      %v3825 = vpop.permute.xlu0 %3824
      %3826 = vrot.lane.b32.xlu0 %v3218, 24
      %v3827 = vpop.permute.xlu0 %3826
      %3828 = vrot.lane.b32.xlu0 %v3219, 24
      %v3829 = vpop.permute.xlu0 %3828
      %3830 = vrot.lane.b32.xlu0 %v3220, 24
      %v3831 = vpop.permute.xlu0 %3830
      %3832 = vrot.lane.b32.xlu0 %v3221, 24
      %v3833 = vpop.permute.xlu0 %3832
      %3834 = vrot.lane.b32.xlu0 %v3222, 24
      %v3835 = vpop.permute.xlu0 %3834
      %3836 = vrot.lane.b32.xlu0 %v3223, 24
      %v3837 = vpop.permute.xlu0 %3836
      %3838 = vrot.lane.b32.xlu0 %v3224, 24
      %v3839 = vpop.permute.xlu0 %3838
      %3840 = vrot.lane.b32.xlu0 %v3225, 24
      %v3841 = vpop.permute.xlu0 %3840
      %3842 = vrot.lane.b32.xlu0 %v3226, 24
      %v3843 = vpop.permute.xlu0 %3842
      %3844 = vrot.lane.b32.xlu0 %v3227, 24
      %v3845 = vpop.permute.xlu0 %3844
      %3846 = vrot.lane.b32.xlu0 %v3228, 24
      %v3847 = vpop.permute.xlu0 %3846
      %3848 = vrot.lane.b32.xlu0 %v3229, 24
      %v3849 = vpop.permute.xlu0 %3848
      %3850 = vrot.lane.b32.xlu0 %v3230, 24
      %v3851 = vpop.permute.xlu0 %3850
      %3852 = vrot.lane.b32.xlu0 %v3231, 24
      %v3853 = vpop.permute.xlu0 %3852
      %3854 = vrot.lane.b32.xlu0 %v3232, 24
      %v3855 = vpop.permute.xlu0 %3854
      %3856 = vrot.lane.b32.xlu0 %v3233, 24
      %v3857 = vpop.permute.xlu0 %3856
      %3858 = vrot.lane.b32.xlu0 %v3234, 24
      %v3859 = vpop.permute.xlu0 %3858
      %3860 = vrot.lane.b32.xlu0 %v3235, 24
      %v3861 = vpop.permute.xlu0 %3860
      %3862 = vrot.lane.b32.xlu0 %v3236, 24
      %v3863 = vpop.permute.xlu0 %3862
      %3864 = vrot.lane.b32.xlu0 %v3237, 24
      %v3865 = vpop.permute.xlu0 %3864
      %3866 = vrot.lane.b32.xlu0 %v3238, 24
      %v3867 = vpop.permute.xlu0 %3866
      %3868 = vrot.lane.b32.xlu0 %v3239, 24
      %v3869 = vpop.permute.xlu0 %3868
      %3870 = vrot.lane.b32.xlu0 %v3240, 24
      %v3871 = vpop.permute.xlu0 %3870
      %3872 = vrot.lane.b32.xlu0 %v3241, 24
      %v3873 = vpop.permute.xlu0 %3872
      %3874 = vrot.lane.b32.xlu0 %v3242, 24
      %v3875 = vpop.permute.xlu0 %3874
      %3876 = vrot.lane.b32.xlu0 %v3243, 24
      %v3877 = vpop.permute.xlu0 %3876
      %3878 = vrot.lane.b32.xlu0 %v3244, 24
      %v3879 = vpop.permute.xlu0 %3878
      %3880 = vrot.lane.b32.xlu0 %v3245, 24
      %v3881 = vpop.permute.xlu0 %3880
      %3882 = vrot.lane.b32.xlu0 %v3342, 24
      %v3883 = vpop.permute.xlu0 %3882
      %3884 = vrot.lane.b32.xlu0 %v3343, 24
      %v3885 = vpop.permute.xlu0 %3884
      %3886 = vrot.lane.b32.xlu0 %v3344, 24
      %v3887 = vpop.permute.xlu0 %3886
      %3939 = vrot.lane.b32.xlu0 %v3249, 32
      %v3940 = vpop.permute.xlu0 %3939
      %3941 = vrot.lane.b32.xlu0 %v3250, 32
      %v3942 = vpop.permute.xlu0 %3941
      %3943 = vrot.lane.b32.xlu0 %v3251, 32
      %v3944 = vpop.permute.xlu0 %3943
      %3945 = vrot.lane.b32.xlu0 %v3252, 32
      %v3946 = vpop.permute.xlu0 %3945
      %3947 = vrot.lane.b32.xlu0 %v3253, 32
      %v3948 = vpop.permute.xlu0 %3947
      %3949 = vrot.lane.b32.xlu0 %v3254, 32
      %v3950 = vpop.permute.xlu0 %3949
      %3951 = vrot.lane.b32.xlu0 %v3255, 32
      %v3952 = vpop.permute.xlu0 %3951
      %3953 = vrot.lane.b32.xlu0 %v3256, 32
      %v3954 = vpop.permute.xlu0 %3953
      %3955 = vrot.lane.b32.xlu0 %v3257, 32
      %v3956 = vpop.permute.xlu0 %3955
      %3957 = vrot.lane.b32.xlu0 %v3258, 32
      %v3958 = vpop.permute.xlu0 %3957
      %3959 = vrot.lane.b32.xlu0 %v3259, 32
      %v3960 = vpop.permute.xlu0 %3959
      %3961 = vrot.lane.b32.xlu0 %v3260, 32
      %v3962 = vpop.permute.xlu0 %3961
      %3963 = vrot.lane.b32.xlu0 %v3261, 32
      %v3964 = vpop.permute.xlu0 %3963
      %3965 = vrot.lane.b32.xlu0 %v3262, 32
      %v3966 = vpop.permute.xlu0 %3965
      %3967 = vrot.lane.b32.xlu0 %v3263, 32
      %v3968 = vpop.permute.xlu0 %3967
      %3969 = vrot.lane.b32.xlu0 %v3264, 32
      %v3970 = vpop.permute.xlu0 %3969
      %3971 = vrot.lane.b32.xlu0 %v3265, 32
      %v3972 = vpop.permute.xlu0 %3971
      %3973 = vrot.lane.b32.xlu0 %v3266, 32
      %v3974 = vpop.permute.xlu0 %3973
      %3975 = vrot.lane.b32.xlu0 %v3267, 32
      %v3976 = vpop.permute.xlu0 %3975
      %3977 = vrot.lane.b32.xlu0 %v3268, 32
      %v3978 = vpop.permute.xlu0 %3977
      %3979 = vrot.lane.b32.xlu0 %v3269, 32
      %v3980 = vpop.permute.xlu0 %3979
      %3981 = vrot.lane.b32.xlu0 %v3270, 32
      %v3982 = vpop.permute.xlu0 %3981
      %3983 = vrot.lane.b32.xlu0 %v3271, 32
      %v3984 = vpop.permute.xlu0 %3983
      %3985 = vrot.lane.b32.xlu0 %v3272, 32
      %v3986 = vpop.permute.xlu0 %3985
      %3987 = vrot.lane.b32.xlu0 %v3273, 32
      %v3988 = vpop.permute.xlu0 %3987
      %3989 = vrot.lane.b32.xlu0 %v3274, 32
      %v3990 = vpop.permute.xlu0 %3989
      %3991 = vrot.lane.b32.xlu0 %v3275, 32
      %v3992 = vpop.permute.xlu0 %3991
      %3993 = vrot.lane.b32.xlu0 %v3276, 32
      %v3994 = vpop.permute.xlu0 %3993
      %3995 = vrot.lane.b32.xlu0 %v3277, 32
      %v3996 = vpop.permute.xlu0 %3995
      %3997 = vrot.lane.b32.xlu0 %v3278, 32
      %v3998 = vpop.permute.xlu0 %3997
      %3999 = vrot.lane.b32.xlu0 %v3279, 32
      %v4000 = vpop.permute.xlu0 %3999
      %4001 = vrot.lane.b32.xlu0 %v3280, 32
      %v4002 = vpop.permute.xlu0 %4001
      %4003 = vrot.lane.b32.xlu0 %v3281, 32
      %v4004 = vpop.permute.xlu0 %4003
      %4005 = vrot.lane.b32.xlu0 %v3282, 32
      %v4006 = vpop.permute.xlu0 %4005
      %4007 = vrot.lane.b32.xlu0 %v3283, 32
      %v4008 = vpop.permute.xlu0 %4007
      %4009 = vrot.lane.b32.xlu0 %v3284, 32
      %v4010 = vpop.permute.xlu0 %4009
      %4011 = vrot.lane.b32.xlu0 %v3285, 32
      %v4012 = vpop.permute.xlu0 %4011
      %4013 = vrot.lane.b32.xlu0 %v3286, 32
      %v4014 = vpop.permute.xlu0 %4013
      %4015 = vrot.lane.b32.xlu0 %v3287, 32
      %v4016 = vpop.permute.xlu0 %4015
      %4017 = vrot.lane.b32.xlu0 %v3288, 32
      %v4018 = vpop.permute.xlu0 %4017
      %4019 = vrot.lane.b32.xlu0 %v3289, 32
      %v4020 = vpop.permute.xlu0 %4019
      %4021 = vrot.lane.b32.xlu0 %v3290, 32
      %v4022 = vpop.permute.xlu0 %4021
      %4023 = vrot.lane.b32.xlu0 %v3291, 32
      %v4024 = vpop.permute.xlu0 %4023
      %4025 = vrot.lane.b32.xlu0 %v3292, 32
      %v4026 = vpop.permute.xlu0 %4025
      %4027 = vrot.lane.b32.xlu0 %v3293, 32
      %v4028 = vpop.permute.xlu0 %4027
      %4029 = vrot.lane.b32.xlu0 %v3345, 32
      %v4030 = vpop.permute.xlu0 %4029
      %4031 = vrot.lane.b32.xlu0 %v3346, 32
      %v4032 = vpop.permute.xlu0 %4031
      %4033 = vrot.lane.b32.xlu0 %v3347, 32
      %v4034 = vpop.permute.xlu0 %4033
      %4086 = vrot.lane.b32.xlu0 %v3297, 40
      %v4087 = vpop.permute.xlu0 %4086
      %4088 = vrot.lane.b32.xlu0 %v3298, 40
      %v4089 = vpop.permute.xlu0 %4088
      %4090 = vrot.lane.b32.xlu0 %v3299, 40
      %v4091 = vpop.permute.xlu0 %4090
      %4092 = vrot.lane.b32.xlu0 %v3300, 40
      %v4093 = vpop.permute.xlu0 %4092
      %4094 = vrot.lane.b32.xlu0 %v3301, 40
      %v4095 = vpop.permute.xlu0 %4094
      %4096 = vrot.lane.b32.xlu0 %v3302, 40
      %v4097 = vpop.permute.xlu0 %4096
      %4098 = vrot.lane.b32.xlu0 %v3303, 40
      %v4099 = vpop.permute.xlu0 %4098
      %4100 = vrot.lane.b32.xlu0 %v3304, 40
      %v4101 = vpop.permute.xlu0 %4100
      %4102 = vrot.lane.b32.xlu0 %v3305, 40
      %v4103 = vpop.permute.xlu0 %4102
      %4104 = vrot.lane.b32.xlu0 %v3306, 40
      %v4105 = vpop.permute.xlu0 %4104
      %4106 = vrot.lane.b32.xlu0 %v3307, 40
      %v4107 = vpop.permute.xlu0 %4106
      %4108 = vrot.lane.b32.xlu0 %v3308, 40
      %v4109 = vpop.permute.xlu0 %4108
      %4110 = vrot.lane.b32.xlu0 %v3309, 40
      %v4111 = vpop.permute.xlu0 %4110
      %4112 = vrot.lane.b32.xlu0 %v3310, 40
      %v4113 = vpop.permute.xlu0 %4112
      %4114 = vrot.lane.b32.xlu0 %v3311, 40
      %v4115 = vpop.permute.xlu0 %4114
      %4116 = vrot.lane.b32.xlu0 %v3312, 40
      %v4117 = vpop.permute.xlu0 %4116
      %4118 = vrot.lane.b32.xlu0 %v3313, 40
      %v4119 = vpop.permute.xlu0 %4118
      %4120 = vrot.lane.b32.xlu0 %v3314, 40
      %v4121 = vpop.permute.xlu0 %4120
      %4122 = vrot.lane.b32.xlu0 %v3315, 40
      %v4123 = vpop.permute.xlu0 %4122
      %4124 = vrot.lane.b32.xlu0 %v3316, 40
      %v4125 = vpop.permute.xlu0 %4124
      %4126 = vrot.lane.b32.xlu0 %v3317, 40
      %v4127 = vpop.permute.xlu0 %4126
      %4128 = vrot.lane.b32.xlu0 %v3318, 40
      %v4129 = vpop.permute.xlu0 %4128
      %4130 = vrot.lane.b32.xlu0 %v3319, 40
      %v4131 = vpop.permute.xlu0 %4130
      %4132 = vrot.lane.b32.xlu0 %v3320, 40
      %v4133 = vpop.permute.xlu0 %4132
      %4134 = vrot.lane.b32.xlu0 %v3321, 40
      %v4135 = vpop.permute.xlu0 %4134
      %4136 = vrot.lane.b32.xlu0 %v3322, 40
      %v4137 = vpop.permute.xlu0 %4136
      %4138 = vrot.lane.b32.xlu0 %v3323, 40
      %v4139 = vpop.permute.xlu0 %4138
      %4140 = vrot.lane.b32.xlu0 %v3324, 40
      %v4141 = vpop.permute.xlu0 %4140
      %4142 = vrot.lane.b32.xlu0 %v3325, 40
      %v4143 = vpop.permute.xlu0 %4142
      %4144 = vrot.lane.b32.xlu0 %v3326, 40
      %v4145 = vpop.permute.xlu0 %4144
      %4146 = vrot.lane.b32.xlu0 %v3327, 40
      %v4147 = vpop.permute.xlu0 %4146
      %4148 = vrot.lane.b32.xlu0 %v3328, 40
      %v4149 = vpop.permute.xlu0 %4148
      %4150 = vrot.lane.b32.xlu0 %v3329, 40
      %v4151 = vpop.permute.xlu0 %4150
      %4152 = vrot.lane.b32.xlu0 %v3330, 40
      %v4153 = vpop.permute.xlu0 %4152
      %4154 = vrot.lane.b32.xlu0 %v3331, 40
      %v4155 = vpop.permute.xlu0 %4154
      %4156 = vrot.lane.b32.xlu0 %v3332, 40
      %v4157 = vpop.permute.xlu0 %4156
      %4158 = vrot.lane.b32.xlu0 %v3333, 40
      %v4159 = vpop.permute.xlu0 %4158
      %4160 = vrot.lane.b32.xlu0 %v3334, 40
      %v4161 = vpop.permute.xlu0 %4160
      %4162 = vrot.lane.b32.xlu0 %v3335, 40
      %v4163 = vpop.permute.xlu0 %4162
      %4164 = vrot.lane.b32.xlu0 %v3336, 40
      %v4165 = vpop.permute.xlu0 %4164
      %4166 = vrot.lane.b32.xlu0 %v3337, 40
      %v4167 = vpop.permute.xlu0 %4166
      %4168 = vrot.lane.b32.xlu0 %v3338, 40
      %v4169 = vpop.permute.xlu0 %4168
      %4170 = vrot.lane.b32.xlu0 %v3339, 40
      %v4171 = vpop.permute.xlu0 %4170
      %4172 = vrot.lane.b32.xlu0 %v3340, 40
      %v4173 = vpop.permute.xlu0 %4172
      %4174 = vrot.lane.b32.xlu0 %v3341, 40
      %v4175 = vpop.permute.xlu0 %4174
      %4176 = vrot.lane.b32.xlu0 %v3348, 40
      %v4177 = vpop.permute.xlu0 %4176
      %4178 = vrot.lane.b32.xlu0 %v3349, 40
      %v4179 = vpop.permute.xlu0 %4178
      %4180 = vrot.lane.b32.xlu0 %v3350, 40
      %v4181 = vpop.permute.xlu0 %4180
      %4233 = vrot.lane.b32.xlu0 %v3204, 48
      %v4234 = vpop.permute.xlu0 %4233
      %4235 = vrot.lane.b32.xlu0 %v3205, 48
      %v4236 = vpop.permute.xlu0 %4235
      %4237 = vrot.lane.b32.xlu0 %v3206, 48
      %v4238 = vpop.permute.xlu0 %4237
      %4239 = vrot.lane.b32.xlu0 %v3207, 48
      %v4240 = vpop.permute.xlu0 %4239
      %4241 = vrot.lane.b32.xlu0 %v3208, 48
      %v4242 = vpop.permute.xlu0 %4241
      %4243 = vrot.lane.b32.xlu0 %v3209, 48
      %v4244 = vpop.permute.xlu0 %4243
      %4245 = vrot.lane.b32.xlu0 %v3210, 48
      %v4246 = vpop.permute.xlu0 %4245
      %4247 = vrot.lane.b32.xlu0 %v3211, 48
      %v4248 = vpop.permute.xlu0 %4247
      %4249 = vrot.lane.b32.xlu0 %v3212, 48
      %v4250 = vpop.permute.xlu0 %4249
      %4251 = vrot.lane.b32.xlu0 %v3213, 48
      %v4252 = vpop.permute.xlu0 %4251
      %4253 = vrot.lane.b32.xlu0 %v3214, 48
      %v4254 = vpop.permute.xlu0 %4253
      %4255 = vrot.lane.b32.xlu0 %v3215, 48
      %v4256 = vpop.permute.xlu0 %4255
      %4257 = vrot.lane.b32.xlu0 %v3216, 48
      %v4258 = vpop.permute.xlu0 %4257
      %4259 = vrot.lane.b32.xlu0 %v3217, 48
      %v4260 = vpop.permute.xlu0 %4259
      %4261 = vrot.lane.b32.xlu0 %v3218, 48
      %v4262 = vpop.permute.xlu0 %4261
      %4263 = vrot.lane.b32.xlu0 %v3219, 48
      %v4264 = vpop.permute.xlu0 %4263
      %4265 = vrot.lane.b32.xlu0 %v3220, 48
      %v4266 = vpop.permute.xlu0 %4265
      %4267 = vrot.lane.b32.xlu0 %v3221, 48
      %v4268 = vpop.permute.xlu0 %4267
      %4269 = vrot.lane.b32.xlu0 %v3222, 48
      %v4270 = vpop.permute.xlu0 %4269
      %4271 = vrot.lane.b32.xlu0 %v3223, 48
      %v4272 = vpop.permute.xlu0 %4271
      %4273 = vrot.lane.b32.xlu0 %v3224, 48
      %v4274 = vpop.permute.xlu0 %4273
      %4275 = vrot.lane.b32.xlu0 %v3225, 48
      %v4276 = vpop.permute.xlu0 %4275
      %4277 = vrot.lane.b32.xlu0 %v3226, 48
      %v4278 = vpop.permute.xlu0 %4277
      %4279 = vrot.lane.b32.xlu0 %v3227, 48
      %v4280 = vpop.permute.xlu0 %4279
      %4281 = vrot.lane.b32.xlu0 %v3228, 48
      %v4282 = vpop.permute.xlu0 %4281
      %4283 = vrot.lane.b32.xlu0 %v3229, 48
      %v4284 = vpop.permute.xlu0 %4283
      %4285 = vrot.lane.b32.xlu0 %v3230, 48
      %v4286 = vpop.permute.xlu0 %4285
      %4287 = vrot.lane.b32.xlu0 %v3231, 48
      %v4288 = vpop.permute.xlu0 %4287
      %4289 = vrot.lane.b32.xlu0 %v3232, 48
      %v4290 = vpop.permute.xlu0 %4289
      %4291 = vrot.lane.b32.xlu0 %v3233, 48
      %v4292 = vpop.permute.xlu0 %4291
      %4293 = vrot.lane.b32.xlu0 %v3234, 48
      %v4294 = vpop.permute.xlu0 %4293
      %4295 = vrot.lane.b32.xlu0 %v3235, 48
      %v4296 = vpop.permute.xlu0 %4295
      %4297 = vrot.lane.b32.xlu0 %v3236, 48
      %v4298 = vpop.permute.xlu0 %4297
      %4299 = vrot.lane.b32.xlu0 %v3237, 48
      %v4300 = vpop.permute.xlu0 %4299
      %4301 = vrot.lane.b32.xlu0 %v3238, 48
      %v4302 = vpop.permute.xlu0 %4301
      %4303 = vrot.lane.b32.xlu0 %v3239, 48
      %v4304 = vpop.permute.xlu0 %4303
      %4305 = vrot.lane.b32.xlu0 %v3240, 48
      %v4306 = vpop.permute.xlu0 %4305
      %4307 = vrot.lane.b32.xlu0 %v3241, 48
      %v4308 = vpop.permute.xlu0 %4307
      %4309 = vrot.lane.b32.xlu0 %v3242, 48
      %v4310 = vpop.permute.xlu0 %4309
      %4311 = vrot.lane.b32.xlu0 %v3243, 48
      %v4312 = vpop.permute.xlu0 %4311
      %4313 = vrot.lane.b32.xlu0 %v3244, 48
      %v4314 = vpop.permute.xlu0 %4313
      %4315 = vrot.lane.b32.xlu0 %v3245, 48
      %v4316 = vpop.permute.xlu0 %4315
      %4317 = vrot.lane.b32.xlu0 %v3342, 48
      %v4318 = vpop.permute.xlu0 %4317
      %4319 = vrot.lane.b32.xlu0 %v3343, 48
      %v4320 = vpop.permute.xlu0 %4319
      %4321 = vrot.lane.b32.xlu0 %v3344, 48
      %v4322 = vpop.permute.xlu0 %4321
      %4323 = vrot.lane.b32.xlu0 %v3351, 48
      %v4324 = vpop.permute.xlu0 %4323
      %4325 = vrot.lane.b32.xlu0 %v3352, 48
      %v4326 = vpop.permute.xlu0 %4325
      %4327 = vrot.lane.b32.xlu0 %v3353, 48
      %v4328 = vpop.permute.xlu0 %4327
      %4380 = vrot.lane.b32.xlu0 %v3252, 56
      %v4381 = vpop.permute.xlu0 %4380
      %4382 = vrot.lane.b32.xlu0 %v3253, 56
      %v4383 = vpop.permute.xlu0 %4382
      %4384 = vrot.lane.b32.xlu0 %v3254, 56
      %v4385 = vpop.permute.xlu0 %4384
      %4386 = vrot.lane.b32.xlu0 %v3255, 56
      %v4387 = vpop.permute.xlu0 %4386
      %4388 = vrot.lane.b32.xlu0 %v3256, 56
      %v4389 = vpop.permute.xlu0 %4388
      %4390 = vrot.lane.b32.xlu0 %v3257, 56
      %v4391 = vpop.permute.xlu0 %4390
      %4392 = vrot.lane.b32.xlu0 %v3258, 56
      %v4393 = vpop.permute.xlu0 %4392
      %4394 = vrot.lane.b32.xlu0 %v3259, 56
      %v4395 = vpop.permute.xlu0 %4394
      %4396 = vrot.lane.b32.xlu0 %v3260, 56
      %v4397 = vpop.permute.xlu0 %4396
      %4398 = vrot.lane.b32.xlu0 %v3261, 56
      %v4399 = vpop.permute.xlu0 %4398
      %4400 = vrot.lane.b32.xlu0 %v3262, 56
      %v4401 = vpop.permute.xlu0 %4400
      %4402 = vrot.lane.b32.xlu0 %v3263, 56
      %v4403 = vpop.permute.xlu0 %4402
      %4404 = vrot.lane.b32.xlu0 %v3264, 56
      %v4405 = vpop.permute.xlu0 %4404
      %4406 = vrot.lane.b32.xlu0 %v3265, 56
      %v4407 = vpop.permute.xlu0 %4406
      %4408 = vrot.lane.b32.xlu0 %v3266, 56
      %v4409 = vpop.permute.xlu0 %4408
      %4410 = vrot.lane.b32.xlu0 %v3267, 56
      %v4411 = vpop.permute.xlu0 %4410
      %4412 = vrot.lane.b32.xlu0 %v3268, 56
      %v4413 = vpop.permute.xlu0 %4412
      %4414 = vrot.lane.b32.xlu0 %v3269, 56
      %v4415 = vpop.permute.xlu0 %4414
      %4416 = vrot.lane.b32.xlu0 %v3270, 56
      %v4417 = vpop.permute.xlu0 %4416
      %4418 = vrot.lane.b32.xlu0 %v3271, 56
      %v4419 = vpop.permute.xlu0 %4418
      %4420 = vrot.lane.b32.xlu0 %v3272, 56
      %v4421 = vpop.permute.xlu0 %4420
      %4422 = vrot.lane.b32.xlu0 %v3273, 56
      %v4423 = vpop.permute.xlu0 %4422
      %4424 = vrot.lane.b32.xlu0 %v3274, 56
      %v4425 = vpop.permute.xlu0 %4424
      %4426 = vrot.lane.b32.xlu0 %v3275, 56
      %v4427 = vpop.permute.xlu0 %4426
      %4428 = vrot.lane.b32.xlu0 %v3276, 56
      %v4429 = vpop.permute.xlu0 %4428
      %4430 = vrot.lane.b32.xlu0 %v3277, 56
      %v4431 = vpop.permute.xlu0 %4430
      %4432 = vrot.lane.b32.xlu0 %v3278, 56
      %v4433 = vpop.permute.xlu0 %4432
      %4434 = vrot.lane.b32.xlu0 %v3279, 56
      %v4435 = vpop.permute.xlu0 %4434
      %4436 = vrot.lane.b32.xlu0 %v3280, 56
      %v4437 = vpop.permute.xlu0 %4436
      %4438 = vrot.lane.b32.xlu0 %v3281, 56
      %v4439 = vpop.permute.xlu0 %4438
      %4440 = vrot.lane.b32.xlu0 %v3282, 56
      %v4441 = vpop.permute.xlu0 %4440
      %4442 = vrot.lane.b32.xlu0 %v3283, 56
      %v4443 = vpop.permute.xlu0 %4442
      %4444 = vrot.lane.b32.xlu0 %v3284, 56
      %v4445 = vpop.permute.xlu0 %4444
      %4446 = vrot.lane.b32.xlu0 %v3285, 56
      %v4447 = vpop.permute.xlu0 %4446
      %4448 = vrot.lane.b32.xlu0 %v3286, 56
      %v4449 = vpop.permute.xlu0 %4448
      %4450 = vrot.lane.b32.xlu0 %v3287, 56
      %v4451 = vpop.permute.xlu0 %4450
      %4452 = vrot.lane.b32.xlu0 %v3288, 56
      %v4453 = vpop.permute.xlu0 %4452
      %4454 = vrot.lane.b32.xlu0 %v3289, 56
      %v4455 = vpop.permute.xlu0 %4454
      %4456 = vrot.lane.b32.xlu0 %v3290, 56
      %v4457 = vpop.permute.xlu0 %4456
      %4458 = vrot.lane.b32.xlu0 %v3291, 56
      %v4459 = vpop.permute.xlu0 %4458
      %4460 = vrot.lane.b32.xlu0 %v3292, 56
      %v4461 = vpop.permute.xlu0 %4460
      %4462 = vrot.lane.b32.xlu0 %v3293, 56
      %v4463 = vpop.permute.xlu0 %4462
      %4464 = vrot.lane.b32.xlu0 %v3345, 56
      %v4465 = vpop.permute.xlu0 %4464
      %4466 = vrot.lane.b32.xlu0 %v3346, 56
      %v4467 = vpop.permute.xlu0 %4466
      %4468 = vrot.lane.b32.xlu0 %v3347, 56
      %v4469 = vpop.permute.xlu0 %4468
      %4470 = vrot.lane.b32.xlu0 %v3354, 56
      %v4471 = vpop.permute.xlu0 %4470
      %4472 = vrot.lane.b32.xlu0 %v3355, 56
      %v4473 = vpop.permute.xlu0 %4472
      %4474 = vrot.lane.b32.xlu0 %v3356, 56
      %v4475 = vpop.permute.xlu0 %4474
      %4527 = vrot.lane.b32.xlu0 %v3300, 64
      %v4528 = vpop.permute.xlu0 %4527
      %4529 = vrot.lane.b32.xlu0 %v3301, 64
      %v4530 = vpop.permute.xlu0 %4529
      %4531 = vrot.lane.b32.xlu0 %v3302, 64
      %v4532 = vpop.permute.xlu0 %4531
      %4533 = vrot.lane.b32.xlu0 %v3303, 64
      %v4534 = vpop.permute.xlu0 %4533
      %4535 = vrot.lane.b32.xlu0 %v3304, 64
      %v4536 = vpop.permute.xlu0 %4535
      %4537 = vrot.lane.b32.xlu0 %v3305, 64
      %v4538 = vpop.permute.xlu0 %4537
      %4539 = vrot.lane.b32.xlu0 %v3306, 64
      %v4540 = vpop.permute.xlu0 %4539
      %4541 = vrot.lane.b32.xlu0 %v3307, 64
      %v4542 = vpop.permute.xlu0 %4541
      %4543 = vrot.lane.b32.xlu0 %v3308, 64
      %v4544 = vpop.permute.xlu0 %4543
      %4545 = vrot.lane.b32.xlu0 %v3309, 64
      %v4546 = vpop.permute.xlu0 %4545
      %4547 = vrot.lane.b32.xlu0 %v3310, 64
      %v4548 = vpop.permute.xlu0 %4547
      %4549 = vrot.lane.b32.xlu0 %v3311, 64
      %v4550 = vpop.permute.xlu0 %4549
      %4551 = vrot.lane.b32.xlu0 %v3312, 64
      %v4552 = vpop.permute.xlu0 %4551
      %4553 = vrot.lane.b32.xlu0 %v3313, 64
      %v4554 = vpop.permute.xlu0 %4553
      %4555 = vrot.lane.b32.xlu0 %v3314, 64
      %v4556 = vpop.permute.xlu0 %4555
      %4557 = vrot.lane.b32.xlu0 %v3315, 64
      %v4558 = vpop.permute.xlu0 %4557
      %4559 = vrot.lane.b32.xlu0 %v3316, 64
      %v4560 = vpop.permute.xlu0 %4559
      %4561 = vrot.lane.b32.xlu0 %v3317, 64
      %v4562 = vpop.permute.xlu0 %4561
      %4563 = vrot.lane.b32.xlu0 %v3318, 64
      %v4564 = vpop.permute.xlu0 %4563
      %4565 = vrot.lane.b32.xlu0 %v3319, 64
      %v4566 = vpop.permute.xlu0 %4565
      %4567 = vrot.lane.b32.xlu0 %v3320, 64
      %v4568 = vpop.permute.xlu0 %4567
      %4569 = vrot.lane.b32.xlu0 %v3321, 64
      %v4570 = vpop.permute.xlu0 %4569
      %4571 = vrot.lane.b32.xlu0 %v3322, 64
      %v4572 = vpop.permute.xlu0 %4571
      %4573 = vrot.lane.b32.xlu0 %v3323, 64
      %v4574 = vpop.permute.xlu0 %4573
      %4575 = vrot.lane.b32.xlu0 %v3324, 64
      %v4576 = vpop.permute.xlu0 %4575
      %4577 = vrot.lane.b32.xlu0 %v3325, 64
      %v4578 = vpop.permute.xlu0 %4577
      %4579 = vrot.lane.b32.xlu0 %v3326, 64
      %v4580 = vpop.permute.xlu0 %4579
      %4581 = vrot.lane.b32.xlu0 %v3327, 64
      %v4582 = vpop.permute.xlu0 %4581
      %4583 = vrot.lane.b32.xlu0 %v3328, 64
      %v4584 = vpop.permute.xlu0 %4583
      %4585 = vrot.lane.b32.xlu0 %v3329, 64
      %v4586 = vpop.permute.xlu0 %4585
      %4587 = vrot.lane.b32.xlu0 %v3330, 64
      %v4588 = vpop.permute.xlu0 %4587
      %4589 = vrot.lane.b32.xlu0 %v3331, 64
      %v4590 = vpop.permute.xlu0 %4589
      %4591 = vrot.lane.b32.xlu0 %v3332, 64
      %v4592 = vpop.permute.xlu0 %4591
      %4593 = vrot.lane.b32.xlu0 %v3333, 64
      %v4594 = vpop.permute.xlu0 %4593
      %4595 = vrot.lane.b32.xlu0 %v3334, 64
      %v4596 = vpop.permute.xlu0 %4595
      %4597 = vrot.lane.b32.xlu0 %v3335, 64
      %v4598 = vpop.permute.xlu0 %4597
      %4599 = vrot.lane.b32.xlu0 %v3336, 64
      %v4600 = vpop.permute.xlu0 %4599
      %4601 = vrot.lane.b32.xlu0 %v3337, 64
      %v4602 = vpop.permute.xlu0 %4601
      %4603 = vrot.lane.b32.xlu0 %v3338, 64
      %v4604 = vpop.permute.xlu0 %4603
      %4605 = vrot.lane.b32.xlu0 %v3339, 64
      %v4606 = vpop.permute.xlu0 %4605
      %4607 = vrot.lane.b32.xlu0 %v3340, 64
      %v4608 = vpop.permute.xlu0 %4607
      %4609 = vrot.lane.b32.xlu0 %v3341, 64
      %v4610 = vpop.permute.xlu0 %4609
      %4611 = vrot.lane.b32.xlu0 %v3348, 64
      %v4612 = vpop.permute.xlu0 %4611
      %4613 = vrot.lane.b32.xlu0 %v3349, 64
      %v4614 = vpop.permute.xlu0 %4613
      %4615 = vrot.lane.b32.xlu0 %v3350, 64
      %v4616 = vpop.permute.xlu0 %4615
      %4617 = vrot.lane.b32.xlu0 %v3357, 64
      %v4618 = vpop.permute.xlu0 %4617
      %4619 = vrot.lane.b32.xlu0 %v3358, 64
      %v4620 = vpop.permute.xlu0 %4619
      %4621 = vrot.lane.b32.xlu0 %v3359, 64
      %v4622 = vpop.permute.xlu0 %4621
      %v4671 = vsel %vm279, %v3198, %v3409
      %v4672 = vsel %vm279, %v3199, %v3411
      %v4673 = vsel %vm279, %v3200, %v3413
      %v4674 = vsel %vm279, %v3201, %v3415
      %v4675 = vsel %vm279, %v3202, %v3417
      %v4676 = vsel %vm279, %v3203, %v3419
      %v4677 = vsel %vm279, %v3204, %v3421
      %v4678 = vsel %vm279, %v3205, %v3423
      %v4679 = vsel %vm279, %v3206, %v3425
      %v4680 = vsel %vm279, %v3207, %v3427
      %v4681 = vsel %vm279, %v3208, %v3429
      %v4682 = vsel %vm279, %v3209, %v3431
      %v4683 = vsel %vm279, %v3210, %v3433
      %v4684 = vsel %vm279, %v3211, %v3435
      %v4685 = vsel %vm279, %v3212, %v3437
      %v4686 = vsel %vm279, %v3213, %v3439
      %v4687 = vsel %vm279, %v3214, %v3441
      %v4688 = vsel %vm279, %v3215, %v3443
      %v4689 = vsel %vm279, %v3216, %v3445
      %v4690 = vsel %vm279, %v3217, %v3447
      %v4691 = vsel %vm279, %v3218, %v3449
      %v4692 = vsel %vm279, %v3219, %v3451
      %v4693 = vsel %vm279, %v3220, %v3453
      %v4694 = vsel %vm279, %v3221, %v3455
      %v4695 = vsel %vm279, %v3222, %v3457
      %v4696 = vsel %vm279, %v3223, %v3459
      %v4697 = vsel %vm279, %v3224, %v3461
      %v4698 = vsel %vm279, %v3225, %v3463
      %v4699 = vsel %vm279, %v3226, %v3465
      %v4700 = vsel %vm279, %v3227, %v3467
      %v4701 = vsel %vm279, %v3228, %v3469
      %v4702 = vsel %vm279, %v3229, %v3471
      %v4703 = vsel %vm279, %v3230, %v3473
      %v4704 = vsel %vm279, %v3231, %v3475
      %v4705 = vsel %vm279, %v3232, %v3477
      %v4706 = vsel %vm279, %v3233, %v3479
      %v4707 = vsel %vm279, %v3234, %v3481
      %v4708 = vsel %vm279, %v3235, %v3483
      %v4709 = vsel %vm279, %v3236, %v3485
      %v4710 = vsel %vm279, %v3237, %v3487
      %v4711 = vsel %vm279, %v3238, %v3489
      %v4712 = vsel %vm279, %v3239, %v3491
      %v4713 = vsel %vm279, %v3240, %v3493
      %v4714 = vsel %vm279, %v3241, %v3495
      %v4715 = vsel %vm279, %v3242, %v3497
      %v4716 = vsel %vm279, %v3243, %v3499
      %v4717 = vsel %vm279, %v3244, %v3501
      %v4718 = vsel %vm279, %v3245, %v3503
      %v4719 = vsel %vm1959, %v4671, %v3601
      %v4720 = vsel %vm1959, %v4672, %v3603
      %v4721 = vsel %vm1959, %v4673, %v3605
      %v4722 = vsel %vm1959, %v4674, %v3607
      %v4723 = vsel %vm1959, %v4675, %v3609
      %v4724 = vsel %vm1959, %v4676, %v3611
      %v4725 = vsel %vm1959, %v4677, %v3613
      %v4726 = vsel %vm1959, %v4678, %v3615
      %v4727 = vsel %vm1959, %v4679, %v3617
      %v4728 = vsel %vm1959, %v4680, %v3619
      %v4729 = vsel %vm1959, %v4681, %v3621
      %v4730 = vsel %vm1959, %v4682, %v3623
      %v4731 = vsel %vm1959, %v4683, %v3625
      %v4732 = vsel %vm1959, %v4684, %v3627
      %v4733 = vsel %vm1959, %v4685, %v3629
      %v4734 = vsel %vm1959, %v4686, %v3631
      %v4735 = vsel %vm1959, %v4687, %v3633
      %v4736 = vsel %vm1959, %v4688, %v3635
      %v4737 = vsel %vm1959, %v4689, %v3637
      %v4738 = vsel %vm1959, %v4690, %v3639
      %v4739 = vsel %vm1959, %v4691, %v3641
      %v4740 = vsel %vm1959, %v4692, %v3643
      %v4741 = vsel %vm1959, %v4693, %v3645
      %v4742 = vsel %vm1959, %v4694, %v3647
      %v4743 = vsel %vm1959, %v4695, %v3649
      %v4744 = vsel %vm1959, %v4696, %v3651
      %v4745 = vsel %vm1959, %v4697, %v3653
      %v4746 = vsel %vm1959, %v4698, %v3655
      %v4747 = vsel %vm1959, %v4699, %v3657
      %v4748 = vsel %vm1959, %v4700, %v3659
      %v4749 = vsel %vm1959, %v4701, %v3661
      %v4750 = vsel %vm1959, %v4702, %v3663
      %v4751 = vsel %vm1959, %v4703, %v3665
      %v4752 = vsel %vm1959, %v4704, %v3667
      %v4753 = vsel %vm1959, %v4705, %v3669
      %v4754 = vsel %vm1959, %v4706, %v3671
      %v4755 = vsel %vm1959, %v4707, %v3673
      %v4756 = vsel %vm1959, %v4708, %v3675
      %v4757 = vsel %vm1959, %v4709, %v3677
      %v4758 = vsel %vm1959, %v4710, %v3679
      %v4759 = vsel %vm1959, %v4711, %v3681
      %v4760 = vsel %vm1959, %v4712, %v3683
      %v4761 = vsel %vm1959, %v4713, %v3685
      %v4762 = vsel %vm1959, %v4714, %v3687
      %v4763 = vsel %vm1959, %v4715, %v3689
      %v4764 = vsel %vm1959, %v4716, %v3691
      %v4765 = vsel %vm1959, %v4717, %v3693
      %v4766 = vsel %vm1959, %v4718, %v3695
      %v4767 = vsel %vm2057, %v4719, %v3793
      %v4768 = vsel %vm2057, %v4720, %v3795
      %v4769 = vsel %vm2057, %v4721, %v3797
      %v4770 = vsel %vm2057, %v4722, %v3799
      %v4771 = vsel %vm2057, %v4723, %v3801
      %v4772 = vsel %vm2057, %v4724, %v3803
      %v4773 = vsel %vm2057, %v4725, %v3805
      %v4774 = vsel %vm2057, %v4726, %v3807
      %v4775 = vsel %vm2057, %v4727, %v3809
      %v4776 = vsel %vm2057, %v4728, %v3811
      %v4777 = vsel %vm2057, %v4729, %v3813
      %v4778 = vsel %vm2057, %v4730, %v3815
      %v4779 = vsel %vm2057, %v4731, %v3817
      %v4780 = vsel %vm2057, %v4732, %v3819
      %v4781 = vsel %vm2057, %v4733, %v3821
      %v4782 = vsel %vm2057, %v4734, %v3823
      %v4783 = vsel %vm2057, %v4735, %v3825
      %v4784 = vsel %vm2057, %v4736, %v3827
      %v4785 = vsel %vm2057, %v4737, %v3829
      %v4786 = vsel %vm2057, %v4738, %v3831
      %v4787 = vsel %vm2057, %v4739, %v3833
      %v4788 = vsel %vm2057, %v4740, %v3835
      %v4789 = vsel %vm2057, %v4741, %v3837
      %v4790 = vsel %vm2057, %v4742, %v3839
      %v4791 = vsel %vm2057, %v4743, %v3841
      %v4792 = vsel %vm2057, %v4744, %v3843
      %v4793 = vsel %vm2057, %v4745, %v3845
      %v4794 = vsel %vm2057, %v4746, %v3847
      %v4795 = vsel %vm2057, %v4747, %v3849
      %v4796 = vsel %vm2057, %v4748, %v3851
      %v4797 = vsel %vm2057, %v4749, %v3853
      %v4798 = vsel %vm2057, %v4750, %v3855
      %v4799 = vsel %vm2057, %v4751, %v3857
      %v4800 = vsel %vm2057, %v4752, %v3859
      %v4801 = vsel %vm2057, %v4753, %v3861
      %v4802 = vsel %vm2057, %v4754, %v3863
      %v4803 = vsel %vm2057, %v4755, %v3865
      %v4804 = vsel %vm2057, %v4756, %v3867
      %v4805 = vsel %vm2057, %v4757, %v3869
      %v4806 = vsel %vm2057, %v4758, %v3871
      %v4807 = vsel %vm2057, %v4759, %v3873
      %v4808 = vsel %vm2057, %v4760, %v3875
      %v4809 = vsel %vm2057, %v4761, %v3877
      %v4810 = vsel %vm2057, %v4762, %v3879
      %v4811 = vsel %vm2057, %v4763, %v3881
      %v4812 = vsel %vm2057, %v4764, %v3883
      %v4813 = vsel %vm2057, %v4765, %v3885
      %v4814 = vsel %vm2057, %v4766, %v3887
      %v4815 = vsel %vm2155, %v4767, %v3940
      %v4816 = vsel %vm2155, %v4768, %v3942
      %v4817 = vsel %vm2155, %v4769, %v3944
      %v4818 = vsel %vm2155, %v4770, %v3946
      %v4819 = vsel %vm2155, %v4771, %v3948
      %v4820 = vsel %vm2155, %v4772, %v3950
      %v4821 = vsel %vm2155, %v4773, %v3952
      %v4822 = vsel %vm2155, %v4774, %v3954
      %v4823 = vsel %vm2155, %v4775, %v3956
      %v4824 = vsel %vm2155, %v4776, %v3958
      %v4825 = vsel %vm2155, %v4777, %v3960
      %v4826 = vsel %vm2155, %v4778, %v3962
      %v4827 = vsel %vm2155, %v4779, %v3964
      %v4828 = vsel %vm2155, %v4780, %v3966
      %v4829 = vsel %vm2155, %v4781, %v3968
      %v4830 = vsel %vm2155, %v4782, %v3970
      %v4831 = vsel %vm2155, %v4783, %v3972
      %v4832 = vsel %vm2155, %v4784, %v3974
      %v4833 = vsel %vm2155, %v4785, %v3976
      %v4834 = vsel %vm2155, %v4786, %v3978
      %v4835 = vsel %vm2155, %v4787, %v3980
      %v4836 = vsel %vm2155, %v4788, %v3982
      %v4837 = vsel %vm2155, %v4789, %v3984
      %v4838 = vsel %vm2155, %v4790, %v3986
      %v4839 = vsel %vm2155, %v4791, %v3988
      %v4840 = vsel %vm2155, %v4792, %v3990
      %v4841 = vsel %vm2155, %v4793, %v3992
      %v4842 = vsel %vm2155, %v4794, %v3994
      %v4843 = vsel %vm2155, %v4795, %v3996
      %v4844 = vsel %vm2155, %v4796, %v3998
      %v4845 = vsel %vm2155, %v4797, %v4000
      %v4846 = vsel %vm2155, %v4798, %v4002
      %v4847 = vsel %vm2155, %v4799, %v4004
      %v4848 = vsel %vm2155, %v4800, %v4006
      %v4849 = vsel %vm2155, %v4801, %v4008
      %v4850 = vsel %vm2155, %v4802, %v4010
      %v4851 = vsel %vm2155, %v4803, %v4012
      %v4852 = vsel %vm2155, %v4804, %v4014
      %v4853 = vsel %vm2155, %v4805, %v4016
      %v4854 = vsel %vm2155, %v4806, %v4018
      %v4855 = vsel %vm2155, %v4807, %v4020
      %v4856 = vsel %vm2155, %v4808, %v4022
      %v4857 = vsel %vm2155, %v4809, %v4024
      %v4858 = vsel %vm2155, %v4810, %v4026
      %v4859 = vsel %vm2155, %v4811, %v4028
      %v4860 = vsel %vm2155, %v4812, %v4030
      %v4861 = vsel %vm2155, %v4813, %v4032
      %v4862 = vsel %vm2155, %v4814, %v4034
      %vm4863 = vcmask 326656
      %v4864 = vsel %vm4863, %v4815, %v4087
      %v4865 = vsel %vm4863, %v4816, %v4089
      %v4866 = vsel %vm4863, %v4817, %v4091
      %v4867 = vsel %vm4863, %v4818, %v4093
      %v4868 = vsel %vm4863, %v4819, %v4095
      %v4869 = vsel %vm4863, %v4820, %v4097
      %v4870 = vsel %vm4863, %v4821, %v4099
      %v4871 = vsel %vm4863, %v4822, %v4101
      %v4872 = vsel %vm4863, %v4823, %v4103
      %v4873 = vsel %vm4863, %v4824, %v4105
      %v4874 = vsel %vm4863, %v4825, %v4107
      %v4875 = vsel %vm4863, %v4826, %v4109
      %v4876 = vsel %vm4863, %v4827, %v4111
      %v4877 = vsel %vm4863, %v4828, %v4113
      %v4878 = vsel %vm4863, %v4829, %v4115
      %v4879 = vsel %vm4863, %v4830, %v4117
      %v4880 = vsel %vm4863, %v4831, %v4119
      %v4881 = vsel %vm4863, %v4832, %v4121
      %v4882 = vsel %vm4863, %v4833, %v4123
      %v4883 = vsel %vm4863, %v4834, %v4125
      %v4884 = vsel %vm4863, %v4835, %v4127
      %v4885 = vsel %vm4863, %v4836, %v4129
      %v4886 = vsel %vm4863, %v4837, %v4131
      %v4887 = vsel %vm4863, %v4838, %v4133
      %v4888 = vsel %vm4863, %v4839, %v4135
      %v4889 = vsel %vm4863, %v4840, %v4137
      %v4890 = vsel %vm4863, %v4841, %v4139
      %v4891 = vsel %vm4863, %v4842, %v4141
      %v4892 = vsel %vm4863, %v4843, %v4143
      %v4893 = vsel %vm4863, %v4844, %v4145
      %v4894 = vsel %vm4863, %v4845, %v4147
      %v4895 = vsel %vm4863, %v4846, %v4149
      %v4896 = vsel %vm4863, %v4847, %v4151
      %v4897 = vsel %vm4863, %v4848, %v4153
      %v4898 = vsel %vm4863, %v4849, %v4155
      %v4899 = vsel %vm4863, %v4850, %v4157
      %v4900 = vsel %vm4863, %v4851, %v4159
      %v4901 = vsel %vm4863, %v4852, %v4161
      %v4902 = vsel %vm4863, %v4853, %v4163
      %v4903 = vsel %vm4863, %v4854, %v4165
      %v4904 = vsel %vm4863, %v4855, %v4167
      %v4905 = vsel %vm4863, %v4856, %v4169
      %v4906 = vsel %vm4863, %v4857, %v4171
      %v4907 = vsel %vm4863, %v4858, %v4173
      %v4908 = vsel %vm4863, %v4859, %v4175
      %v4909 = vsel %vm4863, %v4860, %v4177
      %v4910 = vsel %vm4863, %v4861, %v4179
      %v4911 = vsel %vm4863, %v4862, %v4181
      %vm4912 = vcmask 392192
      %v4913 = vsel %vm4912, %v4864, %v4234
      %v4914 = vsel %vm4912, %v4865, %v4236
      %v4915 = vsel %vm4912, %v4866, %v4238
      %v4916 = vsel %vm4912, %v4867, %v4240
      %v4917 = vsel %vm4912, %v4868, %v4242
      %v4918 = vsel %vm4912, %v4869, %v4244
      %v4919 = vsel %vm4912, %v4870, %v4246
      %v4920 = vsel %vm4912, %v4871, %v4248
      %v4921 = vsel %vm4912, %v4872, %v4250
      %v4922 = vsel %vm4912, %v4873, %v4252
      %v4923 = vsel %vm4912, %v4874, %v4254
      %v4924 = vsel %vm4912, %v4875, %v4256
      %v4925 = vsel %vm4912, %v4876, %v4258
      %v4926 = vsel %vm4912, %v4877, %v4260
      %v4927 = vsel %vm4912, %v4878, %v4262
      %v4928 = vsel %vm4912, %v4879, %v4264
      %v4929 = vsel %vm4912, %v4880, %v4266
      %v4930 = vsel %vm4912, %v4881, %v4268
      %v4931 = vsel %vm4912, %v4882, %v4270
      %v4932 = vsel %vm4912, %v4883, %v4272
      %v4933 = vsel %vm4912, %v4884, %v4274
      %v4934 = vsel %vm4912, %v4885, %v4276
      %v4935 = vsel %vm4912, %v4886, %v4278
      %v4936 = vsel %vm4912, %v4887, %v4280
      %v4937 = vsel %vm4912, %v4888, %v4282
      %v4938 = vsel %vm4912, %v4889, %v4284
      %v4939 = vsel %vm4912, %v4890, %v4286
      %v4940 = vsel %vm4912, %v4891, %v4288
      %v4941 = vsel %vm4912, %v4892, %v4290
      %v4942 = vsel %vm4912, %v4893, %v4292
      %v4943 = vsel %vm4912, %v4894, %v4294
      %v4944 = vsel %vm4912, %v4895, %v4296
      %v4945 = vsel %vm4912, %v4896, %v4298
      %v4946 = vsel %vm4912, %v4897, %v4300
      %v4947 = vsel %vm4912, %v4898, %v4302
      %v4948 = vsel %vm4912, %v4899, %v4304
      %v4949 = vsel %vm4912, %v4900, %v4306
      %v4950 = vsel %vm4912, %v4901, %v4308
      %v4951 = vsel %vm4912, %v4902, %v4310
      %v4952 = vsel %vm4912, %v4903, %v4312
      %v4953 = vsel %vm4912, %v4904, %v4314
      %v4954 = vsel %vm4912, %v4905, %v4316
      %v4955 = vsel %vm4912, %v4906, %v4318
      %v4956 = vsel %vm4912, %v4907, %v4320
      %v4957 = vsel %vm4912, %v4908, %v4322
      %v4958 = vsel %vm4912, %v4909, %v4324
      %v4959 = vsel %vm4912, %v4910, %v4326
      %v4960 = vsel %vm4912, %v4911, %v4328
      %vm4961 = vcmask 457728
      %v4962 = vsel %vm4961, %v4913, %v4381
      %v4963 = vsel %vm4961, %v4914, %v4383
      %v4964 = vsel %vm4961, %v4915, %v4385
      %v4965 = vsel %vm4961, %v4916, %v4387
      %v4966 = vsel %vm4961, %v4917, %v4389
      %v4967 = vsel %vm4961, %v4918, %v4391
      %v4968 = vsel %vm4961, %v4919, %v4393
      %v4969 = vsel %vm4961, %v4920, %v4395
      %v4970 = vsel %vm4961, %v4921, %v4397
      %v4971 = vsel %vm4961, %v4922, %v4399
      %v4972 = vsel %vm4961, %v4923, %v4401
      %v4973 = vsel %vm4961, %v4924, %v4403
      %v4974 = vsel %vm4961, %v4925, %v4405
      %v4975 = vsel %vm4961, %v4926, %v4407
      %v4976 = vsel %vm4961, %v4927, %v4409
      %v4977 = vsel %vm4961, %v4928, %v4411
      %v4978 = vsel %vm4961, %v4929, %v4413
      %v4979 = vsel %vm4961, %v4930, %v4415
      %v4980 = vsel %vm4961, %v4931, %v4417
      %v4981 = vsel %vm4961, %v4932, %v4419
      %v4982 = vsel %vm4961, %v4933, %v4421
      %v4983 = vsel %vm4961, %v4934, %v4423
      %v4984 = vsel %vm4961, %v4935, %v4425
      %v4985 = vsel %vm4961, %v4936, %v4427
      %v4986 = vsel %vm4961, %v4937, %v4429
      %v4987 = vsel %vm4961, %v4938, %v4431
      %v4988 = vsel %vm4961, %v4939, %v4433
      %v4989 = vsel %vm4961, %v4940, %v4435
      %v4990 = vsel %vm4961, %v4941, %v4437
      %v4991 = vsel %vm4961, %v4942, %v4439
      %v4992 = vsel %vm4961, %v4943, %v4441
      %v4993 = vsel %vm4961, %v4944, %v4443
      %v4994 = vsel %vm4961, %v4945, %v4445
      %v4995 = vsel %vm4961, %v4946, %v4447
      %v4996 = vsel %vm4961, %v4947, %v4449
      %v4997 = vsel %vm4961, %v4948, %v4451
      %v4998 = vsel %vm4961, %v4949, %v4453
      %v4999 = vsel %vm4961, %v4950, %v4455
      %v5000 = vsel %vm4961, %v4951, %v4457
      %v5001 = vsel %vm4961, %v4952, %v4459
      %v5002 = vsel %vm4961, %v4953, %v4461
      %v5003 = vsel %vm4961, %v4954, %v4463
      %v5004 = vsel %vm4961, %v4955, %v4465
      %v5005 = vsel %vm4961, %v4956, %v4467
      %v5006 = vsel %vm4961, %v4957, %v4469
      %v5007 = vsel %vm4961, %v4958, %v4471
      %v5008 = vsel %vm4961, %v4959, %v4473
      %v5009 = vsel %vm4961, %v4960, %v4475
      %vm5010 = vcmask 523264
      %v5011 = vsel %vm5010, %v4962, %v4528
      %v5012 = vsel %vm5010, %v4963, %v4530
      %v5013 = vsel %vm5010, %v4964, %v4532
      %v5014 = vsel %vm5010, %v4965, %v4534
      %v5015 = vsel %vm5010, %v4966, %v4536
      %v5016 = vsel %vm5010, %v4967, %v4538
      %v5017 = vsel %vm5010, %v4968, %v4540
      %v5018 = vsel %vm5010, %v4969, %v4542
      %v5019 = vsel %vm5010, %v4970, %v4544
      %v5020 = vsel %vm5010, %v4971, %v4546
      %v5021 = vsel %vm5010, %v4972, %v4548
      %v5022 = vsel %vm5010, %v4973, %v4550
      %v5023 = vsel %vm5010, %v4974, %v4552
      %v5024 = vsel %vm5010, %v4975, %v4554
      %v5025 = vsel %vm5010, %v4976, %v4556
      %v5026 = vsel %vm5010, %v4977, %v4558
      %v5027 = vsel %vm5010, %v4978, %v4560
      %v5028 = vsel %vm5010, %v4979, %v4562
      %v5029 = vsel %vm5010, %v4980, %v4564
      %v5030 = vsel %vm5010, %v4981, %v4566
      %v5031 = vsel %vm5010, %v4982, %v4568
      %v5032 = vsel %vm5010, %v4983, %v4570
      %v5033 = vsel %vm5010, %v4984, %v4572
      %v5034 = vsel %vm5010, %v4985, %v4574
      %v5035 = vsel %vm5010, %v4986, %v4576
      %v5036 = vsel %vm5010, %v4987, %v4578
      %v5037 = vsel %vm5010, %v4988, %v4580
      %v5038 = vsel %vm5010, %v4989, %v4582
      %v5039 = vsel %vm5010, %v4990, %v4584
      %v5040 = vsel %vm5010, %v4991, %v4586
      %v5041 = vsel %vm5010, %v4992, %v4588
      %v5042 = vsel %vm5010, %v4993, %v4590
      %v5043 = vsel %vm5010, %v4994, %v4592
      %v5044 = vsel %vm5010, %v4995, %v4594
      %v5045 = vsel %vm5010, %v4996, %v4596
      %v5046 = vsel %vm5010, %v4997, %v4598
      %v5047 = vsel %vm5010, %v4998, %v4600
      %v5048 = vsel %vm5010, %v4999, %v4602
      %v5049 = vsel %vm5010, %v5000, %v4604
      %v5050 = vsel %vm5010, %v5001, %v4606
      %v5051 = vsel %vm5010, %v5002, %v4608
      %v5052 = vsel %vm5010, %v5003, %v4610
      %v5053 = vsel %vm5010, %v5004, %v4612
      %v5054 = vsel %vm5010, %v5005, %v4614
      %v5055 = vsel %vm5010, %v5006, %v4616
      %v5056 = vsel %vm5010, %v5007, %v4618
      %v5057 = vsel %vm5010, %v5008, %v4620
      %v5058 = vsel %vm5010, %v5009, %v4622
      %v5059 = vld [vmem:[%s3] sm:$0xff]
      %v5060 = vld [vmem:[%s3 + $0x8] sm:$0xff]
      %v5061 = vld [vmem:[%s3 + $0x10] sm:$0xff]
      %v5062 = vld [vmem:[%s3 + $0x18] sm:$0xff]
      %v5063 = vld [vmem:[%s3 + $0x20] sm:$0xff]
      %v5064 = vld [vmem:[%s3 + $0x28] sm:$0xff]
      %v5065 = vld [vmem:[%s3 + $0x30] sm:$0xff]
      %v5066 = vld [vmem:[%s3 + $0x38] sm:$0xff]
      %v5067 = vld [vmem:[%s3 + $0x40] sm:$0xff]
      %v5068 = vld [vmem:[%s4] sm:$0x1]
      %v5070 = vlaneseq
      %v5071 = vshrl.u32 %v5070, 7
      %v5072 = vsub.s32 0, %v5071
      %v5073 = vrot.slane %v5068, %v5072
      %vm5075 = vcmask 588800
      %v5077 = vsel %vm5075, %v5011, 0
      %v5080 = vsel %vm5075, %v5012, 0
      %v5083 = vsel %vm5075, %v5013, 0
      %v5086 = vsel %vm5075, %v5014, 0
      %v5089 = vsel %vm5075, %v5015, 0
      %v5092 = vsel %vm5075, %v5016, 0
      %v5095 = vsel %vm5075, %v5017, 0
      %v5098 = vsel %vm5075, %v5018, 0
      %v5101 = vsel %vm5075, %v5019, 0
      %v5104 = vsel %vm5075, %v5020, 0
      %v5107 = vsel %vm5075, %v5021, 0
      %v5110 = vsel %vm5075, %v5022, 0
      %v5113 = vsel %vm5075, %v5023, 0
      %v5116 = vsel %vm5075, %v5024, 0
      %v5119 = vsel %vm5075, %v5025, 0
      %v5122 = vsel %vm5075, %v5026, 0
      %v5125 = vsel %vm5075, %v5027, 0
      %v5128 = vsel %vm5075, %v5028, 0
      %v5131 = vsel %vm5075, %v5029, 0
      %v5134 = vsel %vm5075, %v5030, 0
      %v5137 = vsel %vm5075, %v5031, 0
      %v5140 = vsel %vm5075, %v5032, 0
      %v5143 = vsel %vm5075, %v5033, 0
      %v5146 = vsel %vm5075, %v5034, 0
      %v5149 = vsel %vm5075, %v5035, 0
      %v5152 = vsel %vm5075, %v5036, 0
      %v5155 = vsel %vm5075, %v5037, 0
      %v5158 = vsel %vm5075, %v5038, 0
      %v5161 = vsel %vm5075, %v5039, 0
      %v5164 = vsel %vm5075, %v5040, 0
      %v5167 = vsel %vm5075, %v5041, 0
      %v5170 = vsel %vm5075, %v5042, 0
      %v5173 = vsel %vm5075, %v5043, 0
      %v5176 = vsel %vm5075, %v5044, 0
      %v5179 = vsel %vm5075, %v5045, 0
      %v5182 = vsel %vm5075, %v5046, 0
      %v5185 = vsel %vm5075, %v5047, 0
      %v5188 = vsel %vm5075, %v5048, 0
      %v5191 = vsel %vm5075, %v5049, 0
      %v5194 = vsel %vm5075, %v5050, 0
      %v5197 = vsel %vm5075, %v5051, 0
      %v5200 = vsel %vm5075, %v5052, 0
      %v5203 = vsel %vm5075, %v5053, 0
      %v5206 = vsel %vm5075, %v5054, 0
      %v5209 = vsel %vm5075, %v5055, 0
      %v5212 = vsel %vm5075, %v5056, 0
      %v5215 = vsel %vm5075, %v5057, 0
      %v5218 = vsel %vm5075, %v5058, 0
      %5220 = vmatprep.subr.mxu0 0.0
      %5221 = vmatpush1.msra.mxu0 %v5059
      %5222 = vmatprep.subr.mxu0 0.0
      %5223 = vmatpush1.msra.mxu0 %v5060
      %5224 = vmatprep.subr.mxu0 0.0
      %5225 = vmatpush1.msra.mxu0 %v5061
      %5226 = vmatprep.subr.mxu0 0.0
      %5227 = vmatpush1.msra.mxu0 %v5062
      %5228 = vmatprep.subr.mxu0 0.0
      %5229 = vmatpush1.msra.mxu0 %v5063
      %5230 = vmatprep.subr.mxu0 0.0
      %5231 = vmatpush1.msra.mxu0 %v5064
      %5232 = vmatprep.subr.mxu0 0.0
      %5233 = vmatpush1.msra.mxu0 %v5065
      %5234 = vmatprep.subr.mxu0 0.0
      %5235 = vmatpush1.msra.mxu0 %v5066
      %5236 = vmatprep.subr.mxu0 0.0
      %5237 = vmatpush1.msra.mxu0 %v5067
      %5238 = vmatprep.subr.mxu0 0.0
      %5239 = vmatpush1.msra.mxu0 0.0
      %5240 = vmatprep.subr.mxu0 0.0
      %5241 = vmatpush1.msra.mxu0 0.0
      %5242 = vmatprep.subr.mxu0 0.0
      %5243 = vmatpush1.msra.mxu0 0.0
      %5244 = vmatprep.subr.mxu0 0.0
      %5245 = vmatpush1.msra.mxu0 0.0
      %5246 = vmatprep.subr.mxu0 0.0
      %5247 = vmatpush1.msra.mxu0 0.0
      %5248 = vmatprep.subr.mxu0 0.0
      %5249 = vmatpush1.msra.mxu0 0.0
      %5250 = vmatprep.subr.mxu0 0.0
      %5251 = vmatpush1.msra.mxu0 0.0
      %5252 = vmatprep.subr.mxu0 0.0
      %5253 = vmatpush1.msra.mxu0 0.0
      %5254 = vmatprep.subr.mxu0 0.0
      %5255 = vmatpush1.msra.mxu0 0.0
      %5256 = vmatprep.subr.mxu0 0.0
      %5257 = vmatpush1.msra.mxu0 0.0
      %5258 = vmatprep.subr.mxu0 0.0
      %5259 = vmatpush1.msra.mxu0 0.0
      %5260 = vmatprep.subr.mxu0 0.0
      %5261 = vmatpush1.msra.mxu0 0.0
      %5262 = vmatprep.subr.mxu0 0.0
      %5263 = vmatpush1.msra.mxu0 0.0
      %5264 = vmatprep.subr.mxu0 0.0
      %5265 = vmatpush1.msra.mxu0 0.0
      %5266 = vmatprep.subr.mxu0 0.0
      %5267 = vmatpush1.msra.mxu0 0.0
      %5268 = vmatprep.subr.mxu0 0.0
      %5269 = vmatpush1.msra.mxu0 0.0
      %5270 = vmatprep.subr.mxu0 0.0
      %5271 = vmatpush1.msra.mxu0 0.0
      %5272 = vmatprep.subr.mxu0 0.0
      %5273 = vmatpush1.msra.mxu0 0.0
      %5274 = vmatprep.subr.mxu0 0.0
      %5275 = vmatpush1.msra.mxu0 0.0
      %5276 = vmatprep.subr.mxu0 0.0
      %5277 = vmatpush1.msra.mxu0 0.0
      %5278 = vmatprep.subr.mxu0 0.0
      %5279 = vmatpush1.msra.mxu0 0.0
      %5280 = vmatprep.subr.mxu0 0.0
      %5281 = vmatpush1.msra.mxu0 0.0
      %5282 = vmatprep.subr.mxu0 0.0
      %5283 = vmatpush1.msra.mxu0 0.0
      %5284 = vmatprep.mubr.f32.mxu0 0.0
      %5285 = vmatmul.mubr.f32.gmra.mrb[0].mxu0 %v5077
      %v5286 = vpop.f32.mrb[0].mxu0
      %v5287 = vadd.f32 %v5073, %v5286
      %v5288 = vpop.f32.mrb[0].mxu0
      %5289 = vmatprep.mubr.f32.mxu0 0.0
      %5290 = vmatmul.mubr.f32.gmra.mrb[0].mxu0 %v5080
      %v5291 = vpop.f32.mrb[0].mxu0
      %v5292 = vadd.f32 %v5073, %v5291
      %v5293 = vpop.f32.mrb[0].mxu0
      %5294 = vmatprep.mubr.f32.mxu0 0.0
      %5295 = vmatmul.mubr.f32.gmra.mrb[0].mxu0 %v5083
      %v5296 = vpop.f32.mrb[0].mxu0
      %v5297 = vadd.f32 %v5073, %v5296
      %v5298 = vpop.f32.mrb[0].mxu0
      %5299 = vmatprep.mubr.f32.mxu0 0.0
      %5300 = vmatmul.mubr.f32.gmra.mrb[0].mxu0 %v5086
      %v5301 = vpop.f32.mrb[0].mxu0
      %v5302 = vadd.f32 %v5073, %v5301
      %v5303 = vpop.f32.mrb[0].mxu0
      %5304 = vmatprep.mubr.f32.mxu0 0.0
      %5305 = vmatmul.mubr.f32.gmra.mrb[0].mxu0 %v5089
      %v5306 = vpop.f32.mrb[0].mxu0
      %v5307 = vadd.f32 %v5073, %v5306
      %v5308 = vpop.f32.mrb[0].mxu0
      %5309 = vmatprep.mubr.f32.mxu0 0.0
      %5310 = vmatmul.mubr.f32.gmra.mrb[0].mxu0 %v5092
      %v5311 = vpop.f32.mrb[0].mxu0
      %v5312 = vadd.f32 %v5073, %v5311
      %v5313 = vpop.f32.mrb[0].mxu0
      %5314 = vmatprep.mubr.f32.mxu0 0.0
      %5315 = vmatmul.mubr.f32.gmra.mrb[0].mxu0 %v5095
      %v5316 = vpop.f32.mrb[0].mxu0
      %v5317 = vadd.f32 %v5073, %v5316
      %v5318 = vpop.f32.mrb[0].mxu0
      %5319 = vmatprep.mubr.f32.mxu0 0.0
      %5320 = vmatmul.mubr.f32.gmra.mrb[0].mxu0 %v5098
      %v5321 = vpop.f32.mrb[0].mxu0
      %v5322 = vadd.f32 %v5073, %v5321
      %v5323 = vpop.f32.mrb[0].mxu0
      %5324 = vmatprep.mubr.f32.mxu0 0.0
      %5325 = vmatmul.mubr.f32.gmra.mrb[0].mxu0 %v5101
      %v5326 = vpop.f32.mrb[0].mxu0
      %v5327 = vadd.f32 %v5073, %v5326
      %v5328 = vpop.f32.mrb[0].mxu0
      %5329 = vmatprep.mubr.f32.mxu0 0.0
      %5330 = vmatmul.mubr.f32.gmra.mrb[0].mxu0 %v5104
      %v5331 = vpop.f32.mrb[0].mxu0
      %v5332 = vadd.f32 %v5073, %v5331
      %v5333 = vpop.f32.mrb[0].mxu0
      %5334 = vmatprep.mubr.f32.mxu0 0.0
      %5335 = vmatmul.mubr.f32.gmra.mrb[0].mxu0 %v5107
      %v5336 = vpop.f32.mrb[0].mxu0
      %v5337 = vadd.f32 %v5073, %v5336
      %v5338 = vpop.f32.mrb[0].mxu0
      %5339 = vmatprep.mubr.f32.mxu0 0.0
      %5340 = vmatmul.mubr.f32.gmra.mrb[0].mxu0 %v5110
      %v5341 = vpop.f32.mrb[0].mxu0
      %v5342 = vadd.f32 %v5073, %v5341
      %v5343 = vpop.f32.mrb[0].mxu0
      %5344 = vmatprep.mubr.f32.mxu0 0.0
      %5345 = vmatmul.mubr.f32.gmra.mrb[0].mxu0 %v5113
      %v5346 = vpop.f32.mrb[0].mxu0
      %v5347 = vadd.f32 %v5073, %v5346
      %v5348 = vpop.f32.mrb[0].mxu0
      %5349 = vmatprep.mubr.f32.mxu0 0.0
      %5350 = vmatmul.mubr.f32.gmra.mrb[0].mxu0 %v5116
      %v5351 = vpop.f32.mrb[0].mxu0
      %v5352 = vadd.f32 %v5073, %v5351
      %v5353 = vpop.f32.mrb[0].mxu0
      %5354 = vmatprep.mubr.f32.mxu0 0.0
      %5355 = vmatmul.mubr.f32.gmra.mrb[0].mxu0 %v5119
      %v5356 = vpop.f32.mrb[0].mxu0
      %v5357 = vadd.f32 %v5073, %v5356
      %v5358 = vpop.f32.mrb[0].mxu0
      %5359 = vmatprep.mubr.f32.mxu0 0.0
      %5360 = vmatmul.mubr.f32.gmra.mrb[0].mxu0 %v5122
      %v5361 = vpop.f32.mrb[0].mxu0
      %v5362 = vadd.f32 %v5073, %v5361
      %v5363 = vpop.f32.mrb[0].mxu0
      %5364 = vmatprep.mubr.f32.mxu0 0.0
      %5365 = vmatmul.mubr.f32.gmra.mrb[0].mxu0 %v5125
      %v5366 = vpop.f32.mrb[0].mxu0
      %v5367 = vadd.f32 %v5073, %v5366
      %v5368 = vpop.f32.mrb[0].mxu0
      %5369 = vmatprep.mubr.f32.mxu0 0.0
      %5370 = vmatmul.mubr.f32.gmra.mrb[0].mxu0 %v5128
      %v5371 = vpop.f32.mrb[0].mxu0
      %v5372 = vadd.f32 %v5073, %v5371
      %v5373 = vpop.f32.mrb[0].mxu0
      %5374 = vmatprep.mubr.f32.mxu0 0.0
      %5375 = vmatmul.mubr.f32.gmra.mrb[0].mxu0 %v5131
      %v5376 = vpop.f32.mrb[0].mxu0
      %v5377 = vadd.f32 %v5073, %v5376
      %v5378 = vpop.f32.mrb[0].mxu0
      %5379 = vmatprep.mubr.f32.mxu0 0.0
      %5380 = vmatmul.mubr.f32.gmra.mrb[0].mxu0 %v5134
      %v5381 = vpop.f32.mrb[0].mxu0
      %v5382 = vadd.f32 %v5073, %v5381
      %v5383 = vpop.f32.mrb[0].mxu0
      %5384 = vmatprep.mubr.f32.mxu0 0.0
      %5385 = vmatmul.mubr.f32.gmra.mrb[0].mxu0 %v5137
      %v5386 = vpop.f32.mrb[0].mxu0
      %v5387 = vadd.f32 %v5073, %v5386
      %v5388 = vpop.f32.mrb[0].mxu0
      %5389 = vmatprep.mubr.f32.mxu0 0.0
      %5390 = vmatmul.mubr.f32.gmra.mrb[0].mxu0 %v5140
      %v5391 = vpop.f32.mrb[0].mxu0
      %v5392 = vadd.f32 %v5073, %v5391
      %v5393 = vpop.f32.mrb[0].mxu0
      %5394 = vmatprep.mubr.f32.mxu0 0.0
      %5395 = vmatmul.mubr.f32.gmra.mrb[0].mxu0 %v5143
      %v5396 = vpop.f32.mrb[0].mxu0
      %v5397 = vadd.f32 %v5073, %v5396
      %v5398 = vpop.f32.mrb[0].mxu0
      %5399 = vmatprep.mubr.f32.mxu0 0.0
      %5400 = vmatmul.mubr.f32.gmra.mrb[0].mxu0 %v5146
      %v5401 = vpop.f32.mrb[0].mxu0
      %v5402 = vadd.f32 %v5073, %v5401
      %v5403 = vpop.f32.mrb[0].mxu0
      %5404 = vmatprep.mubr.f32.mxu0 0.0
      %5405 = vmatmul.mubr.f32.gmra.mrb[0].mxu0 %v5149
      %v5406 = vpop.f32.mrb[0].mxu0
      %v5407 = vadd.f32 %v5073, %v5406
      %v5408 = vpop.f32.mrb[0].mxu0
      %5409 = vmatprep.mubr.f32.mxu0 0.0
      %5410 = vmatmul.mubr.f32.gmra.mrb[0].mxu0 %v5152
      %v5411 = vpop.f32.mrb[0].mxu0
      %v5412 = vadd.f32 %v5073, %v5411
      %v5413 = vpop.f32.mrb[0].mxu0
      %5414 = vmatprep.mubr.f32.mxu0 0.0
      %5415 = vmatmul.mubr.f32.gmra.mrb[0].mxu0 %v5155
      %v5416 = vpop.f32.mrb[0].mxu0
      %v5417 = vadd.f32 %v5073, %v5416
      %v5418 = vpop.f32.mrb[0].mxu0
      %5419 = vmatprep.mubr.f32.mxu0 0.0
      %5420 = vmatmul.mubr.f32.gmra.mrb[0].mxu0 %v5158
      %v5421 = vpop.f32.mrb[0].mxu0
      %v5422 = vadd.f32 %v5073, %v5421
      %v5423 = vpop.f32.mrb[0].mxu0
      %5424 = vmatprep.mubr.f32.mxu0 0.0
      %5425 = vmatmul.mubr.f32.gmra.mrb[0].mxu0 %v5161
      %v5426 = vpop.f32.mrb[0].mxu0
      %v5427 = vadd.f32 %v5073, %v5426
      %v5428 = vpop.f32.mrb[0].mxu0
      %5429 = vmatprep.mubr.f32.mxu0 0.0
      %5430 = vmatmul.mubr.f32.gmra.mrb[0].mxu0 %v5164
      %v5431 = vpop.f32.mrb[0].mxu0
      %v5432 = vadd.f32 %v5073, %v5431
      %v5433 = vpop.f32.mrb[0].mxu0
      %5434 = vmatprep.mubr.f32.mxu0 0.0
      %5435 = vmatmul.mubr.f32.gmra.mrb[0].mxu0 %v5167
      %v5436 = vpop.f32.mrb[0].mxu0
      %v5437 = vadd.f32 %v5073, %v5436
      %v5438 = vpop.f32.mrb[0].mxu0
      %5439 = vmatprep.mubr.f32.mxu0 0.0
      %5440 = vmatmul.mubr.f32.gmra.mrb[0].mxu0 %v5170
      %v5441 = vpop.f32.mrb[0].mxu0
      %v5442 = vadd.f32 %v5073, %v5441
      %v5443 = vpop.f32.mrb[0].mxu0
      %5444 = vmatprep.mubr.f32.mxu0 0.0
      %5445 = vmatmul.mubr.f32.gmra.mrb[0].mxu0 %v5173
      %v5446 = vpop.f32.mrb[0].mxu0
      %v5447 = vadd.f32 %v5073, %v5446
      %v5448 = vpop.f32.mrb[0].mxu0
      %5449 = vmatprep.mubr.f32.mxu0 0.0
      %5450 = vmatmul.mubr.f32.gmra.mrb[0].mxu0 %v5176
      %v5451 = vpop.f32.mrb[0].mxu0
      %v5452 = vadd.f32 %v5073, %v5451
      %v5453 = vpop.f32.mrb[0].mxu0
      %5454 = vmatprep.mubr.f32.mxu0 0.0
      %5455 = vmatmul.mubr.f32.gmra.mrb[0].mxu0 %v5179
      %v5456 = vpop.f32.mrb[0].mxu0
      %v5457 = vadd.f32 %v5073, %v5456
      %v5458 = vpop.f32.mrb[0].mxu0
      %5459 = vmatprep.mubr.f32.mxu0 0.0
      %5460 = vmatmul.mubr.f32.gmra.mrb[0].mxu0 %v5182
      %v5461 = vpop.f32.mrb[0].mxu0
      %v5462 = vadd.f32 %v5073, %v5461
      %v5463 = vpop.f32.mrb[0].mxu0
      %5464 = vmatprep.mubr.f32.mxu0 0.0
      %5465 = vmatmul.mubr.f32.gmra.mrb[0].mxu0 %v5185
      %v5466 = vpop.f32.mrb[0].mxu0
      %v5467 = vadd.f32 %v5073, %v5466
      %v5468 = vpop.f32.mrb[0].mxu0
      %5469 = vmatprep.mubr.f32.mxu0 0.0
      %5470 = vmatmul.mubr.f32.gmra.mrb[0].mxu0 %v5188
      %v5471 = vpop.f32.mrb[0].mxu0
      %v5472 = vadd.f32 %v5073, %v5471
      %v5473 = vpop.f32.mrb[0].mxu0
      %5474 = vmatprep.mubr.f32.mxu0 0.0
      %5475 = vmatmul.mubr.f32.gmra.mrb[0].mxu0 %v5191
      %v5476 = vpop.f32.mrb[0].mxu0
      %v5477 = vadd.f32 %v5073, %v5476
      %v5478 = vpop.f32.mrb[0].mxu0
      %5479 = vmatprep.mubr.f32.mxu0 0.0
      %5480 = vmatmul.mubr.f32.gmra.mrb[0].mxu0 %v5194
      %v5481 = vpop.f32.mrb[0].mxu0
      %v5482 = vadd.f32 %v5073, %v5481
      %v5483 = vpop.f32.mrb[0].mxu0
      %5484 = vmatprep.mubr.f32.mxu0 0.0
      %5485 = vmatmul.mubr.f32.gmra.mrb[0].mxu0 %v5197
      %v5486 = vpop.f32.mrb[0].mxu0
      %v5487 = vadd.f32 %v5073, %v5486
      %v5488 = vpop.f32.mrb[0].mxu0
      %5489 = vmatprep.mubr.f32.mxu0 0.0
      %5490 = vmatmul.mubr.f32.gmra.mrb[0].mxu0 %v5200
      %v5491 = vpop.f32.mrb[0].mxu0
      %v5492 = vadd.f32 %v5073, %v5491
      %v5493 = vpop.f32.mrb[0].mxu0
      %5494 = vmatprep.mubr.f32.mxu0 0.0
      %5495 = vmatmul.mubr.f32.gmra.mrb[0].mxu0 %v5203
      %v5496 = vpop.f32.mrb[0].mxu0
      %v5497 = vadd.f32 %v5073, %v5496
      %v5498 = vpop.f32.mrb[0].mxu0
      %5499 = vmatprep.mubr.f32.mxu0 0.0
      %5500 = vmatmul.mubr.f32.gmra.mrb[0].mxu0 %v5206
      %v5501 = vpop.f32.mrb[0].mxu0
      %v5502 = vadd.f32 %v5073, %v5501
      %v5503 = vpop.f32.mrb[0].mxu0
      %5504 = vmatprep.mubr.f32.mxu0 0.0
      %5505 = vmatmul.mubr.f32.gmra.mrb[0].mxu0 %v5209
      %v5506 = vpop.f32.mrb[0].mxu0
      %v5507 = vadd.f32 %v5073, %v5506
      %v5508 = vpop.f32.mrb[0].mxu0
      %5509 = vmatprep.mubr.f32.mxu0 0.0
      %5510 = vmatmul.mubr.f32.gmra.mrb[0].mxu0 %v5212
      %v5511 = vpop.f32.mrb[0].mxu0
      %v5512 = vadd.f32 %v5073, %v5511
      %v5513 = vpop.f32.mrb[0].mxu0
      %5514 = vmatprep.mubr.f32.mxu0 0.0
      %5515 = vmatmul.mubr.f32.gmra.mrb[0].mxu0 %v5215
      %v5516 = vpop.f32.mrb[0].mxu0
      %v5517 = vadd.f32 %v5073, %v5516
      %v5518 = vpop.f32.mrb[0].mxu0
      %5519 = vmatprep.mubr.f32.mxu0 0.0
      %5520 = vmatmul.mubr.f32.gmra.mrb[0].mxu0 %v5218
      %v5521 = vpop.f32.mrb[0].mxu0
      %v5522 = vadd.f32 %v5073, %v5521
      %v5523 = vpop.f32.mrb[0].mxu0
      %5524 = vdwg.mxu0
      %vm5525 = vcmp.ge.f32.partialorder %v5287, 0.0
      %vm5526 = vcmp.ge.f32.partialorder %v5292, 0.0
      %vm5527 = vcmp.ge.f32.partialorder %v5297, 0.0
      %vm5528 = vcmp.ge.f32.partialorder %v5302, 0.0
      %vm5529 = vcmp.ge.f32.partialorder %v5307, 0.0
      %vm5530 = vcmp.ge.f32.partialorder %v5312, 0.0
      %vm5531 = vcmp.ge.f32.partialorder %v5317, 0.0
      %vm5532 = vcmp.ge.f32.partialorder %v5322, 0.0
      %vm5533 = vcmp.ge.f32.partialorder %v5327, 0.0
      %vm5534 = vcmp.ge.f32.partialorder %v5332, 0.0
      %vm5535 = vcmp.ge.f32.partialorder %v5337, 0.0
      %vm5536 = vcmp.ge.f32.partialorder %v5342, 0.0
      %vm5537 = vcmp.ge.f32.partialorder %v5347, 0.0
      %vm5538 = vcmp.ge.f32.partialorder %v5352, 0.0
      %vm5539 = vcmp.ge.f32.partialorder %v5357, 0.0
      %vm5540 = vcmp.ge.f32.partialorder %v5362, 0.0
      %vm5541 = vcmp.ge.f32.partialorder %v5367, 0.0
      %vm5542 = vcmp.ge.f32.partialorder %v5372, 0.0
      %vm5543 = vcmp.ge.f32.partialorder %v5377, 0.0
      %vm5544 = vcmp.ge.f32.partialorder %v5382, 0.0
      %vm5545 = vcmp.ge.f32.partialorder %v5387, 0.0
      %vm5546 = vcmp.ge.f32.partialorder %v5392, 0.0
      %vm5547 = vcmp.ge.f32.partialorder %v5397, 0.0
      %vm5548 = vcmp.ge.f32.partialorder %v5402, 0.0
      %vm5549 = vcmp.ge.f32.partialorder %v5407, 0.0
      %vm5550 = vcmp.ge.f32.partialorder %v5412, 0.0
      %vm5551 = vcmp.ge.f32.partialorder %v5417, 0.0
      %vm5552 = vcmp.ge.f32.partialorder %v5422, 0.0
      %vm5553 = vcmp.ge.f32.partialorder %v5427, 0.0
      %vm5554 = vcmp.ge.f32.partialorder %v5432, 0.0
      %vm5555 = vcmp.ge.f32.partialorder %v5437, 0.0
      %vm5556 = vcmp.ge.f32.partialorder %v5442, 0.0
      %vm5557 = vcmp.ge.f32.partialorder %v5447, 0.0
      %vm5558 = vcmp.ge.f32.partialorder %v5452, 0.0
      %vm5559 = vcmp.ge.f32.partialorder %v5457, 0.0
      %vm5560 = vcmp.ge.f32.partialorder %v5462, 0.0
      %vm5561 = vcmp.ge.f32.partialorder %v5467, 0.0
      %vm5562 = vcmp.ge.f32.partialorder %v5472, 0.0
      %vm5563 = vcmp.ge.f32.partialorder %v5477, 0.0
      %vm5564 = vcmp.ge.f32.partialorder %v5482, 0.0
      %vm5565 = vcmp.ge.f32.partialorder %v5487, 0.0
      %vm5566 = vcmp.ge.f32.partialorder %v5492, 0.0
      %vm5567 = vcmp.ge.f32.partialorder %v5497, 0.0
      %vm5568 = vcmp.ge.f32.partialorder %v5502, 0.0
      %vm5569 = vcmp.ge.f32.partialorder %v5507, 0.0
      %vm5570 = vcmp.ge.f32.partialorder %v5512, 0.0
      %vm5571 = vcmp.ge.f32.partialorder %v5517, 0.0
      %vm5572 = vcmp.ge.f32.partialorder %v5522, 0.0
      %v5573 = vmul.f32 %v5287, 0.2
      %v5574 = vmul.f32 %v5292, 0.2
      %v5575 = vmul.f32 %v5297, 0.2
      %v5576 = vmul.f32 %v5302, 0.2
      %v5577 = vmul.f32 %v5307, 0.2
      %v5578 = vmul.f32 %v5312, 0.2
      %v5579 = vmul.f32 %v5317, 0.2
      %v5580 = vmul.f32 %v5322, 0.2
      %v5581 = vmul.f32 %v5327, 0.2
      %v5582 = vmul.f32 %v5332, 0.2
      %v5583 = vmul.f32 %v5337, 0.2
      %v5584 = vmul.f32 %v5342, 0.2
      %v5585 = vmul.f32 %v5347, 0.2
      %v5586 = vmul.f32 %v5352, 0.2
      %v5587 = vmul.f32 %v5357, 0.2
      %v5588 = vmul.f32 %v5362, 0.2
      %v5589 = vmul.f32 %v5367, 0.2
      %v5590 = vmul.f32 %v5372, 0.2
      %v5591 = vmul.f32 %v5377, 0.2
      %v5592 = vmul.f32 %v5382, 0.2
      %v5593 = vmul.f32 %v5387, 0.2
      %v5594 = vmul.f32 %v5392, 0.2
      %v5595 = vmul.f32 %v5397, 0.2
      %v5596 = vmul.f32 %v5402, 0.2
      %v5597 = vmul.f32 %v5407, 0.2
      %v5598 = vmul.f32 %v5412, 0.2
      %v5599 = vmul.f32 %v5417, 0.2
      %v5600 = vmul.f32 %v5422, 0.2
      %v5601 = vmul.f32 %v5427, 0.2
      %v5602 = vmul.f32 %v5432, 0.2
      %v5603 = vmul.f32 %v5437, 0.2
      %v5604 = vmul.f32 %v5442, 0.2
      %v5605 = vmul.f32 %v5447, 0.2
      %v5606 = vmul.f32 %v5452, 0.2
      %v5607 = vmul.f32 %v5457, 0.2
      %v5608 = vmul.f32 %v5462, 0.2
      %v5609 = vmul.f32 %v5467, 0.2
      %v5610 = vmul.f32 %v5472, 0.2
      %v5611 = vmul.f32 %v5477, 0.2
      %v5612 = vmul.f32 %v5482, 0.2
      %v5613 = vmul.f32 %v5487, 0.2
      %v5614 = vmul.f32 %v5492, 0.2
      %v5615 = vmul.f32 %v5497, 0.2
      %v5616 = vmul.f32 %v5502, 0.2
      %v5617 = vmul.f32 %v5507, 0.2
      %v5618 = vmul.f32 %v5512, 0.2
      %v5619 = vmul.f32 %v5517, 0.2
      %v5620 = vmul.f32 %v5522, 0.2
      %v5621 = vsel %vm5525, %v5287, %v5573
      %v5622 = vsel %vm5526, %v5292, %v5574
      %v5623 = vsel %vm5527, %v5297, %v5575
      %v5624 = vsel %vm5528, %v5302, %v5576
      %v5625 = vsel %vm5529, %v5307, %v5577
      %v5626 = vsel %vm5530, %v5312, %v5578
      %v5627 = vsel %vm5531, %v5317, %v5579
      %v5628 = vsel %vm5532, %v5322, %v5580
      %v5629 = vsel %vm5533, %v5327, %v5581
      %v5630 = vsel %vm5534, %v5332, %v5582
      %v5631 = vsel %vm5535, %v5337, %v5583
      %v5632 = vsel %vm5536, %v5342, %v5584
      %v5633 = vsel %vm5537, %v5347, %v5585
      %v5634 = vsel %vm5538, %v5352, %v5586
      %v5635 = vsel %vm5539, %v5357, %v5587
      %v5636 = vsel %vm5540, %v5362, %v5588
      %v5637 = vsel %vm5541, %v5367, %v5589
      %v5638 = vsel %vm5542, %v5372, %v5590
      %v5639 = vsel %vm5543, %v5377, %v5591
      %v5640 = vsel %vm5544, %v5382, %v5592
      %v5641 = vsel %vm5545, %v5387, %v5593
      %v5642 = vsel %vm5546, %v5392, %v5594
      %v5643 = vsel %vm5547, %v5397, %v5595
      %v5644 = vsel %vm5548, %v5402, %v5596
      %v5645 = vsel %vm5549, %v5407, %v5597
      %v5646 = vsel %vm5550, %v5412, %v5598
      %v5647 = vsel %vm5551, %v5417, %v5599
      %v5648 = vsel %vm5552, %v5422, %v5600
      %v5649 = vsel %vm5553, %v5427, %v5601
      %v5650 = vsel %vm5554, %v5432, %v5602
      %v5651 = vsel %vm5555, %v5437, %v5603
      %v5652 = vsel %vm5556, %v5442, %v5604
      %v5653 = vsel %vm5557, %v5447, %v5605
      %v5654 = vsel %vm5558, %v5452, %v5606
      %v5655 = vsel %vm5559, %v5457, %v5607
      %v5656 = vsel %vm5560, %v5462, %v5608
      %v5657 = vsel %vm5561, %v5467, %v5609
      %v5658 = vsel %vm5562, %v5472, %v5610
      %v5659 = vsel %vm5563, %v5477, %v5611
      %v5660 = vsel %vm5564, %v5482, %v5612
      %v5661 = vsel %vm5565, %v5487, %v5613
      %v5662 = vsel %vm5566, %v5492, %v5614
      %v5663 = vsel %vm5567, %v5497, %v5615
      %v5664 = vsel %vm5568, %v5502, %v5616
      %v5665 = vsel %vm5569, %v5507, %v5617
      %v5666 = vsel %vm5570, %v5512, %v5618
      %v5667 = vsel %vm5571, %v5517, %v5619
      %v5668 = vsel %vm5572, %v5522, %v5620
      %v5669 = vmul.f32 %v5621, 1.4142135
      %v5670 = vmul.f32 %v5622, 1.4142135
      %v5671 = vmul.f32 %v5623, 1.4142135
      %v5672 = vmul.f32 %v5624, 1.4142135
      %v5673 = vmul.f32 %v5625, 1.4142135
      %v5674 = vmul.f32 %v5626, 1.4142135
      %v5675 = vmul.f32 %v5627, 1.4142135
      %v5676 = vmul.f32 %v5628, 1.4142135
      %v5677 = vmul.f32 %v5629, 1.4142135
      %v5678 = vmul.f32 %v5630, 1.4142135
      %v5679 = vmul.f32 %v5631, 1.4142135
      %v5680 = vmul.f32 %v5632, 1.4142135
      %v5681 = vmul.f32 %v5633, 1.4142135
      %v5682 = vmul.f32 %v5634, 1.4142135
      %v5683 = vmul.f32 %v5635, 1.4142135
      %v5684 = vmul.f32 %v5636, 1.4142135
      %v5685 = vmul.f32 %v5637, 1.4142135
      %v5686 = vmul.f32 %v5638, 1.4142135
      %v5687 = vmul.f32 %v5639, 1.4142135
      %v5688 = vmul.f32 %v5640, 1.4142135
      %v5689 = vmul.f32 %v5641, 1.4142135
      %v5690 = vmul.f32 %v5642, 1.4142135
      %v5691 = vmul.f32 %v5643, 1.4142135
      %v5692 = vmul.f32 %v5644, 1.4142135
      %v5693 = vmul.f32 %v5645, 1.4142135
      %v5694 = vmul.f32 %v5646, 1.4142135
      %v5695 = vmul.f32 %v5647, 1.4142135
      %v5696 = vmul.f32 %v5648, 1.4142135
      %v5697 = vmul.f32 %v5649, 1.4142135
      %v5698 = vmul.f32 %v5650, 1.4142135
      %v5699 = vmul.f32 %v5651, 1.4142135
      %v5700 = vmul.f32 %v5652, 1.4142135
      %v5701 = vmul.f32 %v5653, 1.4142135
      %v5702 = vmul.f32 %v5654, 1.4142135
      %v5703 = vmul.f32 %v5655, 1.4142135
      %v5704 = vmul.f32 %v5656, 1.4142135
      %v5705 = vmul.f32 %v5657, 1.4142135
      %v5706 = vmul.f32 %v5658, 1.4142135
      %v5707 = vmul.f32 %v5659, 1.4142135
      %v5708 = vmul.f32 %v5660, 1.4142135
      %v5709 = vmul.f32 %v5661, 1.4142135
      %v5710 = vmul.f32 %v5662, 1.4142135
      %v5711 = vmul.f32 %v5663, 1.4142135
      %v5712 = vmul.f32 %v5664, 1.4142135
      %v5713 = vmul.f32 %v5665, 1.4142135
      %v5714 = vmul.f32 %v5666, 1.4142135
      %v5715 = vmul.f32 %v5667, 1.4142135
      %v5716 = vmul.f32 %v5668, 1.4142135
      %v5717 = vld [vmem:[%s273 + $0x19] sm:$0xff]
      %v5718 = vld [vmem:[%s273 + $0x21] sm:$0xff]
      %v5719 = vld [vmem:[%s273 + $0x29] sm:$0xff]
      %v5720 = vld [vmem:[%s273 + $0x31] sm:$0xff]
      %v5721 = vld [vmem:[%s273 + $0x39] sm:$0xff]
      %v5722 = vld [vmem:[%s273 + $0x41] sm:$0xff]
      %v5723 = vld [vmem:[%s273 + $0x49] sm:$0xff]
      %v5724 = vld [vmem:[%s273 + $0x51] sm:$0xff]
      %v5725 = vld [vmem:[%s273 + $0x59] sm:$0xff]
      %v5726 = vld [vmem:[%s273 + $0x61] sm:$0xff]
      %v5727 = vld [vmem:[%s273 + $0x69] sm:$0xff]
      %v5728 = vld [vmem:[%s273 + $0x71] sm:$0xff]
      %v5729 = vld [vmem:[%s273 + $0x79] sm:$0xff]
      %v5730 = vld [vmem:[%s273 + $0x81] sm:$0xff]
      %v5731 = vld [vmem:[%s273 + $0x89] sm:$0xff]
      %v5732 = vld [vmem:[%s273 + $0x91] sm:$0xff]
      %v5733 = vld [vmem:[%s273 + $0x99] sm:$0xff]
      %v5734 = vld [vmem:[%s273 + $0xa1] sm:$0xff]
      %v5735 = vld [vmem:[%s273 + $0xa9] sm:$0xff]
      %v5736 = vld [vmem:[%s273 + $0xb1] sm:$0xff]
      %v5737 = vld [vmem:[%s273 + $0xb9] sm:$0xff]
      %v5738 = vld [vmem:[%s273 + $0xc1] sm:$0xff]
      %v5739 = vld [vmem:[%s273 + $0xc9] sm:$0xff]
      %v5740 = vld [vmem:[%s273 + $0xd1] sm:$0xff]
      %v5741 = vld [vmem:[%s273 + $0xd9] sm:$0xff]
      %v5742 = vld [vmem:[%s273 + $0xe1] sm:$0xff]
      %v5743 = vld [vmem:[%s273 + $0xe9] sm:$0xff]
      %v5744 = vld [vmem:[%s273 + $0xf1] sm:$0xff]
      %v5745 = vld [vmem:[%s273 + $0xf9] sm:$0xff]
      %v5746 = vld [vmem:[%s273 + $0x101] sm:$0xff]
      %v5747 = vld [vmem:[%s273 + $0x109] sm:$0xff]
      %v5748 = vld [vmem:[%s273 + $0x111] sm:$0xff]
      %v5749 = vld [vmem:[%s273 + $0x119] sm:$0xff]
      %v5750 = vld [vmem:[%s273 + $0x121] sm:$0xff]
      %v5751 = vld [vmem:[%s273 + $0x129] sm:$0xff]
      %v5752 = vld [vmem:[%s273 + $0x131] sm:$0xff]
      %v5753 = vld [vmem:[%s273 + $0x139] sm:$0xff]
      %v5754 = vld [vmem:[%s273 + $0x141] sm:$0xff]
      %v5755 = vld [vmem:[%s273 + $0x149] sm:$0xff]
      %v5756 = vld [vmem:[%s273 + $0x151] sm:$0xff]
      %v5757 = vld [vmem:[%s273 + $0x159] sm:$0xff]
      %v5758 = vld [vmem:[%s273 + $0x161] sm:$0xff]
      %v5759 = vld [vmem:[%s273 + $0x169] sm:$0xff]
      %v5760 = vld [vmem:[%s273 + $0x171] sm:$0xff]
      %v5761 = vld [vmem:[%s273 + $0x179] sm:$0xff]
      %v5762 = vld [vmem:[%s273 + $0x181] sm:$0xff]
      %v5763 = vld [vmem:[%s273 + $0x189] sm:$0xff]
      %v5764 = vld [vmem:[%s273 + $0x191] sm:$0xff]
      %v5765 = vld [vmem:[%s5] sm:$0xf]
      %v5767 = vsel %vm1813, %v5717, 0
      %v5770 = vsel %vm1813, %v5718, 0
      %v5773 = vsel %vm1813, %v5719, 0
      %v5776 = vsel %vm1813, %v5720, 0
      %v5779 = vsel %vm1813, %v5721, 0
      %v5782 = vsel %vm1813, %v5722, 0
      %v5785 = vsel %vm1813, %v5723, 0
      %v5788 = vsel %vm1813, %v5724, 0
      %v5791 = vsel %vm1813, %v5725, 0
      %v5794 = vsel %vm1813, %v5726, 0
      %v5797 = vsel %vm1813, %v5727, 0
      %v5800 = vsel %vm1813, %v5728, 0
      %v5803 = vsel %vm1813, %v5729, 0
      %v5806 = vsel %vm1813, %v5730, 0
      %v5809 = vsel %vm1813, %v5731, 0
      %v5812 = vsel %vm1813, %v5732, 0
      %v5815 = vsel %vm1813, %v5733, 0
      %v5818 = vsel %vm1813, %v5734, 0
      %v5821 = vsel %vm1813, %v5735, 0
      %v5824 = vsel %vm1813, %v5736, 0
      %v5827 = vsel %vm1813, %v5737, 0
      %v5830 = vsel %vm1813, %v5738, 0
      %v5833 = vsel %vm1813, %v5739, 0
      %v5836 = vsel %vm1813, %v5740, 0
      %v5839 = vsel %vm1813, %v5741, 0
      %v5842 = vsel %vm1813, %v5742, 0
      %v5845 = vsel %vm1813, %v5743, 0
      %v5848 = vsel %vm1813, %v5744, 0
      %v5851 = vsel %vm1813, %v5745, 0
      %v5854 = vsel %vm1813, %v5746, 0
      %v5857 = vsel %vm1813, %v5747, 0
      %v5860 = vsel %vm1813, %v5748, 0
      %v5863 = vsel %vm1813, %v5749, 0
      %v5866 = vsel %vm1813, %v5750, 0
      %v5869 = vsel %vm1813, %v5751, 0
      %v5872 = vsel %vm1813, %v5752, 0
      %v5875 = vsel %vm1813, %v5753, 0
      %v5878 = vsel %vm1813, %v5754, 0
      %v5881 = vsel %vm1813, %v5755, 0
      %v5884 = vsel %vm1813, %v5756, 0
      %v5887 = vsel %vm1813, %v5757, 0
      %v5890 = vsel %vm1813, %v5758, 0
      %v5893 = vsel %vm1813, %v5759, 0
      %v5896 = vsel %vm1813, %v5760, 0
      %v5899 = vsel %vm1813, %v5761, 0
      %v5902 = vsel %vm1813, %v5762, 0
      %v5905 = vsel %vm1813, %v5763, 0
      %v5908 = vsel %vm1813, %v5764, 0
      %v5911 = vsel %vm2361, %v5765, 0
      %5913 = vmatprep.subr.mxu0 0.0
      %5914 = vmatpush1.msra.mxu0 %v5911
      %5915 = vmatprep.subr.mxu0 0.0
      %5916 = vmatpush1.msra.mxu0 0.0
      %5917 = vmatprep.subr.mxu0 0.0
      %5918 = vmatpush1.msra.mxu0 0.0
      %5919 = vmatprep.subr.mxu0 0.0
      %5920 = vmatpush1.msra.mxu0 0.0
      %5921 = vmatprep.subr.mxu0 0.0
      %5922 = vmatpush1.msra.mxu0 0.0
      %5923 = vmatprep.subr.mxu0 0.0
      %5924 = vmatpush1.msra.mxu0 0.0
      %5925 = vmatprep.subr.mxu0 0.0
      %5926 = vmatpush1.msra.mxu0 0.0
      %5927 = vmatprep.subr.mxu0 0.0
      %5928 = vmatpush1.msra.mxu0 0.0
      %5929 = vmatprep.subr.mxu0 0.0
      %5930 = vmatpush1.msra.mxu0 0.0
      %5931 = vmatprep.subr.mxu0 0.0
      %5932 = vmatpush1.msra.mxu0 0.0
      %5933 = vmatprep.subr.mxu0 0.0
      %5934 = vmatpush1.msra.mxu0 0.0
      %5935 = vmatprep.subr.mxu0 0.0
      %5936 = vmatpush1.msra.mxu0 0.0
      %5937 = vmatprep.subr.mxu0 0.0
      %5938 = vmatpush1.msra.mxu0 0.0
      %5939 = vmatprep.subr.mxu0 0.0
      %5940 = vmatpush1.msra.mxu0 0.0
      %5941 = vmatprep.subr.mxu0 0.0
      %5942 = vmatpush1.msra.mxu0 0.0
      %5943 = vmatprep.subr.mxu0 0.0
      %5944 = vmatpush1.msra.mxu0 0.0
      %5945 = vmatprep.subr.mxu0 0.0
      %5946 = vmatpush1.msra.mxu0 0.0
      %5947 = vmatprep.subr.mxu0 0.0
      %5948 = vmatpush1.msra.mxu0 0.0
      %5949 = vmatprep.subr.mxu0 0.0
      %5950 = vmatpush1.msra.mxu0 0.0
      %5951 = vmatprep.subr.mxu0 0.0
      %5952 = vmatpush1.msra.mxu0 0.0
      %5953 = vmatprep.subr.mxu0 0.0
      %5954 = vmatpush1.msra.mxu0 0.0
      %5955 = vmatprep.subr.mxu0 0.0
      %5956 = vmatpush1.msra.mxu0 0.0
      %5957 = vmatprep.subr.mxu0 0.0
      %5958 = vmatpush1.msra.mxu0 0.0
      %5959 = vmatprep.subr.mxu0 0.0
      %5960 = vmatpush1.msra.mxu0 0.0
      %5961 = vmatprep.subr.mxu0 0.0
      %5962 = vmatpush1.msra.mxu0 0.0
      %5963 = vmatprep.subr.mxu0 0.0
      %5964 = vmatpush1.msra.mxu0 0.0
      %5965 = vmatprep.subr.mxu0 0.0
      %5966 = vmatpush1.msra.mxu0 0.0
      %5967 = vmatprep.subr.mxu0 0.0
      %5968 = vmatpush1.msra.mxu0 0.0
      %5969 = vmatprep.subr.mxu0 0.0
      %5970 = vmatpush1.msra.mxu0 0.0
      %5971 = vmatprep.subr.mxu0 0.0
      %5972 = vmatpush1.msra.mxu0 0.0
      %5973 = vmatprep.subr.mxu0 0.0
      %5974 = vmatpush1.msra.mxu0 0.0
      %5975 = vmatprep.subr.mxu0 0.0
      %5976 = vmatpush1.msra.mxu0 0.0
      %5977 = vmatprep.mubr.f32.mxu0 0.0
      %5978 = vmatmul.mubr.f32.gmra.mrb[0].mxu0 %v5767
      %v5979 = vpop.f32.mrb[0].mxu0
      %v5980 = vadd.f32 0.0, %v5979
      %v5981 = vpop.f32.mrb[0].mxu0
      %5982 = vmatprep.mubr.f32.mxu0 0.0
      %5983 = vmatmul.mubr.f32.gmra.mrb[0].mxu0 %v5770
      %v5984 = vpop.f32.mrb[0].mxu0
      %v5985 = vadd.f32 0.0, %v5984
      %v5986 = vpop.f32.mrb[0].mxu0
      %5987 = vmatprep.mubr.f32.mxu0 0.0
      %5988 = vmatmul.mubr.f32.gmra.mrb[0].mxu0 %v5773
      %v5989 = vpop.f32.mrb[0].mxu0
      %v5990 = vadd.f32 0.0, %v5989
      %v5991 = vpop.f32.mrb[0].mxu0
      %5992 = vmatprep.mubr.f32.mxu0 0.0
      %5993 = vmatmul.mubr.f32.gmra.mrb[0].mxu0 %v5776
      %v5994 = vpop.f32.mrb[0].mxu0
      %v5995 = vadd.f32 0.0, %v5994
      %v5996 = vpop.f32.mrb[0].mxu0
      %5997 = vmatprep.mubr.f32.mxu0 0.0
      %5998 = vmatmul.mubr.f32.gmra.mrb[0].mxu0 %v5779
      %v5999 = vpop.f32.mrb[0].mxu0
      %v6000 = vadd.f32 0.0, %v5999
      %v6001 = vpop.f32.mrb[0].mxu0
      %6002 = vmatprep.mubr.f32.mxu0 0.0
      %6003 = vmatmul.mubr.f32.gmra.mrb[0].mxu0 %v5782
      %v6004 = vpop.f32.mrb[0].mxu0
      %v6005 = vadd.f32 0.0, %v6004
      %v6006 = vpop.f32.mrb[0].mxu0
      %6007 = vmatprep.mubr.f32.mxu0 0.0
      %6008 = vmatmul.mubr.f32.gmra.mrb[0].mxu0 %v5785
      %v6009 = vpop.f32.mrb[0].mxu0
      %v6010 = vadd.f32 0.0, %v6009
      %v6011 = vpop.f32.mrb[0].mxu0
      %6012 = vmatprep.mubr.f32.mxu0 0.0
      %6013 = vmatmul.mubr.f32.gmra.mrb[0].mxu0 %v5788
      %v6014 = vpop.f32.mrb[0].mxu0
      %v6015 = vadd.f32 0.0, %v6014
      %v6016 = vpop.f32.mrb[0].mxu0
      %6017 = vmatprep.mubr.f32.mxu0 0.0
      %6018 = vmatmul.mubr.f32.gmra.mrb[0].mxu0 %v5791
      %v6019 = vpop.f32.mrb[0].mxu0
      %v6020 = vadd.f32 0.0, %v6019
      %v6021 = vpop.f32.mrb[0].mxu0
      %6022 = vmatprep.mubr.f32.mxu0 0.0
      %6023 = vmatmul.mubr.f32.gmra.mrb[0].mxu0 %v5794
      %v6024 = vpop.f32.mrb[0].mxu0
      %v6025 = vadd.f32 0.0, %v6024
      %v6026 = vpop.f32.mrb[0].mxu0
      %6027 = vmatprep.mubr.f32.mxu0 0.0
      %6028 = vmatmul.mubr.f32.gmra.mrb[0].mxu0 %v5797
      %v6029 = vpop.f32.mrb[0].mxu0
      %v6030 = vadd.f32 0.0, %v6029
      %v6031 = vpop.f32.mrb[0].mxu0
      %6032 = vmatprep.mubr.f32.mxu0 0.0
      %6033 = vmatmul.mubr.f32.gmra.mrb[0].mxu0 %v5800
      %v6034 = vpop.f32.mrb[0].mxu0
      %v6035 = vadd.f32 0.0, %v6034
      %v6036 = vpop.f32.mrb[0].mxu0
      %6037 = vmatprep.mubr.f32.mxu0 0.0
      %6038 = vmatmul.mubr.f32.gmra.mrb[0].mxu0 %v5803
      %v6039 = vpop.f32.mrb[0].mxu0
      %v6040 = vadd.f32 0.0, %v6039
      %v6041 = vpop.f32.mrb[0].mxu0
      %6042 = vmatprep.mubr.f32.mxu0 0.0
      %6043 = vmatmul.mubr.f32.gmra.mrb[0].mxu0 %v5806
      %v6044 = vpop.f32.mrb[0].mxu0
      %v6045 = vadd.f32 0.0, %v6044
      %v6046 = vpop.f32.mrb[0].mxu0
      %6047 = vmatprep.mubr.f32.mxu0 0.0
      %6048 = vmatmul.mubr.f32.gmra.mrb[0].mxu0 %v5809
      %v6049 = vpop.f32.mrb[0].mxu0
      %v6050 = vadd.f32 0.0, %v6049
      %v6051 = vpop.f32.mrb[0].mxu0
      %6052 = vmatprep.mubr.f32.mxu0 0.0
      %6053 = vmatmul.mubr.f32.gmra.mrb[0].mxu0 %v5812
      %v6054 = vpop.f32.mrb[0].mxu0
      %v6055 = vadd.f32 0.0, %v6054
      %v6056 = vpop.f32.mrb[0].mxu0
      %6057 = vmatprep.mubr.f32.mxu0 0.0
      %6058 = vmatmul.mubr.f32.gmra.mrb[0].mxu0 %v5815
      %v6059 = vpop.f32.mrb[0].mxu0
      %v6060 = vadd.f32 0.0, %v6059
      %v6061 = vpop.f32.mrb[0].mxu0
      %6062 = vmatprep.mubr.f32.mxu0 0.0
      %6063 = vmatmul.mubr.f32.gmra.mrb[0].mxu0 %v5818
      %v6064 = vpop.f32.mrb[0].mxu0
      %v6065 = vadd.f32 0.0, %v6064
      %v6066 = vpop.f32.mrb[0].mxu0
      %6067 = vmatprep.mubr.f32.mxu0 0.0
      %6068 = vmatmul.mubr.f32.gmra.mrb[0].mxu0 %v5821
      %v6069 = vpop.f32.mrb[0].mxu0
      %v6070 = vadd.f32 0.0, %v6069
      %v6071 = vpop.f32.mrb[0].mxu0
      %6072 = vmatprep.mubr.f32.mxu0 0.0
      %6073 = vmatmul.mubr.f32.gmra.mrb[0].mxu0 %v5824
      %v6074 = vpop.f32.mrb[0].mxu0
      %v6075 = vadd.f32 0.0, %v6074
      %v6076 = vpop.f32.mrb[0].mxu0
      %6077 = vmatprep.mubr.f32.mxu0 0.0
      %6078 = vmatmul.mubr.f32.gmra.mrb[0].mxu0 %v5827
      %v6079 = vpop.f32.mrb[0].mxu0
      %v6080 = vadd.f32 0.0, %v6079
      %v6081 = vpop.f32.mrb[0].mxu0
      %6082 = vmatprep.mubr.f32.mxu0 0.0
      %6083 = vmatmul.mubr.f32.gmra.mrb[0].mxu0 %v5830
      %v6084 = vpop.f32.mrb[0].mxu0
      %v6085 = vadd.f32 0.0, %v6084
      %v6086 = vpop.f32.mrb[0].mxu0
      %6087 = vmatprep.mubr.f32.mxu0 0.0
      %6088 = vmatmul.mubr.f32.gmra.mrb[0].mxu0 %v5833
      %v6089 = vpop.f32.mrb[0].mxu0
      %v6090 = vadd.f32 0.0, %v6089
      %v6091 = vpop.f32.mrb[0].mxu0
      %6092 = vmatprep.mubr.f32.mxu0 0.0
      %6093 = vmatmul.mubr.f32.gmra.mrb[0].mxu0 %v5836
      %v6094 = vpop.f32.mrb[0].mxu0
      %v6095 = vadd.f32 0.0, %v6094
      %v6096 = vpop.f32.mrb[0].mxu0
      %6097 = vmatprep.mubr.f32.mxu0 0.0
      %6098 = vmatmul.mubr.f32.gmra.mrb[0].mxu0 %v5839
      %v6099 = vpop.f32.mrb[0].mxu0
      %v6100 = vadd.f32 0.0, %v6099
      %v6101 = vpop.f32.mrb[0].mxu0
      %6102 = vmatprep.mubr.f32.mxu0 0.0
      %6103 = vmatmul.mubr.f32.gmra.mrb[0].mxu0 %v5842
      %v6104 = vpop.f32.mrb[0].mxu0
      %v6105 = vadd.f32 0.0, %v6104
      %v6106 = vpop.f32.mrb[0].mxu0
      %6107 = vmatprep.mubr.f32.mxu0 0.0
      %6108 = vmatmul.mubr.f32.gmra.mrb[0].mxu0 %v5845
      %v6109 = vpop.f32.mrb[0].mxu0
      %v6110 = vadd.f32 0.0, %v6109
      %v6111 = vpop.f32.mrb[0].mxu0
      %6112 = vmatprep.mubr.f32.mxu0 0.0
      %6113 = vmatmul.mubr.f32.gmra.mrb[0].mxu0 %v5848
      %v6114 = vpop.f32.mrb[0].mxu0
      %v6115 = vadd.f32 0.0, %v6114
      %v6116 = vpop.f32.mrb[0].mxu0
      %6117 = vmatprep.mubr.f32.mxu0 0.0
      %6118 = vmatmul.mubr.f32.gmra.mrb[0].mxu0 %v5851
      %v6119 = vpop.f32.mrb[0].mxu0
      %v6120 = vadd.f32 0.0, %v6119
      %v6121 = vpop.f32.mrb[0].mxu0
      %6122 = vmatprep.mubr.f32.mxu0 0.0
      %6123 = vmatmul.mubr.f32.gmra.mrb[0].mxu0 %v5854
      %v6124 = vpop.f32.mrb[0].mxu0
      %v6125 = vadd.f32 0.0, %v6124
      %v6126 = vpop.f32.mrb[0].mxu0
      %6127 = vmatprep.mubr.f32.mxu0 0.0
      %6128 = vmatmul.mubr.f32.gmra.mrb[0].mxu0 %v5857
      %v6129 = vpop.f32.mrb[0].mxu0
      %v6130 = vadd.f32 0.0, %v6129
      %v6131 = vpop.f32.mrb[0].mxu0
      %6132 = vmatprep.mubr.f32.mxu0 0.0
      %6133 = vmatmul.mubr.f32.gmra.mrb[0].mxu0 %v5860
      %v6134 = vpop.f32.mrb[0].mxu0
      %v6135 = vadd.f32 0.0, %v6134
      %v6136 = vpop.f32.mrb[0].mxu0
      %6137 = vmatprep.mubr.f32.mxu0 0.0
      %6138 = vmatmul.mubr.f32.gmra.mrb[0].mxu0 %v5863
      %v6139 = vpop.f32.mrb[0].mxu0
      %v6140 = vadd.f32 0.0, %v6139
      %v6141 = vpop.f32.mrb[0].mxu0
      %6142 = vmatprep.mubr.f32.mxu0 0.0
      %6143 = vmatmul.mubr.f32.gmra.mrb[0].mxu0 %v5866
      %v6144 = vpop.f32.mrb[0].mxu0
      %v6145 = vadd.f32 0.0, %v6144
      %v6146 = vpop.f32.mrb[0].mxu0
      %6147 = vmatprep.mubr.f32.mxu0 0.0
      %6148 = vmatmul.mubr.f32.gmra.mrb[0].mxu0 %v5869
      %v6149 = vpop.f32.mrb[0].mxu0
      %v6150 = vadd.f32 0.0, %v6149
      %v6151 = vpop.f32.mrb[0].mxu0
      %6152 = vmatprep.mubr.f32.mxu0 0.0
      %6153 = vmatmul.mubr.f32.gmra.mrb[0].mxu0 %v5872
      %v6154 = vpop.f32.mrb[0].mxu0
      %v6155 = vadd.f32 0.0, %v6154
      %v6156 = vpop.f32.mrb[0].mxu0
      %6157 = vmatprep.mubr.f32.mxu0 0.0
      %6158 = vmatmul.mubr.f32.gmra.mrb[0].mxu0 %v5875
      %v6159 = vpop.f32.mrb[0].mxu0
      %v6160 = vadd.f32 0.0, %v6159
      %v6161 = vpop.f32.mrb[0].mxu0
      %6162 = vmatprep.mubr.f32.mxu0 0.0
      %6163 = vmatmul.mubr.f32.gmra.mrb[0].mxu0 %v5878
      %v6164 = vpop.f32.mrb[0].mxu0
      %v6165 = vadd.f32 0.0, %v6164
      %v6166 = vpop.f32.mrb[0].mxu0
      %6167 = vmatprep.mubr.f32.mxu0 0.0
      %6168 = vmatmul.mubr.f32.gmra.mrb[0].mxu0 %v5881
      %v6169 = vpop.f32.mrb[0].mxu0
      %v6170 = vadd.f32 0.0, %v6169
      %v6171 = vpop.f32.mrb[0].mxu0
      %6172 = vmatprep.mubr.f32.mxu0 0.0
      %6173 = vmatmul.mubr.f32.gmra.mrb[0].mxu0 %v5884
      %v6174 = vpop.f32.mrb[0].mxu0
      %v6175 = vadd.f32 0.0, %v6174
      %v6176 = vpop.f32.mrb[0].mxu0
      %6177 = vmatprep.mubr.f32.mxu0 0.0
      %6178 = vmatmul.mubr.f32.gmra.mrb[0].mxu0 %v5887
      %v6179 = vpop.f32.mrb[0].mxu0
      %v6180 = vadd.f32 0.0, %v6179
      %v6181 = vpop.f32.mrb[0].mxu0
      %6182 = vmatprep.mubr.f32.mxu0 0.0
      %6183 = vmatmul.mubr.f32.gmra.mrb[0].mxu0 %v5890
      %v6184 = vpop.f32.mrb[0].mxu0
      %v6185 = vadd.f32 0.0, %v6184
      %v6186 = vpop.f32.mrb[0].mxu0
      %6187 = vmatprep.mubr.f32.mxu0 0.0
      %6188 = vmatmul.mubr.f32.gmra.mrb[0].mxu0 %v5893
      %v6189 = vpop.f32.mrb[0].mxu0
      %v6190 = vadd.f32 0.0, %v6189
      %v6191 = vpop.f32.mrb[0].mxu0
      %6192 = vmatprep.mubr.f32.mxu0 0.0
      %6193 = vmatmul.mubr.f32.gmra.mrb[0].mxu0 %v5896
      %v6194 = vpop.f32.mrb[0].mxu0
      %v6195 = vadd.f32 0.0, %v6194
      %v6196 = vpop.f32.mrb[0].mxu0
      %6197 = vmatprep.mubr.f32.mxu0 0.0
      %6198 = vmatmul.mubr.f32.gmra.mrb[0].mxu0 %v5899
      %v6199 = vpop.f32.mrb[0].mxu0
      %v6200 = vadd.f32 0.0, %v6199
      %v6201 = vpop.f32.mrb[0].mxu0
      %6202 = vmatprep.mubr.f32.mxu0 0.0
      %6203 = vmatmul.mubr.f32.gmra.mrb[0].mxu0 %v5902
      %v6204 = vpop.f32.mrb[0].mxu0
      %v6205 = vadd.f32 0.0, %v6204
      %v6206 = vpop.f32.mrb[0].mxu0
      %6207 = vmatprep.mubr.f32.mxu0 0.0
      %6208 = vmatmul.mubr.f32.gmra.mrb[0].mxu0 %v5905
      %v6209 = vpop.f32.mrb[0].mxu0
      %v6210 = vadd.f32 0.0, %v6209
      %v6211 = vpop.f32.mrb[0].mxu0
      %6212 = vmatprep.mubr.f32.mxu0 0.0
      %6213 = vmatmul.mubr.f32.gmra.mrb[0].mxu0 %v5908
      %v6214 = vpop.f32.mrb[0].mxu0
      %v6215 = vadd.f32 0.0, %v6214
      %v6216 = vpop.f32.mrb[0].mxu0
      %6217 = vdwg.mxu0
      %v6218 = vadd.f32 %v5669, %v5980
      %v6219 = vadd.f32 %v5670, %v5985
      %v6220 = vadd.f32 %v5671, %v5990
      %v6221 = vadd.f32 %v5672, %v5995
      %v6222 = vadd.f32 %v5673, %v6000
      %v6223 = vadd.f32 %v5674, %v6005
      %v6224 = vadd.f32 %v5675, %v6010
      %v6225 = vadd.f32 %v5676, %v6015
      %v6226 = vadd.f32 %v5677, %v6020
      %v6227 = vadd.f32 %v5678, %v6025
      %v6228 = vadd.f32 %v5679, %v6030
      %v6229 = vadd.f32 %v5680, %v6035
      %v6230 = vadd.f32 %v5681, %v6040
      %v6231 = vadd.f32 %v5682, %v6045
      %v6232 = vadd.f32 %v5683, %v6050
      %v6233 = vadd.f32 %v5684, %v6055
      %v6234 = vadd.f32 %v5685, %v6060
      %v6235 = vadd.f32 %v5686, %v6065
      %v6236 = vadd.f32 %v5687, %v6070
      %v6237 = vadd.f32 %v5688, %v6075
      %v6238 = vadd.f32 %v5689, %v6080
      %v6239 = vadd.f32 %v5690, %v6085
      %v6240 = vadd.f32 %v5691, %v6090
      %v6241 = vadd.f32 %v5692, %v6095
      %v6242 = vadd.f32 %v5693, %v6100
      %v6243 = vadd.f32 %v5694, %v6105
      %v6244 = vadd.f32 %v5695, %v6110
      %v6245 = vadd.f32 %v5696, %v6115
      %v6246 = vadd.f32 %v5697, %v6120
      %v6247 = vadd.f32 %v5698, %v6125
      %v6248 = vadd.f32 %v5699, %v6130
      %v6249 = vadd.f32 %v5700, %v6135
      %v6250 = vadd.f32 %v5701, %v6140
      %v6251 = vadd.f32 %v5702, %v6145
      %v6252 = vadd.f32 %v5703, %v6150
      %v6253 = vadd.f32 %v5704, %v6155
      %v6254 = vadd.f32 %v5705, %v6160
      %v6255 = vadd.f32 %v5706, %v6165
      %v6256 = vadd.f32 %v5707, %v6170
      %v6257 = vadd.f32 %v5708, %v6175
      %v6258 = vadd.f32 %v5709, %v6180
      %v6259 = vadd.f32 %v5710, %v6185
      %v6260 = vadd.f32 %v5711, %v6190
      %v6261 = vadd.f32 %v5712, %v6195
      %v6262 = vadd.f32 %v5713, %v6200
      %v6263 = vadd.f32 %v5714, %v6205
      %v6264 = vadd.f32 %v5715, %v6210
      %v6265 = vadd.f32 %v5716, %v6215
      %v6266 = vmul.f32 %v6218, 0.70710677
      %v6267 = vmul.f32 %v6219, 0.70710677
      %v6268 = vmul.f32 %v6220, 0.70710677
      %v6269 = vmul.f32 %v6221, 0.70710677
      %v6270 = vmul.f32 %v6222, 0.70710677
      %v6271 = vmul.f32 %v6223, 0.70710677
      %v6272 = vmul.f32 %v6224, 0.70710677
      %v6273 = vmul.f32 %v6225, 0.70710677
      %v6274 = vmul.f32 %v6226, 0.70710677
      %v6275 = vmul.f32 %v6227, 0.70710677
      %v6276 = vmul.f32 %v6228, 0.70710677
      %v6277 = vmul.f32 %v6229, 0.70710677
      %v6278 = vmul.f32 %v6230, 0.70710677
      %v6279 = vmul.f32 %v6231, 0.70710677
      %v6280 = vmul.f32 %v6232, 0.70710677
      %v6281 = vmul.f32 %v6233, 0.70710677
      %v6282 = vmul.f32 %v6234, 0.70710677
      %v6283 = vmul.f32 %v6235, 0.70710677
      %v6284 = vmul.f32 %v6236, 0.70710677
      %v6285 = vmul.f32 %v6237, 0.70710677
      %v6286 = vmul.f32 %v6238, 0.70710677
      %v6287 = vmul.f32 %v6239, 0.70710677
      %v6288 = vmul.f32 %v6240, 0.70710677
      %v6289 = vmul.f32 %v6241, 0.70710677
      %v6290 = vmul.f32 %v6242, 0.70710677
      %v6291 = vmul.f32 %v6243, 0.70710677
      %v6292 = vmul.f32 %v6244, 0.70710677
      %v6293 = vmul.f32 %v6245, 0.70710677
      %v6294 = vmul.f32 %v6246, 0.70710677
      %v6295 = vmul.f32 %v6247, 0.70710677
      %v6296 = vmul.f32 %v6248, 0.70710677
      %v6297 = vmul.f32 %v6249, 0.70710677
      %v6298 = vmul.f32 %v6250, 0.70710677
      %v6299 = vmul.f32 %v6251, 0.70710677
      %v6300 = vmul.f32 %v6252, 0.70710677
      %v6301 = vmul.f32 %v6253, 0.70710677
      %v6302 = vmul.f32 %v6254, 0.70710677
      %v6303 = vmul.f32 %v6255, 0.70710677
      %v6304 = vmul.f32 %v6256, 0.70710677
      %v6305 = vmul.f32 %v6257, 0.70710677
      %v6306 = vmul.f32 %v6258, 0.70710677
      %v6307 = vmul.f32 %v6259, 0.70710677
      %v6308 = vmul.f32 %v6260, 0.70710677
      %v6309 = vmul.f32 %v6261, 0.70710677
      %v6310 = vmul.f32 %v6262, 0.70710677
      %v6311 = vmul.f32 %v6263, 0.70710677
      %v6312 = vmul.f32 %v6264, 0.70710677
      %v6313 = vmul.f32 %v6265, 0.70710677
      %6314 = vst.msk [vmem:[%s278] sm:$0xff] %vm279, %v6266
      %6315 = vst.msk [vmem:[%s278 + $0x8] sm:$0xff] %vm279, %v6267
      %6316 = vst.msk [vmem:[%s278 + $0x10] sm:$0xff] %vm279, %v6268
      %6317 = vst.msk [vmem:[%s278 + $0x18] sm:$0xff] %vm279, %v6269
      %6318 = vst.msk [vmem:[%s278 + $0x20] sm:$0xff] %vm279, %v6270
      %6319 = vst.msk [vmem:[%s278 + $0x28] sm:$0xff] %vm279, %v6271
      %6320 = vst.msk [vmem:[%s278 + $0x30] sm:$0xff] %vm279, %v6272
      %6321 = vst.msk [vmem:[%s278 + $0x38] sm:$0xff] %vm279, %v6273
      %6322 = vst.msk [vmem:[%s278 + $0x40] sm:$0xff] %vm279, %v6274
      %6323 = vst.msk [vmem:[%s278 + $0x48] sm:$0xff] %vm279, %v6275
      %6324 = vst.msk [vmem:[%s278 + $0x50] sm:$0xff] %vm279, %v6276
      %6325 = vst.msk [vmem:[%s278 + $0x58] sm:$0xff] %vm279, %v6277
      %6326 = vst.msk [vmem:[%s278 + $0x60] sm:$0xff] %vm279, %v6278
      %6327 = vst.msk [vmem:[%s278 + $0x68] sm:$0xff] %vm279, %v6279
      %6328 = vst.msk [vmem:[%s278 + $0x70] sm:$0xff] %vm279, %v6280
      %6329 = vst.msk [vmem:[%s278 + $0x78] sm:$0xff] %vm279, %v6281
      %6330 = vst.msk [vmem:[%s278 + $0x80] sm:$0xff] %vm279, %v6282
      %6331 = vst.msk [vmem:[%s278 + $0x88] sm:$0xff] %vm279, %v6283
      %6332 = vst.msk [vmem:[%s278 + $0x90] sm:$0xff] %vm279, %v6284
      %6333 = vst.msk [vmem:[%s278 + $0x98] sm:$0xff] %vm279, %v6285
      %6334 = vst.msk [vmem:[%s278 + $0xa0] sm:$0xff] %vm279, %v6286
      %6335 = vst.msk [vmem:[%s278 + $0xa8] sm:$0xff] %vm279, %v6287
      %6336 = vst.msk [vmem:[%s278 + $0xb0] sm:$0xff] %vm279, %v6288
      %6337 = vst.msk [vmem:[%s278 + $0xb8] sm:$0xff] %vm279, %v6289
      %6338 = vst.msk [vmem:[%s278 + $0xc0] sm:$0xff] %vm279, %v6290
      %6339 = vst.msk [vmem:[%s278 + $0xc8] sm:$0xff] %vm279, %v6291
      %6340 = vst.msk [vmem:[%s278 + $0xd0] sm:$0xff] %vm279, %v6292
      %6341 = vst.msk [vmem:[%s278 + $0xd8] sm:$0xff] %vm279, %v6293
      %6342 = vst.msk [vmem:[%s278 + $0xe0] sm:$0xff] %vm279, %v6294
      %6343 = vst.msk [vmem:[%s278 + $0xe8] sm:$0xff] %vm279, %v6295
      %6344 = vst.msk [vmem:[%s278 + $0xf0] sm:$0xff] %vm279, %v6296
      %6345 = vst.msk [vmem:[%s278 + $0xf8] sm:$0xff] %vm279, %v6297
      %6346 = vst.msk [vmem:[%s278 + $0x100] sm:$0xff] %vm279, %v6298
      %6347 = vst.msk [vmem:[%s278 + $0x108] sm:$0xff] %vm279, %v6299
      %6348 = vst.msk [vmem:[%s278 + $0x110] sm:$0xff] %vm279, %v6300
      %6349 = vst.msk [vmem:[%s278 + $0x118] sm:$0xff] %vm279, %v6301
      %6350 = vst.msk [vmem:[%s278 + $0x120] sm:$0xff] %vm279, %v6302
      %6351 = vst.msk [vmem:[%s278 + $0x128] sm:$0xff] %vm279, %v6303
      %6352 = vst.msk [vmem:[%s278 + $0x130] sm:$0xff] %vm279, %v6304
      %6353 = vst.msk [vmem:[%s278 + $0x138] sm:$0xff] %vm279, %v6305
      %6354 = vst.msk [vmem:[%s278 + $0x140] sm:$0xff] %vm279, %v6306
      %6355 = vst.msk [vmem:[%s278 + $0x148] sm:$0xff] %vm279, %v6307
      %6356 = vst.msk [vmem:[%s278 + $0x150] sm:$0xff] %vm279, %v6308
      %6357 = vst.msk [vmem:[%s278 + $0x158] sm:$0xff] %vm279, %v6309
      %6358 = vst.msk [vmem:[%s278 + $0x160] sm:$0xff] %vm279, %v6310
      %6359 = vst.msk [vmem:[%s278 + $0x168] sm:$0xff] %vm279, %v6311
      %6360 = vst.msk [vmem:[%s278 + $0x170] sm:$0xff] %vm279, %v6312
      %6361 = vst.msk [vmem:[%s278 + $0x178] sm:$0xff] %vm279, %v6313
      %p6362 = scmp.lt.s32.totalorder %s18, 1
      %s6363 = scalar_select %p6362, %s18, 1
      %s6364 = smul.addr %s6363, 48
      %s6365 = smul.addr %s6364, 8
      %s6366 = scalar_lea.vmem %s7, %s6365
      // Predicated region
      $region49: #{tpu_custom_call.1} parent=47 // pred_check
        %p6367 = pneg %p188
      $region50: #{tpu_custom_call.1} parent=47 // pred_check_branch
        %6369 = sbr.rel (%p6367) target = $region52
      $region51: #{tpu_custom_call.1} parent=47 // pred_region
        _
      $region52: #{tpu_custom_call.1} parent=47 // pred_fallthru
        _
    $region48: #{tpu_custom_call.1} parent=5 // pred_fallthru
      _
    %p6370 = scmp.le.s32.totalorder 2, %s13
    // Predicated region
    $region53: #{tpu_custom_call.1} parent=5 // pred_check
      %p6371 = pneg %p6370
    $region54: #{tpu_custom_call.1} parent=5 // pred_check_branch
      %6373 = sbr.rel (%p6371) target = $region56
    $region55: #{tpu_custom_call.1} parent=5 // pred_region
      %s6374 = ssub.s32 %s13, 2
      // Predicated region
      $region57: #{tpu_custom_call.1} parent=55 // pred_check
        %p6375 = pneg %p194
      $region58: #{tpu_custom_call.1} parent=55 // pred_check_branch
        %6377 = sbr.rel (%p6375) target = $region60
      $region59: #{tpu_custom_call.1} parent=55 // pred_region
        %p6378 = scmp.lt.s32.totalorder %s19, 1
        %s6379 = scalar_select %p6378, %s19, 1
        %s6380 = smul.addr %s6379, 48
        %s6381 = smul.addr %s6380, 8
        %s6382 = scalar_lea.vmem %s7, %s6381
      $region60: #{tpu_custom_call.1} parent=55 // pred_fallthru
        _
    $region56: #{tpu_custom_call.1} parent=5 // pred_fallthru
      _
  $region6: #{tpu_custom_call.1} parent=0 // loop_footer
    %s17 = sadd.s32 1, %s13
  $region7: #{tpu_custom_call.1} parent=0 // loop_footer_branch
    %12 = sbr.rel target = $region3
  $region8: #{tpu_custom_call.1} parent=0 // loop_exit
    _

</llo_original>
